<compile_context>
chip_gen: v7x
topology: tpu7x:2x2x1
jax: 0.10.0
libtpu: 0.0.40
codegen_flags: <defaults>
</compile_context>

<pallas_src>
import functools
import math

import jax
import jax.numpy as jnp
from jax.experimental import pallas as pl
from jax.experimental.pallas import tpu as pltpu


# ---------------------------------------------------------------------------
# Small helpers
# ---------------------------------------------------------------------------
_TM_MAX = 256                      # row tile (multiple of 8), sized for v7x VMEM budget
_VMEM_LIMIT = 32 * 1024 * 1024     # explicit scoped-VMEM limit (safe on v5e/v6e/v7x)


def _round_up(x, m):
    return -(-x // m) * m


def _pad2(a, rows, cols):
    r, c = a.shape
    if r == rows and c == cols:
        return a
    return jnp.pad(a, ((0, rows - r), (0, cols - c)))


def _cparams(n_axes=1):
    return pltpu.CompilerParams(
        dimension_semantics=("parallel",) * n_axes,
        vmem_limit_bytes=_VMEM_LIMIT)


# ---------------------------------------------------------------------------
# Pallas kernels
# ---------------------------------------------------------------------------
def _mm_bias_act_kernel(x_ref, w_ref, b_ref, o_ref, *, act):
    acc = jnp.dot(x_ref[...], w_ref[...], preferred_element_type=jnp.float32)
    acc = acc + b_ref[...]
    if act == "relu":
        acc = jnp.maximum(acc, 0.0)
    o_ref[...] = acc.astype(o_ref.dtype)


def _enc_glu_kernel(x_ref, w1_ref, b1_ref, wa_ref, ba_ref, wb_ref, bb_ref, o_ref):
    # Fused: Conv1d(K,S) (as patches matmul) + ReLU + Conv1d(1x1) + GLU.
    t = jnp.dot(x_ref[...], w1_ref[...], preferred_element_type=jnp.float32) + b1_ref[...]
    t = jnp.maximum(t, 0.0).astype(jnp.bfloat16)
    a = jnp.dot(t, wa_ref[...], preferred_element_type=jnp.float32) + ba_ref[...]
    g = jnp.dot(t, wb_ref[...], preferred_element_type=jnp.float32) + bb_ref[...]
    o_ref[...] = (a * jax.nn.sigmoid(g)).astype(o_ref.dtype)


def _enc_relu_kernel(x_ref, w1_ref, b1_ref, w2_ref, b2_ref, o_ref):
    # Fused: Conv1d(K,S) + ReLU + Conv1d(1x1) + ReLU.
    t = jnp.dot(x_ref[...], w1_ref[...], preferred_element_type=jnp.float32) + b1_ref[...]
    t = jnp.maximum(t, 0.0).astype(jnp.bfloat16)
    o = jnp.dot(t, w2_ref[...], preferred_element_type=jnp.float32) + b2_ref[...]
    o_ref[...] = jnp.maximum(o, 0.0).astype(o_ref.dtype)


def _dec_glu_kernel(x_ref, wa_ref, ba_ref, wb_ref, bb_ref, wt_ref, o_ref):
    # Fused: Conv1d(1x1) + GLU + ConvTranspose1d matmul (overlap-add done outside).
    a = jnp.dot(x_ref[...], wa_ref[...], preferred_element_type=jnp.float32) + ba_ref[...]
    g = jnp.dot(x_ref[...], wb_ref[...], preferred_element_type=jnp.float32) + bb_ref[...]
    t = (a * jax.nn.sigmoid(g)).astype(jnp.bfloat16)
    o_ref[...] = jnp.dot(t, wt_ref[...], preferred_element_type=jnp.float32)


def _dec_relu_kernel(x_ref, w1_ref, b1_ref, wt_ref, o_ref):
    t = jnp.dot(x_ref[...], w1_ref[...], preferred_element_type=jnp.float32) + b1_ref[...]
    t = jnp.maximum(t, 0.0).astype(jnp.bfloat16)
    o_ref[...] = jnp.dot(t, wt_ref[...], preferred_element_type=jnp.float32)


def _fir_kernel(x0_ref, x1_ref, wlo_ref, whi_ref, o_ref):
    # Banded FIR as matmul over two consecutive 128-wide time blocks.
    acc = jnp.dot(x0_ref[...], wlo_ref[...], preferred_element_type=jnp.float32)
    acc = acc + jnp.dot(x1_ref[...], whi_ref[...], preferred_element_type=jnp.float32)
    o_ref[...] = acc


def _lstm_seq_kernel(xg_ref, whh_ref, hseq_ref, h_scr, c_scr):
    t = pl.program_id(0)

    @pl.when(t == 0)
    def _():
        h_scr[...] = jnp.zeros_like(h_scr)
        c_scr[...] = jnp.zeros_like(c_scr)

    H = h_scr.shape[-1]
    gates = xg_ref[0] + jnp.dot(h_scr[...].astype(jnp.bfloat16), whh_ref[...],
                                preferred_element_type=jnp.float32)
    i = jax.nn.sigmoid(gates[:, 0 * H:1 * H])
    f = jax.nn.sigmoid(gates[:, 1 * H:2 * H])
    g = jnp.tanh(gates[:, 2 * H:3 * H])
    o = jax.nn.sigmoid(gates[:, 3 * H:4 * H])
    c_new = f * c_scr[...] + i * g
    c_scr[...] = c_new
    h_new = o * jnp.tanh(c_new)
    h_scr[...] = h_new
    hseq_ref[0] = h_new


# ---------------------------------------------------------------------------
# Generic tiled matmul wrapper (used for the LSTM input projection)
# ---------------------------------------------------------------------------
def matmul_bias_act(x, w, b, act="none"):
    """(M,K) @ (K,N) + b fused with none / relu. Returns f32 (M,N)."""
    M, K = x.shape
    K2, N = w.shape
    assert K == K2
    tm = min(_TM_MAX, _round_up(M, 8))
    Mp = _round_up(M, tm)
    xb = _pad2(x.astype(jnp.bfloat16), Mp, K)
    Np = _round_up(N, 128)
    tn = 256 if Np % 256 == 0 else 128
    wp = _pad2(w.astype(jnp.bfloat16), K, Np)
    bp = _pad2(b.reshape(1, N).astype(jnp.float32), 1, Np)
    out = pl.pallas_call(
        functools.partial(_mm_bias_act_kernel, act=act),
        out_shape=jax.ShapeDtypeStruct((Mp, Np), jnp.float32),
        grid=(Mp // tm, Np // tn),
        in_specs=[
            pl.BlockSpec((tm, K), lambda i, j: (i, 0)),
            pl.BlockSpec((K, tn), lambda i, j: (0, j)),
            pl.BlockSpec((1, tn), lambda i, j: (0, j)),
        ],
        out_specs=pl.BlockSpec((tm, tn), lambda i, j: (i, j)),
        compiler_params=_cparams(2),
        cost_estimate=pl.CostEstimate(
            flops=2 * Mp * K * Np, transcendentals=0,
            bytes_accessed=2 * Mp * K + 2 * K * Np + 4 * Mp * Np),
    )(xb, wp, bp)
    return out[:M, :N]


# ---------------------------------------------------------------------------
# Fused encoder / decoder blocks
# ---------------------------------------------------------------------------
def encoder_block(x, w1, b1, w2, b2, stride, glu):
    """Fused Conv1d(K,S)+ReLU+Conv1d(1x1)+GLU(or ReLU). x: (B,T,Cin) -> (B,Lout,H)."""
    B, T, Cin = x.shape
    H, _, K = w1.shape
    Lout = (T - K) // stride + 1
    # Cheap im2col: K strided slices (no index-gather), channels-last so no transposes.
    cols = [x[:, j:j + stride * (Lout - 1) + 1:stride, :] for j in range(K)]
    patches = jnp.concatenate(cols, axis=-1).reshape(B * Lout, K * Cin)
    M, Kin = patches.shape
    tm = min(_TM_MAX, _round_up(M, 8))
    Mp = _round_up(M, tm)
    xb = _pad2(patches.astype(jnp.bfloat16), Mp, Kin)
    Hp = _round_up(H, 128)
    w1m = _pad2(jnp.transpose(w1, (2, 1, 0)).reshape(Kin, H).astype(jnp.bfloat16), Kin, Hp)
    b1m = _pad2(b1.reshape(1, H).astype(jnp.float32), 1, Hp)

    if glu:
        wa = _pad2(w2[:H, :, 0].T.astype(jnp.bfloat16), Hp, Hp)
        ba = _pad2(b2[:H].reshape(1, H).astype(jnp.float32), 1, Hp)
        wb = _pad2(w2[H:, :, 0].T.astype(jnp.bfloat16), Hp, Hp)
        bb = _pad2(b2[H:].reshape(1, H).astype(jnp.float32), 1, Hp)
        out = pl.pallas_call(
            _enc_glu_kernel,
            out_shape=jax.ShapeDtypeStruct((Mp, Hp), jnp.float32),
            grid=(Mp // tm,),
            in_specs=[
                pl.BlockSpec((tm, Kin), lambda i: (i, 0)),
                pl.BlockSpec((Kin, Hp), lambda i: (0, 0)),
                pl.BlockSpec((1, Hp), lambda i: (0, 0)),
                pl.BlockSpec((Hp, Hp), lambda i: (0, 0)),
                pl.BlockSpec((1, Hp), lambda i: (0, 0)),
                pl.BlockSpec((Hp, Hp), lambda i: (0, 0)),
                pl.BlockSpec((1, Hp), lambda i: (0, 0)),
            ],
            out_specs=pl.BlockSpec((tm, Hp), lambda i: (i, 0)),
            compiler_params=_cparams(1),
            cost_estimate=pl.CostEstimate(
                flops=2 * Mp * Kin * Hp + 4 * Mp * Hp * Hp,
                transcendentals=Mp * Hp,
                bytes_accessed=2 * Mp * Kin + 2 * Kin * Hp + 4 * Hp * Hp + 4 * Mp * Hp),
        )(xb, w1m, b1m, wa, ba, wb, bb)
    else:
        w2m = _pad2(w2[:, :, 0].T.astype(jnp.bfloat16), Hp, Hp)
        b2m = _pad2(b2.reshape(1, H).astype(jnp.float32), 1, Hp)
        out = pl.pallas_call(
            _enc_relu_kernel,
            out_shape=jax.ShapeDtypeStruct((Mp, Hp), jnp.float32),
            grid=(Mp // tm,),
            in_specs=[
                pl.BlockSpec((tm, Kin), lambda i: (i, 0)),
                pl.BlockSpec((Kin, Hp), lambda i: (0, 0)),
                pl.BlockSpec((1, Hp), lambda i: (0, 0)),
                pl.BlockSpec((Hp, Hp), lambda i: (0, 0)),
                pl.BlockSpec((1, Hp), lambda i: (0, 0)),
            ],
            out_specs=pl.BlockSpec((tm, Hp), lambda i: (i, 0)),
            compiler_params=_cparams(1),
            cost_estimate=pl.CostEstimate(
                flops=2 * Mp * Kin * Hp + 2 * Mp * Hp * Hp, transcendentals=0,
                bytes_accessed=2 * Mp * Kin + 2 * Kin * Hp + 2 * Hp * Hp + 4 * Mp * Hp),
        )(xb, w1m, b1m, w2m, b2m)
    return out[:M, :H].reshape(B, Lout, H)


def decoder_block(x, w1, b1, wt, bt, stride, glu, relu):
    """Fused Conv1d(1x1)+GLU/ReLU+ConvTranspose1d matmul, then overlap-add+bias(+ReLU).

    x: (B, L, Cin=H); w1: (ch*H, H, 1); wt: (H, Cout, K) (PyTorch ConvT layout)."""
    B, L, Cin = x.shape
    H, Cout, K = wt.shape
    M = B * L
    tm = min(_TM_MAX, _round_up(M, 8))
    Mp = _round_up(M, tm)
    xb = _pad2(x.reshape(M, Cin).astype(jnp.bfloat16), Mp, Cin)
    Hp = _round_up(H, 128)
    KC = K * Cout
    KCp = _round_up(KC, 128)
    # ConvTranspose weight as (H, K*Cout), columns ordered (tap, cout); rows zero-padded.
    wtm = _pad2(jnp.transpose(wt, (0, 2, 1)).reshape(H, KC).astype(jnp.bfloat16), Hp, KCp)

    if glu:
        wa = _pad2(w1[:H, :, 0].T.astype(jnp.bfloat16), Cin, Hp)
        ba = _pad2(b1[:H].reshape(1, H).astype(jnp.float32), 1, Hp)
        wb = _pad2(w1[H:, :, 0].T.astype(jnp.bfloat16), Cin, Hp)
        bb = _pad2(b1[H:].reshape(1, H).astype(jnp.float32), 1, Hp)
        y = pl.pallas_call(
            _dec_glu_kernel,
            out_shape=jax.ShapeDtypeStruct((Mp, KCp), jnp.float32),
            grid=(Mp // tm,),
            in_specs=[
                pl.BlockSpec((tm, Cin), lambda i: (i, 0)),
                pl.BlockSpec((Cin, Hp), lambda i: (0, 0)),
                pl.BlockSpec((1, Hp), lambda i: (0, 0)),
                pl.BlockSpec((Cin, Hp), lambda i: (0, 0)),
                pl.BlockSpec((1, Hp), lambda i: (0, 0)),
                pl.BlockSpec((Hp, KCp), lambda i: (0, 0)),
            ],
            out_specs=pl.BlockSpec((tm, KCp), lambda i: (i, 0)),
            compiler_params=_cparams(1),
            cost_estimate=pl.CostEstimate(
                flops=4 * Mp * Cin * Hp + 2 * Mp * Hp * KCp,
                transcendentals=Mp * Hp,
                bytes_accessed=2 * Mp * Cin + 4 * Cin * Hp + 2 * Hp * KCp + 4 * Mp * KCp),
        )(xb, wa, ba, wb, bb, wtm)
    else:
        w1m = _pad2(w1[:, :, 0].T.astype(jnp.bfloat16), Cin, Hp)
        b1m = _pad2(b1.reshape(1, -1).astype(jnp.float32), 1, Hp)
        y = pl.pallas_call(
            _dec_relu_kernel,
            out_shape=jax.ShapeDtypeStruct((Mp, KCp), jnp.float32),
            grid=(Mp // tm,),
            in_specs=[
                pl.BlockSpec((tm, Cin), lambda i: (i, 0)),
                pl.BlockSpec((Cin, Hp), lambda i: (0, 0)),
                pl.BlockSpec((1, Hp), lambda i: (0, 0)),
                pl.BlockSpec((Hp, KCp), lambda i: (0, 0)),
            ],
            out_specs=pl.BlockSpec((tm, KCp), lambda i: (i, 0)),
            compiler_params=_cparams(1),
            cost_estimate=pl.CostEstimate(
                flops=2 * Mp * Cin * Hp + 2 * Mp * Hp * KCp, transcendentals=0,
                bytes_accessed=2 * Mp * Cin + 2 * Cin * Hp + 2 * Hp * KCp + 4 * Mp * KCp),
        )(xb, w1m, b1m, wtm)

    y = y[:M, :KC].reshape(B, L, K, Cout)
    out_len = (L - 1) * stride + K
    if K % stride == 0:
        # Overlap-add as K/stride shifted slab additions (no scatter).
        G = K // stride
        acc = None
        for g in range(G):
            slab = y[:, :, g * stride:(g + 1) * stride, :].reshape(B, L * stride, Cout)
            slab = jnp.pad(slab, ((0, 0),
                                  (g * stride, out_len - L * stride - g * stride),
                                  (0, 0)))
            acc = slab if acc is None else acc + slab
        out = acc
    else:
        # TODO(synk): general K % stride != 0 overlap-add kept as an XLA scatter fallback.
        idx = (jnp.arange(L)[:, None] * stride + jnp.arange(K)[None, :]).reshape(-1)
        out = jnp.zeros((B, out_len, Cout), jnp.float32)
        out = out.at[:, idx, :].add(y.reshape(B, L * K, Cout))
    out = out + bt[None, None, :]
    if relu:
        out = jnp.maximum(out, 0.0)
    return out


# ---------------------------------------------------------------------------
# Sinc FIR filter (upsample2 / downsample2) as a banded-weight Pallas matmul
# ---------------------------------------------------------------------------
def _resample_kernel(zeros=56):
    n = 4 * zeros + 1
    win = 0.5 * (1.0 - jnp.cos(2.0 * math.pi * jnp.arange(n) / (n - 1)))  # hann, periodic=False
    winodd = win[1::2]
    t = jnp.linspace(-zeros + 0.5, zeros - 0.5, 2 * zeros) * math.pi
    return ((jnp.sin(t) / t) * winodd).astype(jnp.float32)               # (2*zeros,)


def sinc_fir(x, kern, left_pad):
    """x: (R, T). out[:, t] = sum_j kern[j] * xpad[:, t+j], xpad = [0^left_pad, x, 0...]."""
    R, T = x.shape
    K = kern.shape[0]
    TT = max(128, _round_up(K - 1, 128))          # output time tile (lane-dense)
    nb = -(-T // TT)
    Rp = _round_up(R, 8)
    xp = jnp.pad(x, ((0, Rp - R), (left_pad, (nb + 1) * TT - left_pad - T)))

    # Banded weight: W[t + j, t] = kern[j]
    r = jnp.arange(2 * TT)[:, None]
    t_idx = jnp.arange(TT)[None, :]
    d = r - t_idx
    W = jnp.where((d >= 0) & (d < K), kern[jnp.clip(d, 0, K - 1)], 0.0).astype(jnp.float32)
    wlo, whi = W[:TT], W[TT:]

    out = pl.pallas_call(
        _fir_kernel,
        out_shape=jax.ShapeDtypeStruct((Rp, nb * TT), jnp.float32),
        grid=(nb,),
        in_specs=[
            pl.BlockSpec((Rp, TT), lambda i: (0, i)),
            pl.BlockSpec((Rp, TT), lambda i: (0, i + 1)),
            pl.BlockSpec((TT, TT), lambda i: (0, 0)),
            pl.BlockSpec((TT, TT), lambda i: (0, 0)),
        ],
        out_specs=pl.BlockSpec((Rp, TT), lambda i: (0, i)),
        compiler_params=_cparams(1),
        cost_estimate=pl.CostEstimate(
            flops=4 * Rp * TT * TT * nb, transcendentals=0,
            bytes_accessed=8 * Rp * (nb + 1) * TT + 8 * TT * TT + 4 * Rp * nb * TT),
    )(xp, xp, wlo, whi)
    return out[:R, :T]


def upsample2(x, zeros=56):
    # Reference: F.conv1d(x, kernel, padding=zeros)[..., 1:] -> effective left pad zeros-1.
    B, C, T = x.shape
    kern = _resample_kernel(zeros)
    out = sinc_fir(x.reshape(B * C, T), kern, zeros - 1).reshape(B, C, T)
    y = jnp.stack([x, out], axis=-1)
    return y.reshape(B, C, 2 * T)


def downsample2(x, zeros=56):
    # Reference: F.conv1d(xodd, kernel, padding=zeros)[..., :-1] -> effective left pad zeros.
    B, C, T = x.shape
    if T % 2 != 0:
        x = jnp.pad(x, ((0, 0), (0, 0), (0, 1)))
        T += 1
    xeven = x[..., ::2]
    xodd = x[..., 1::2]
    Th = T // 2
    kern = _resample_kernel(zeros)
    conv = sinc_fir(xodd.reshape(B * C, Th), kern, zeros).reshape(B, C, Th)
    return (xeven + conv) * 0.5


# ---------------------------------------------------------------------------
# LSTM layer: hoisted input projection + single grid-over-T recurrence kernel
# ---------------------------------------------------------------------------
def lstm_layer(x_tb, wih_t, whh_t, b):
    """x_tb: (T, B, In) f32; returns (T, B, H) f32."""
    T, B, In = x_tb.shape
    H = whh_t.shape[0]
    # Input projection for all timesteps at once (big, pipelined, bf16 matmul).
    xg = matmul_bias_act(x_tb.reshape(T * B, In), wih_t, b, "none").reshape(T, B, 4 * H)
    hseq = pl.pallas_call(
        _lstm_seq_kernel,
        out_shape=jax.ShapeDtypeStruct((T, B, H), jnp.float32),
        grid=(T,),
        in_specs=[
            pl.BlockSpec((1, B, 4 * H), lambda t: (t, 0, 0)),
            pl.BlockSpec((H, 4 * H), lambda t: (0, 0)),       # resident in VMEM
        ],
        out_specs=pl.BlockSpec((1, B, H), lambda t: (t, 0, 0)),
        scratch_shapes=[pltpu.VMEM((B, H), jnp.float32),      # h carry
                        pltpu.VMEM((B, H), jnp.float32)],     # c carry
        compiler_params=pltpu.CompilerParams(
            dimension_semantics=("arbitrary",),
            vmem_limit_bytes=_VMEM_LIMIT),
    )(xg, whh_t.astype(jnp.bfloat16))
    return hseq


# ---------------------------------------------------------------------------
# Parameter initialization (deterministic, synthetic; matches torch init scheme)
# ---------------------------------------------------------------------------
def _uniform(key, shape, bound):
    return jax.random.uniform(key, shape, jnp.float32, -bound, bound)


def _rescale(w, b, reference):
    std = jnp.std(w, ddof=1)
    scale = jnp.sqrt(std / reference)
    return w / scale, b / scale


def init_params(key, cfg):
    ch_scale = 2 if cfg["glu"] else 1
    K, depth = cfg["kernel_size"], cfg["depth"]
    ci, co, h = cfg["chin"], cfg["chout"], cfg["hidden"]
    enc, dec = [], []
    for _index in range(depth):
        key, *ks = jax.random.split(key, 9)
        b1_ = 1.0 / math.sqrt(ci * K)
        w1 = _uniform(ks[0], (h, ci, K), b1_)
        b1 = _uniform(ks[1], (h,), b1_)
        b2_ = 1.0 / math.sqrt(h)
        w2 = _uniform(ks[2], (h * ch_scale, h, 1), b2_)
        b2 = _uniform(ks[3], (h * ch_scale,), b2_)
        dw1 = _uniform(ks[4], (ch_scale * h, h, 1), b2_)
        db1 = _uniform(ks[5], (ch_scale * h,), b2_)
        bt_ = 1.0 / math.sqrt(co * K)
        dwt = _uniform(ks[6], (h, co, K), bt_)       # ConvTranspose1d weight (in, out, K)
        dbt = _uniform(ks[7], (co,), bt_)
        if cfg["rescale"]:
            w1, b1 = _rescale(w1, b1, cfg["rescale"])
            w2, b2 = _rescale(w2, b2, cfg["rescale"])
            dw1, db1 = _rescale(dw1, db1, cfg["rescale"])
            dwt, dbt = _rescale(dwt, dbt, cfg["rescale"])
        enc.append({"w1": w1, "b1": b1, "w2": w2, "b2": b2})
        dec.insert(0, {"w1": dw1, "b1": db1, "wt": dwt, "bt": dbt})
        co, ci = h, h
        h = min(int(cfg["growth"] * h), cfg["max_hidden"])
    # BLSTM(dim, bi=not causal): causal=True -> 2-layer unidirectional LSTM, no Linear.
    dim = ci
    lstm = []
    inp = dim
    for _ in range(2):
        key, k1, k2, k3, k4 = jax.random.split(key, 5)
        bnd = 1.0 / math.sqrt(dim)
        wih = _uniform(k1, (4 * dim, inp), bnd)
        whh = _uniform(k2, (4 * dim, dim), bnd)
        bih = _uniform(k3, (4 * dim,), bnd)
        bhh = _uniform(k4, (4 * dim,), bnd)
        lstm.append({"wih_t": wih.T, "whh_t": whh.T, "b": bih + bhh})
        inp = dim
    return {"encoder": enc, "decoder": dec, "lstm": lstm}


# ---------------------------------------------------------------------------
# Demucs forward
# ---------------------------------------------------------------------------
def valid_length(length, cfg):
    resample, depth = cfg["resample"], cfg["depth"]
    K, S = cfg["kernel_size"], cfg["stride"]
    length = math.ceil(length * resample)
    for _ in range(depth):
        length = math.ceil((length - K) / S) + 1
        length = max(length, 1)
    for _ in range(depth):
        length = (length - 1) * S + K
    return int(math.ceil(length / resample))


def demucs_forward(params, mix, cfg):
    if mix.ndim == 2:
        mix = mix[:, None, :]                       # (B, 1, T)
    if cfg["normalize"]:
        mono = jnp.mean(mix, axis=1, keepdims=True)
        std = jnp.std(mono, axis=-1, keepdims=True, ddof=1)   # torch's unbiased std
        mix = mix / (cfg["floor"] + std)
    else:
        std = 1.0
    length = mix.shape[-1]
    x = jnp.pad(mix, ((0, 0), (0, 0), (0, valid_length(length, cfg) - length)))
    if cfg["resample"] == 2:
        x = upsample2(x)
    elif cfg["resample"] == 4:
        x = upsample2(upsample2(x))

    x = jnp.transpose(x, (0, 2, 1))                 # channels-last (B, T, C)
    skips = []
    for enc in params["encoder"]:
        x = encoder_block(x, enc["w1"], enc["b1"], enc["w2"], enc["b2"],
                          cfg["stride"], cfg["glu"])
        skips.append(x)

    # LSTM (causal=True -> unidirectional 2-layer LSTM, no output Linear).
    # TODO(synk): bidirectional (causal=False) BLSTM + Linear path not implemented.
    h = jnp.transpose(x, (1, 0, 2))                 # (T, B, C)
    for layer in params["lstm"]:
        h = lstm_layer(h, layer["wih_t"], layer["whh_t"], layer["b"])
    x = jnp.transpose(h, (1, 0, 2))                 # (B, T, C)

    n_dec = len(params["decoder"])
    for j, dec in enumerate(params["decoder"]):
        skip = skips.pop(-1)
        x = x + skip[:, :x.shape[1], :]
        x = decoder_block(x, dec["w1"], dec["b1"], dec["wt"], dec["bt"],
                          cfg["stride"], cfg["glu"], relu=(j < n_dec - 1))

    x = jnp.transpose(x, (0, 2, 1))                 # back to (B, C, T)
    if cfg["resample"] == 2:
        x = downsample2(x)
    elif cfg["resample"] == 4:
        x = downsample2(downsample2(x))
    x = x[..., :length]
    return jnp.squeeze(std * x, axis=1)


# ---------------------------------------------------------------------------
if __name__ == "__main__":
    cfg = dict(chin=1, chout=1, hidden=8, depth=3, kernel_size=8, stride=4,
               causal=True, resample=4, growth=2, max_hidden=10000,
               normalize=True, glu=True, rescale=0.1, floor=1e-3)
    key = jax.random.PRNGKey(0)
    pkey, xkey = jax.random.split(key)
    params = init_params(pkey, cfg)
    mix = jax.random.normal(xkey, (2, 64), jnp.float32)   # (batch, time)

    fwd = jax.jit(lambda p, m: demucs_forward(p, m, cfg))
    out = jax.block_until_ready(fwd(params, mix))
    assert out.shape == (2, 64), out.shape
    assert bool(jnp.all(jnp.isfinite(out)))
    print("KERNEL_OK")
</pallas_src>

<mosaic_0001>
module attributes {stable_mosaic.version = 11 : i64} {
  func.func @_fir_kernel(%arg0: i32, %arg1: memref<8x128xf32, #tpu.memory_space<vmem>>, %arg2: memref<8x128xf32, #tpu.memory_space<vmem>>, %arg3: memref<128x128xf32, #tpu.memory_space<vmem>>, %arg4: memref<128x128xf32, #tpu.memory_space<vmem>>, %arg5: memref<8x128xf32, #tpu.memory_space<vmem>>) attributes {dimension_semantics = [#tpu.dimension_semantics<parallel>], iteration_bounds = array<i64: 1>, scalar_prefetch = 0 : i64, scratch_operands = 0 : i64, tpu.core_type = #tpu.core_type<tc>, window_params = [{transform_indices = @transform_0, window_bounds = array<i64: 8, 128>}, {transform_indices = @transform_1, window_bounds = array<i64: 8, 128>}, {pipeline_mode = #tpu.pipeline_mode<synchronous>, transform_indices = @transform_2, window_bounds = array<i64: 128, 128>}, {pipeline_mode = #tpu.pipeline_mode<synchronous>, transform_indices = @transform_3, window_bounds = array<i64: 128, 128>}, {transform_indices = @transform_4, window_bounds = array<i64: 8, 128>}]} {
    %c0 = arith.constant 0 : index
    %c0_0 = arith.constant 0 : index
    %0 = vector.load %arg1[%c0, %c0_0] : memref<8x128xf32, #tpu.memory_space<vmem>>, vector<8x128xf32>
    %c0_1 = arith.constant 0 : index
    %c0_2 = arith.constant 0 : index
    %1 = vector.load %arg3[%c0_1, %c0_2] : memref<128x128xf32, #tpu.memory_space<vmem>>, vector<128x128xf32>
    %cst = arith.constant dense<0.000000e+00> : vector<8x128xf32>
    %2 = tpu.matmul %0, %1, %cst {dimension_numbers = #tpu.dot_dimension_numbers<[1], [0], [0], [1], [0, 0, 1, 1], [], []>} : vector<8x128xf32>, vector<128x128xf32>, vector<8x128xf32> -> vector<8x128xf32>
    %c0_3 = arith.constant 0 : index
    %c0_4 = arith.constant 0 : index
    %3 = vector.load %arg2[%c0_3, %c0_4] : memref<8x128xf32, #tpu.memory_space<vmem>>, vector<8x128xf32>
    %c0_5 = arith.constant 0 : index
    %c0_6 = arith.constant 0 : index
    %4 = vector.load %arg4[%c0_5, %c0_6] : memref<128x128xf32, #tpu.memory_space<vmem>>, vector<128x128xf32>
    %cst_7 = arith.constant dense<0.000000e+00> : vector<8x128xf32>
    %5 = tpu.matmul %3, %4, %cst_7 {dimension_numbers = #tpu.dot_dimension_numbers<[1], [0], [0], [1], [0, 0, 1, 1], [], []>} : vector<8x128xf32>, vector<128x128xf32>, vector<8x128xf32> -> vector<8x128xf32>
    %6 = arith.addf %2, %5 : vector<8x128xf32>
    %c0_8 = arith.constant 0 : index
    %c0_9 = arith.constant 0 : index
    %7 = vector.load %arg5[%c0_8, %c0_9] : memref<8x128xf32, #tpu.memory_space<vmem>>, vector<8x128xf32>
    tpu.vector_store %arg5[%c0_8, %c0_9], %6 {strides = array<i32>} : memref<8x128xf32, #tpu.memory_space<vmem>>, vector<8x128xf32>,
    return
  }
  func.func @transform_0(%arg0: i32) -> (i32, i32) {
    %c0_i32 = arith.constant 0 : i32
    %c0_i32_0 = arith.constant 0 : i32
    return %c0_i32, %arg0 : i32, i32
  }
  func.func @transform_1(%arg0: i32) -> (i32, i32) {
    %c1_i32 = arith.constant 1 : i32
    %0 = arith.addi %arg0, %c1_i32 : i32
    %c0_i32 = arith.constant 0 : i32
    %c0_i32_0 = arith.constant 0 : i32
    return %c0_i32, %0 : i32, i32
  }
  func.func @transform_2(%arg0: i32) -> (i32, i32) {
    %c0_i32 = arith.constant 0 : i32
    %c0_i32_0 = arith.constant 0 : i32
    %c0_i32_1 = arith.constant 0 : i32
    return %c0_i32, %c0_i32_0 : i32, i32
  }
  func.func @transform_3(%arg0: i32) -> (i32, i32) {
    %c0_i32 = arith.constant 0 : i32
    %c0_i32_0 = arith.constant 0 : i32
    %c0_i32_1 = arith.constant 0 : i32
    return %c0_i32, %c0_i32_0 : i32, i32
  }
  func.func @transform_4(%arg0: i32) -> (i32, i32) {
    %c0_i32 = arith.constant 0 : i32
    %c0_i32_0 = arith.constant 0 : i32
    return %c0_i32, %arg0 : i32, i32
  }
}

module attributes {stable_mosaic.version = 11 : i64} {
  func.func @_fir_kernel(%arg0: i32, %arg1: memref<8x128xf32, #tpu.memory_space<vmem>>, %arg2: memref<8x128xf32, #tpu.memory_space<vmem>>, %arg3: memref<128x128xf32, #tpu.memory_space<vmem>>, %arg4: memref<128x128xf32, #tpu.memory_space<vmem>>, %arg5: memref<8x128xf32, #tpu.memory_space<vmem>>) attributes {dimension_semantics = [#tpu.dimension_semantics<parallel>], iteration_bounds = array<i64: 2>, scalar_prefetch = 0 : i64, scratch_operands = 0 : i64, tpu.core_type = #tpu.core_type<tc>, window_params = [{transform_indices = @transform_0, window_bounds = array<i64: 8, 128>}, {transform_indices = @transform_1, window_bounds = array<i64: 8, 128>}, {pipeline_mode = #tpu.pipeline_mode<synchronous>, transform_indices = @transform_2, window_bounds = array<i64: 128, 128>}, {pipeline_mode = #tpu.pipeline_mode<synchronous>, transform_indices = @transform_3, window_bounds = array<i64: 128, 128>}, {transform_indices = @transform_4, window_bounds = array<i64: 8, 128>}]} {
    %c0 = arith.constant 0 : index
    %c0_0 = arith.constant 0 : index
    %0 = vector.load %arg1[%c0, %c0_0] : memref<8x128xf32, #tpu.memory_space<vmem>>, vector<8x128xf32>
    %c0_1 = arith.constant 0 : index
    %c0_2 = arith.constant 0 : index
    %1 = vector.load %arg3[%c0_1, %c0_2] : memref<128x128xf32, #tpu.memory_space<vmem>>, vector<128x128xf32>
    %cst = arith.constant dense<0.000000e+00> : vector<8x128xf32>
    %2 = tpu.matmul %0, %1, %cst {dimension_numbers = #tpu.dot_dimension_numbers<[1], [0], [0], [1], [0, 0, 1, 1], [], []>} : vector<8x128xf32>, vector<128x128xf32>, vector<8x128xf32> -> vector<8x128xf32>
    %c0_3 = arith.constant 0 : index
    %c0_4 = arith.constant 0 : index
    %3 = vector.load %arg2[%c0_3, %c0_4] : memref<8x128xf32, #tpu.memory_space<vmem>>, vector<8x128xf32>
    %c0_5 = arith.constant 0 : index
    %c0_6 = arith.constant 0 : index
    %4 = vector.load %arg4[%c0_5, %c0_6] : memref<128x128xf32, #tpu.memory_space<vmem>>, vector<128x128xf32>
    %cst_7 = arith.constant dense<0.000000e+00> : vector<8x128xf32>
    %5 = tpu.matmul %3, %4, %cst_7 {dimension_numbers = #tpu.dot_dimension_numbers<[1], [0], [0], [1], [0, 0, 1, 1], [], []>} : vector<8x128xf32>, vector<128x128xf32>, vector<8x128xf32> -> vector<8x128xf32>
    %6 = arith.addf %2, %5 : vector<8x128xf32>
    %c0_8 = arith.constant 0 : index
    %c0_9 = arith.constant 0 : index
    %7 = vector.load %arg5[%c0_8, %c0_9] : memref<8x128xf32, #tpu.memory_space<vmem>>, vector<8x128xf32>
    tpu.vector_store %arg5[%c0_8, %c0_9], %6 {strides = array<i32>} : memref<8x128xf32, #tpu.memory_space<vmem>>, vector<8x128xf32>,
    return
  }
  func.func @transform_0(%arg0: i32) -> (i32, i32) {
    %c0_i32 = arith.constant 0 : i32
    %c0_i32_0 = arith.constant 0 : i32
    return %c0_i32, %arg0 : i32, i32
  }
  func.func @transform_1(%arg0: i32) -> (i32, i32) {
    %c1_i32 = arith.constant 1 : i32
    %0 = arith.addi %arg0, %c1_i32 : i32
    %c0_i32 = arith.constant 0 : i32
    %c0_i32_0 = arith.constant 0 : i32
    return %c0_i32, %0 : i32, i32
  }
  func.func @transform_2(%arg0: i32) -> (i32, i32) {
    %c0_i32 = arith.constant 0 : i32
    %c0_i32_0 = arith.constant 0 : i32
    %c0_i32_1 = arith.constant 0 : i32
    return %c0_i32, %c0_i32_0 : i32, i32
  }
  func.func @transform_3(%arg0: i32) -> (i32, i32) {
    %c0_i32 = arith.constant 0 : i32
    %c0_i32_0 = arith.constant 0 : i32
    %c0_i32_1 = arith.constant 0 : i32
    return %c0_i32, %c0_i32_0 : i32, i32
  }
  func.func @transform_4(%arg0: i32) -> (i32, i32) {
    %c0_i32 = arith.constant 0 : i32
    %c0_i32_0 = arith.constant 0 : i32
    return %c0_i32, %arg0 : i32, i32
  }
}

module attributes {stable_mosaic.version = 11 : i64} {
  func.func @_enc_glu_kernel(%arg0: i32, %arg1: memref<136x8xbf16, #tpu.memory_space<vmem>>, %arg2: memref<8x128xbf16, #tpu.memory_space<vmem>>, %arg3: memref<1x128xf32, #tpu.memory_space<vmem>>, %arg4: memref<128x128xbf16, #tpu.memory_space<vmem>>, %arg5: memref<1x128xf32, #tpu.memory_space<vmem>>, %arg6: memref<128x128xbf16, #tpu.memory_space<vmem>>, %arg7: memref<1x128xf32, #tpu.memory_space<vmem>>, %arg8: memref<136x128xf32, #tpu.memory_space<vmem>>) attributes {dimension_semantics = [#tpu.dimension_semantics<parallel>], iteration_bounds = array<i64: 1>, scalar_prefetch = 0 : i64, scratch_operands = 0 : i64, tpu.core_type = #tpu.core_type<tc>, window_params = [{transform_indices = @transform_0, window_bounds = array<i64: 136, 8>}, {pipeline_mode = #tpu.pipeline_mode<synchronous>, transform_indices = @transform_1, window_bounds = array<i64: 8, 128>}, {pipeline_mode = #tpu.pipeline_mode<synchronous>, transform_indices = @transform_2, window_bounds = array<i64: 1, 128>}, {pipeline_mode = #tpu.pipeline_mode<synchronous>, transform_indices = @transform_3, window_bounds = array<i64: 128, 128>}, {pipeline_mode = #tpu.pipeline_mode<synchronous>, transform_indices = @transform_4, window_bounds = array<i64: 1, 128>}, {pipeline_mode = #tpu.pipeline_mode<synchronous>, transform_indices = @transform_5, window_bounds = array<i64: 128, 128>}, {pipeline_mode = #tpu.pipeline_mode<synchronous>, transform_indices = @transform_6, window_bounds = array<i64: 1, 128>}, {transform_indices = @transform_7, window_bounds = array<i64: 136, 128>}]} {
    %c0 = arith.constant 0 : index
    %c0_0 = arith.constant 0 : index
    %0 = vector.load %arg1[%c0, %c0_0] : memref<136x8xbf16, #tpu.memory_space<vmem>>, vector<136x8xbf16>
    %c0_1 = arith.constant 0 : index
    %c0_2 = arith.constant 0 : index
    %1 = vector.load %arg2[%c0_1, %c0_2] : memref<8x128xbf16, #tpu.memory_space<vmem>>, vector<8x128xbf16>
    %cst = arith.constant dense<0.000000e+00> : vector<136x128xf32>
    %2 = tpu.matmul %0, %1, %cst {dimension_numbers = #tpu.dot_dimension_numbers<[1], [0], [0], [1], [0, 0, 1, 1], [], []>} : vector<136x8xbf16>, vector<8x128xbf16>, vector<136x128xf32> -> vector<136x128xf32>
    %c0_3 = arith.constant 0 : index
    %c0_4 = arith.constant 0 : index
    %3 = vector.load %arg3[%c0_3, %c0_4] : memref<1x128xf32, #tpu.memory_space<vmem>>, vector<1x128xf32>
    %4 = vector.broadcast %3 : vector<1x128xf32> to vector<136x128xf32>
    %5 = arith.addf %2, %4 : vector<136x128xf32>
    %cst_5 = arith.constant 0.000000e+00 : f32
    %6 = vector.broadcast %cst_5 : f32 to vector<136x128xf32>
    %7 = arith.maximumf %5, %6 : vector<136x128xf32>
    %8 = arith.truncf %7 : vector<136x128xf32> to vector<136x128xbf16>
    %c0_6 = arith.constant 0 : index
    %c0_7 = arith.constant 0 : index
    %9 = vector.load %arg4[%c0_6, %c0_7] : memref<128x128xbf16, #tpu.memory_space<vmem>>, vector<128x128xbf16>
    %cst_8 = arith.constant dense<0.000000e+00> : vector<136x128xf32>
    %10 = tpu.matmul %8, %9, %cst_8 {dimension_numbers = #tpu.dot_dimension_numbers<[1], [0], [0], [1], [0, 0, 1, 1], [], []>} : vector<136x128xbf16>, vector<128x128xbf16>, vector<136x128xf32> -> vector<136x128xf32>
    %c0_9 = arith.constant 0 : index
    %c0_10 = arith.constant 0 : index
    %11 = vector.load %arg5[%c0_9, %c0_10] : memref<1x128xf32, #tpu.memory_space<vmem>>, vector<1x128xf32>
    %12 = vector.broadcast %11 : vector<1x128xf32> to vector<136x128xf32>
    %13 = arith.addf %10, %12 : vector<136x128xf32>
    %c0_11 = arith.constant 0 : index
    %c0_12 = arith.constant 0 : index
    %14 = vector.load %arg6[%c0_11, %c0_12] : memref<128x128xbf16, #tpu.memory_space<vmem>>, vector<128x128xbf16>
    %cst_13 = arith.constant dense<0.000000e+00> : vector<136x128xf32>
    %15 = tpu.matmul %8, %14, %cst_13 {dimension_numbers = #tpu.dot_dimension_numbers<[1], [0], [0], [1], [0, 0, 1, 1], [], []>} : vector<136x128xbf16>, vector<128x128xbf16>, vector<136x128xf32> -> vector<136x128xf32>
    %c0_14 = arith.constant 0 : index
    %c0_15 = arith.constant 0 : index
    %16 = vector.load %arg7[%c0_14, %c0_15] : memref<1x128xf32, #tpu.memory_space<vmem>>, vector<1x128xf32>
    %17 = vector.broadcast %16 : vector<1x128xf32> to vector<136x128xf32>
    %18 = arith.addf %15, %17 : vector<136x128xf32>
    %19 = arith.negf %18 : vector<136x128xf32>
    %20 = math.exp %19 : vector<136x128xf32>
    %cst_16 = arith.constant 1.000000e+00 : f32
    %21 = vector.broadcast %cst_16 : f32 to vector<136x128xf32>
    %22 = arith.addf %21, %20 : vector<136x128xf32>
    %23 = arith.divf %21, %22 : vector<136x128xf32>
    %24 = arith.mulf %13, %23 : vector<136x128xf32>
    %c0_17 = arith.constant 0 : index
    %c0_18 = arith.constant 0 : index
    %25 = vector.load %arg8[%c0_17, %c0_18] : memref<136x128xf32, #tpu.memory_space<vmem>>, vector<136x128xf32>
    tpu.vector_store %arg8[%c0_17, %c0_18], %24 {strides = array<i32>} : memref<136x128xf32, #tpu.memory_space<vmem>>, vector<136x128xf32>,
    return
  }
  func.func @transform_0(%arg0: i32) -> (i32, i32) {
    %c0_i32 = arith.constant 0 : i32
    %c0_i32_0 = arith.constant 0 : i32
    return %arg0, %c0_i32 : i32, i32
  }
  func.func @transform_1(%arg0: i32) -> (i32, i32) {
    %c0_i32 = arith.constant 0 : i32
    %c0_i32_0 = arith.constant 0 : i32
    %c0_i32_1 = arith.constant 0 : i32
    return %c0_i32, %c0_i32_0 : i32, i32
  }
  func.func @transform_2(%arg0: i32) -> (i32, i32) {
    %c0_i32 = arith.constant 0 : i32
    %c0_i32_0 = arith.constant 0 : i32
    %c0_i32_1 = arith.constant 0 : i32
    return %c0_i32, %c0_i32_0 : i32, i32
  }
  func.func @transform_3(%arg0: i32) -> (i32, i32) {
    %c0_i32 = arith.constant 0 : i32
    %c0_i32_0 = arith.constant 0 : i32
    %c0_i32_1 = arith.constant 0 : i32
    return %c0_i32, %c0_i32_0 : i32, i32
  }
  func.func @transform_4(%arg0: i32) -> (i32, i32) {
    %c0_i32 = arith.constant 0 : i32
    %c0_i32_0 = arith.constant 0 : i32
    %c0_i32_1 = arith.constant 0 : i32
    return %c0_i32, %c0_i32_0 : i32, i32
  }
  func.func @transform_5(%arg0: i32) -> (i32, i32) {
    %c0_i32 = arith.constant 0 : i32
    %c0_i32_0 = arith.constant 0 : i32
    %c0_i32_1 = arith.constant 0 : i32
    return %c0_i32, %c0_i32_0 : i32, i32
  }
  func.func @transform_6(%arg0: i32) -> (i32, i32) {
    %c0_i32 = arith.constant 0 : i32
    %c0_i32_0 = arith.constant 0 : i32
    %c0_i32_1 = arith.constant 0 : i32
    return %c0_i32, %c0_i32_0 : i32, i32
  }
  func.func @transform_7(%arg0: i32) -> (i32, i32) {
    %c0_i32 = arith.constant 0 : i32
    %c0_i32_0 = arith.constant 0 : i32
    return %arg0, %c0_i32 : i32, i32
  }
}

module attributes {stable_mosaic.version = 11 : i64} {
  func.func @_enc_glu_kernel(%arg0: i32, %arg1: memref<32x64xbf16, #tpu.memory_space<vmem>>, %arg2: memref<64x128xbf16, #tpu.memory_space<vmem>>, %arg3: memref<1x128xf32, #tpu.memory_space<vmem>>, %arg4: memref<128x128xbf16, #tpu.memory_space<vmem>>, %arg5: memref<1x128xf32, #tpu.memory_space<vmem>>, %arg6: memref<128x128xbf16, #tpu.memory_space<vmem>>, %arg7: memref<1x128xf32, #tpu.memory_space<vmem>>, %arg8: memref<32x128xf32, #tpu.memory_space<vmem>>) attributes {dimension_semantics = [#tpu.dimension_semantics<parallel>], iteration_bounds = array<i64: 1>, scalar_prefetch = 0 : i64, scratch_operands = 0 : i64, tpu.core_type = #tpu.core_type<tc>, window_params = [{transform_indices = @transform_0, window_bounds = array<i64: 32, 64>}, {pipeline_mode = #tpu.pipeline_mode<synchronous>, transform_indices = @transform_1, window_bounds = array<i64: 64, 128>}, {pipeline_mode = #tpu.pipeline_mode<synchronous>, transform_indices = @transform_2, window_bounds = array<i64: 1, 128>}, {pipeline_mode = #tpu.pipeline_mode<synchronous>, transform_indices = @transform_3, window_bounds = array<i64: 128, 128>}, {pipeline_mode = #tpu.pipeline_mode<synchronous>, transform_indices = @transform_4, window_bounds = array<i64: 1, 128>}, {pipeline_mode = #tpu.pipeline_mode<synchronous>, transform_indices = @transform_5, window_bounds = array<i64: 128, 128>}, {pipeline_mode = #tpu.pipeline_mode<synchronous>, transform_indices = @transform_6, window_bounds = array<i64: 1, 128>}, {transform_indices = @transform_7, window_bounds = array<i64: 32, 128>}]} {
    %c0 = arith.constant 0 : index
    %c0_0 = arith.constant 0 : index
    %0 = vector.load %arg1[%c0, %c0_0] : memref<32x64xbf16, #tpu.memory_space<vmem>>, vector<32x64xbf16>
    %c0_1 = arith.constant 0 : index
    %c0_2 = arith.constant 0 : index
    %1 = vector.load %arg2[%c0_1, %c0_2] : memref<64x128xbf16, #tpu.memory_space<vmem>>, vector<64x128xbf16>
    %cst = arith.constant dense<0.000000e+00> : vector<32x128xf32>
    %2 = tpu.matmul %0, %1, %cst {dimension_numbers = #tpu.dot_dimension_numbers<[1], [0], [0], [1], [0, 0, 1, 1], [], []>} : vector<32x64xbf16>, vector<64x128xbf16>, vector<32x128xf32> -> vector<32x128xf32>
    %c0_3 = arith.constant 0 : index
    %c0_4 = arith.constant 0 : index
    %3 = vector.load %arg3[%c0_3, %c0_4] : memref<1x128xf32, #tpu.memory_space<vmem>>, vector<1x128xf32>
    %4 = vector.broadcast %3 : vector<1x128xf32> to vector<32x128xf32>
    %5 = arith.addf %2, %4 : vector<32x128xf32>
    %cst_5 = arith.constant 0.000000e+00 : f32
    %6 = vector.broadcast %cst_5 : f32 to vector<32x128xf32>
    %7 = arith.maximumf %5, %6 : vector<32x128xf32>
    %8 = arith.truncf %7 : vector<32x128xf32> to vector<32x128xbf16>
    %c0_6 = arith.constant 0 : index
    %c0_7 = arith.constant 0 : index
    %9 = vector.load %arg4[%c0_6, %c0_7] : memref<128x128xbf16, #tpu.memory_space<vmem>>, vector<128x128xbf16>
    %cst_8 = arith.constant dense<0.000000e+00> : vector<32x128xf32>
    %10 = tpu.matmul %8, %9, %cst_8 {dimension_numbers = #tpu.dot_dimension_numbers<[1], [0], [0], [1], [0, 0, 1, 1], [], []>} : vector<32x128xbf16>, vector<128x128xbf16>, vector<32x128xf32> -> vector<32x128xf32>
    %c0_9 = arith.constant 0 : index
    %c0_10 = arith.constant 0 : index
    %11 = vector.load %arg5[%c0_9, %c0_10] : memref<1x128xf32, #tpu.memory_space<vmem>>, vector<1x128xf32>
    %12 = vector.broadcast %11 : vector<1x128xf32> to vector<32x128xf32>
    %13 = arith.addf %10, %12 : vector<32x128xf32>
    %c0_11 = arith.constant 0 : index
    %c0_12 = arith.constant 0 : index
    %14 = vector.load %arg6[%c0_11, %c0_12] : memref<128x128xbf16, #tpu.memory_space<vmem>>, vector<128x128xbf16>
    %cst_13 = arith.constant dense<0.000000e+00> : vector<32x128xf32>
    %15 = tpu.matmul %8, %14, %cst_13 {dimension_numbers = #tpu.dot_dimension_numbers<[1], [0], [0], [1], [0, 0, 1, 1], [], []>} : vector<32x128xbf16>, vector<128x128xbf16>, vector<32x128xf32> -> vector<32x128xf32>
    %c0_14 = arith.constant 0 : index
    %c0_15 = arith.constant 0 : index
    %16 = vector.load %arg7[%c0_14, %c0_15] : memref<1x128xf32, #tpu.memory_space<vmem>>, vector<1x128xf32>
    %17 = vector.broadcast %16 : vector<1x128xf32> to vector<32x128xf32>
    %18 = arith.addf %15, %17 : vector<32x128xf32>
    %19 = arith.negf %18 : vector<32x128xf32>
    %20 = math.exp %19 : vector<32x128xf32>
    %cst_16 = arith.constant 1.000000e+00 : f32
    %21 = vector.broadcast %cst_16 : f32 to vector<32x128xf32>
    %22 = arith.addf %21, %20 : vector<32x128xf32>
    %23 = arith.divf %21, %22 : vector<32x128xf32>
    %24 = arith.mulf %13, %23 : vector<32x128xf32>
    %c0_17 = arith.constant 0 : index
    %c0_18 = arith.constant 0 : index
    %25 = vector.load %arg8[%c0_17, %c0_18] : memref<32x128xf32, #tpu.memory_space<vmem>>, vector<32x128xf32>
    tpu.vector_store %arg8[%c0_17, %c0_18], %24 {strides = array<i32>} : memref<32x128xf32, #tpu.memory_space<vmem>>, vector<32x128xf32>,
    return
  }
  func.func @transform_0(%arg0: i32) -> (i32, i32) {
    %c0_i32 = arith.constant 0 : i32
    %c0_i32_0 = arith.constant 0 : i32
    return %arg0, %c0_i32 : i32, i32
  }
  func.func @transform_1(%arg0: i32) -> (i32, i32) {
    %c0_i32 = arith.constant 0 : i32
    %c0_i32_0 = arith.constant 0 : i32
    %c0_i32_1 = arith.constant 0 : i32
    return %c0_i32, %c0_i32_0 : i32, i32
  }
  func.func @transform_2(%arg0: i32) -> (i32, i32) {
    %c0_i32 = arith.constant 0 : i32
    %c0_i32_0 = arith.constant 0 : i32
    %c0_i32_1 = arith.constant 0 : i32
    return %c0_i32, %c0_i32_0 : i32, i32
  }
  func.func @transform_3(%arg0: i32) -> (i32, i32) {
    %c0_i32 = arith.constant 0 : i32
    %c0_i32_0 = arith.constant 0 : i32
    %c0_i32_1 = arith.constant 0 : i32
    return %c0_i32, %c0_i32_0 : i32, i32
  }
  func.func @transform_4(%arg0: i32) -> (i32, i32) {
    %c0_i32 = arith.constant 0 : i32
    %c0_i32_0 = arith.constant 0 : i32
    %c0_i32_1 = arith.constant 0 : i32
    return %c0_i32, %c0_i32_0 : i32, i32
  }
  func.func @transform_5(%arg0: i32) -> (i32, i32) {
    %c0_i32 = arith.constant 0 : i32
    %c0_i32_0 = arith.constant 0 : i32
    %c0_i32_1 = arith.constant 0 : i32
    return %c0_i32, %c0_i32_0 : i32, i32
  }
  func.func @transform_6(%arg0: i32) -> (i32, i32) {
    %c0_i32 = arith.constant 0 : i32
    %c0_i32_0 = arith.constant 0 : i32
    %c0_i32_1 = arith.constant 0 : i32
    return %c0_i32, %c0_i32_0 : i32, i32
  }
  func.func @transform_7(%arg0: i32) -> (i32, i32) {
    %c0_i32 = arith.constant 0 : i32
    %c0_i32_0 = arith.constant 0 : i32
    return %arg0, %c0_i32 : i32, i32
  }
}

module attributes {stable_mosaic.version = 11 : i64} {
  func.func @_enc_glu_kernel(%arg0: i32, %arg1: memref<8x128xbf16, #tpu.memory_space<vmem>>, %arg2: memref<128x128xbf16, #tpu.memory_space<vmem>>, %arg3: memref<1x128xf32, #tpu.memory_space<vmem>>, %arg4: memref<128x128xbf16, #tpu.memory_space<vmem>>, %arg5: memref<1x128xf32, #tpu.memory_space<vmem>>, %arg6: memref<128x128xbf16, #tpu.memory_space<vmem>>, %arg7: memref<1x128xf32, #tpu.memory_space<vmem>>, %arg8: memref<8x128xf32, #tpu.memory_space<vmem>>) attributes {dimension_semantics = [#tpu.dimension_semantics<parallel>], iteration_bounds = array<i64: 1>, scalar_prefetch = 0 : i64, scratch_operands = 0 : i64, tpu.core_type = #tpu.core_type<tc>, window_params = [{transform_indices = @transform_0, window_bounds = array<i64: 8, 128>}, {pipeline_mode = #tpu.pipeline_mode<synchronous>, transform_indices = @transform_1, window_bounds = array<i64: 128, 128>}, {pipeline_mode = #tpu.pipeline_mode<synchronous>, transform_indices = @transform_2, window_bounds = array<i64: 1, 128>}, {pipeline_mode = #tpu.pipeline_mode<synchronous>, transform_indices = @transform_3, window_bounds = array<i64: 128, 128>}, {pipeline_mode = #tpu.pipeline_mode<synchronous>, transform_indices = @transform_4, window_bounds = array<i64: 1, 128>}, {pipeline_mode = #tpu.pipeline_mode<synchronous>, transform_indices = @transform_5, window_bounds = array<i64: 128, 128>}, {pipeline_mode = #tpu.pipeline_mode<synchronous>, transform_indices = @transform_6, window_bounds = array<i64: 1, 128>}, {transform_indices = @transform_7, window_bounds = array<i64: 8, 128>}]} {
    %c0 = arith.constant 0 : index
    %c0_0 = arith.constant 0 : index
    %0 = vector.load %arg1[%c0, %c0_0] : memref<8x128xbf16, #tpu.memory_space<vmem>>, vector<8x128xbf16>
    %c0_1 = arith.constant 0 : index
    %c0_2 = arith.constant 0 : index
    %1 = vector.load %arg2[%c0_1, %c0_2] : memref<128x128xbf16, #tpu.memory_space<vmem>>, vector<128x128xbf16>
    %cst = arith.constant dense<0.000000e+00> : vector<8x128xf32>
    %2 = tpu.matmul %0, %1, %cst {dimension_numbers = #tpu.dot_dimension_numbers<[1], [0], [0], [1], [0, 0, 1, 1], [], []>} : vector<8x128xbf16>, vector<128x128xbf16>, vector<8x128xf32> -> vector<8x128xf32>
    %c0_3 = arith.constant 0 : index
    %c0_4 = arith.constant 0 : index
    %3 = vector.load %arg3[%c0_3, %c0_4] : memref<1x128xf32, #tpu.memory_space<vmem>>, vector<1x128xf32>
    %4 = vector.broadcast %3 : vector<1x128xf32> to vector<8x128xf32>
    %5 = arith.addf %2, %4 : vector<8x128xf32>
    %cst_5 = arith.constant 0.000000e+00 : f32
    %6 = vector.broadcast %cst_5 : f32 to vector<8x128xf32>
    %7 = arith.maximumf %5, %6 : vector<8x128xf32>
    %8 = arith.truncf %7 : vector<8x128xf32> to vector<8x128xbf16>
    %c0_6 = arith.constant 0 : index
    %c0_7 = arith.constant 0 : index
    %9 = vector.load %arg4[%c0_6, %c0_7] : memref<128x128xbf16, #tpu.memory_space<vmem>>, vector<128x128xbf16>
    %cst_8 = arith.constant dense<0.000000e+00> : vector<8x128xf32>
    %10 = tpu.matmul %8, %9, %cst_8 {dimension_numbers = #tpu.dot_dimension_numbers<[1], [0], [0], [1], [0, 0, 1, 1], [], []>} : vector<8x128xbf16>, vector<128x128xbf16>, vector<8x128xf32> -> vector<8x128xf32>
    %c0_9 = arith.constant 0 : index
    %c0_10 = arith.constant 0 : index
    %11 = vector.load %arg5[%c0_9, %c0_10] : memref<1x128xf32, #tpu.memory_space<vmem>>, vector<1x128xf32>
    %12 = vector.broadcast %11 : vector<1x128xf32> to vector<8x128xf32>
    %13 = arith.addf %10, %12 : vector<8x128xf32>
    %c0_11 = arith.constant 0 : index
    %c0_12 = arith.constant 0 : index
    %14 = vector.load %arg6[%c0_11, %c0_12] : memref<128x128xbf16, #tpu.memory_space<vmem>>, vector<128x128xbf16>
    %cst_13 = arith.constant dense<0.000000e+00> : vector<8x128xf32>
    %15 = tpu.matmul %8, %14, %cst_13 {dimension_numbers = #tpu.dot_dimension_numbers<[1], [0], [0], [1], [0, 0, 1, 1], [], []>} : vector<8x128xbf16>, vector<128x128xbf16>, vector<8x128xf32> -> vector<8x128xf32>
    %c0_14 = arith.constant 0 : index
    %c0_15 = arith.constant 0 : index
    %16 = vector.load %arg7[%c0_14, %c0_15] : memref<1x128xf32, #tpu.memory_space<vmem>>, vector<1x128xf32>
    %17 = vector.broadcast %16 : vector<1x128xf32> to vector<8x128xf32>
    %18 = arith.addf %15, %17 : vector<8x128xf32>
    %19 = arith.negf %18 : vector<8x128xf32>
    %20 = math.exp %19 : vector<8x128xf32>
    %cst_16 = arith.constant 1.000000e+00 : f32
    %21 = vector.broadcast %cst_16 : f32 to vector<8x128xf32>
    %22 = arith.addf %21, %20 : vector<8x128xf32>
    %23 = arith.divf %21, %22 : vector<8x128xf32>
    %24 = arith.mulf %13, %23 : vector<8x128xf32>
    %c0_17 = arith.constant 0 : index
    %c0_18 = arith.constant 0 : index
    %25 = vector.load %arg8[%c0_17, %c0_18] : memref<8x128xf32, #tpu.memory_space<vmem>>, vector<8x128xf32>
    tpu.vector_store %arg8[%c0_17, %c0_18], %24 {strides = array<i32>} : memref<8x128xf32, #tpu.memory_space<vmem>>, vector<8x128xf32>,
    return
  }
  func.func @transform_0(%arg0: i32) -> (i32, i32) {
    %c0_i32 = arith.constant 0 : i32
    %c0_i32_0 = arith.constant 0 : i32
    return %arg0, %c0_i32 : i32, i32
  }
  func.func @transform_1(%arg0: i32) -> (i32, i32) {
    %c0_i32 = arith.constant 0 : i32
    %c0_i32_0 = arith.constant 0 : i32
    %c0_i32_1 = arith.constant 0 : i32
    return %c0_i32, %c0_i32_0 : i32, i32
  }
  func.func @transform_2(%arg0: i32) -> (i32, i32) {
    %c0_i32 = arith.constant 0 : i32
    %c0_i32_0 = arith.constant 0 : i32
    %c0_i32_1 = arith.constant 0 : i32
    return %c0_i32, %c0_i32_0 : i32, i32
  }
  func.func @transform_3(%arg0: i32) -> (i32, i32) {
    %c0_i32 = arith.constant 0 : i32
    %c0_i32_0 = arith.constant 0 : i32
    %c0_i32_1 = arith.constant 0 : i32
    return %c0_i32, %c0_i32_0 : i32, i32
  }
  func.func @transform_4(%arg0: i32) -> (i32, i32) {
    %c0_i32 = arith.constant 0 : i32
    %c0_i32_0 = arith.constant 0 : i32
    %c0_i32_1 = arith.constant 0 : i32
    return %c0_i32, %c0_i32_0 : i32, i32
  }
  func.func @transform_5(%arg0: i32) -> (i32, i32) {
    %c0_i32 = arith.constant 0 : i32
    %c0_i32_0 = arith.constant 0 : i32
    %c0_i32_1 = arith.constant 0 : i32
    return %c0_i32, %c0_i32_0 : i32, i32
  }
  func.func @transform_6(%arg0: i32) -> (i32, i32) {
    %c0_i32 = arith.constant 0 : i32
    %c0_i32_0 = arith.constant 0 : i32
    %c0_i32_1 = arith.constant 0 : i32
    return %c0_i32, %c0_i32_0 : i32, i32
  }
  func.func @transform_7(%arg0: i32) -> (i32, i32) {
    %c0_i32 = arith.constant 0 : i32
    %c0_i32_0 = arith.constant 0 : i32
    return %arg0, %c0_i32 : i32, i32
  }
}

module attributes {stable_mosaic.version = 11 : i64} {
  func.func @_mm_bias_act_kernel(%arg0: i32, %arg1: i32, %arg2: memref<8x32xbf16, #tpu.memory_space<vmem>>, %arg3: memref<32x128xbf16, #tpu.memory_space<vmem>>, %arg4: memref<1x128xf32, #tpu.memory_space<vmem>>, %arg5: memref<8x128xf32, #tpu.memory_space<vmem>>) attributes {dimension_semantics = [#tpu.dimension_semantics<parallel>, #tpu.dimension_semantics<parallel>], iteration_bounds = array<i64: 1, 1>, scalar_prefetch = 0 : i64, scratch_operands = 0 : i64, tpu.core_type = #tpu.core_type<tc>, window_params = [{transform_indices = @transform_0, window_bounds = array<i64: 8, 32>}, {transform_indices = @transform_1, window_bounds = array<i64: 32, 128>}, {transform_indices = @transform_2, window_bounds = array<i64: 1, 128>}, {transform_indices = @transform_3, window_bounds = array<i64: 8, 128>}]} {
    %c0 = arith.constant 0 : index
    %c0_0 = arith.constant 0 : index
    %0 = vector.load %arg2[%c0, %c0_0] : memref<8x32xbf16, #tpu.memory_space<vmem>>, vector<8x32xbf16>
    %c0_1 = arith.constant 0 : index
    %c0_2 = arith.constant 0 : index
    %1 = vector.load %arg3[%c0_1, %c0_2] : memref<32x128xbf16, #tpu.memory_space<vmem>>, vector<32x128xbf16>
    %cst = arith.constant dense<0.000000e+00> : vector<8x128xf32>
    %2 = tpu.matmul %0, %1, %cst {dimension_numbers = #tpu.dot_dimension_numbers<[1], [0], [0], [1], [0, 0, 1, 1], [], []>} : vector<8x32xbf16>, vector<32x128xbf16>, vector<8x128xf32> -> vector<8x128xf32>
    %c0_3 = arith.constant 0 : index
    %c0_4 = arith.constant 0 : index
    %3 = vector.load %arg4[%c0_3, %c0_4] : memref<1x128xf32, #tpu.memory_space<vmem>>, vector<1x128xf32>
    %4 = vector.broadcast %3 : vector<1x128xf32> to vector<8x128xf32>
    %5 = arith.addf %2, %4 : vector<8x128xf32>
    %c0_5 = arith.constant 0 : index
    %c0_6 = arith.constant 0 : index
    %6 = vector.load %arg5[%c0_5, %c0_6] : memref<8x128xf32, #tpu.memory_space<vmem>>, vector<8x128xf32>
    tpu.vector_store %arg5[%c0_5, %c0_6], %5 {strides = array<i32>} : memref<8x128xf32, #tpu.memory_space<vmem>>, vector<8x128xf32>,
    return
  }
  func.func @transform_0(%arg0: i32, %arg1: i32) -> (i32, i32) {
    %c0_i32 = arith.constant 0 : i32
    %c0_i32_0 = arith.constant 0 : i32
    return %arg0, %c0_i32 : i32, i32
  }
  func.func @transform_1(%arg0: i32, %arg1: i32) -> (i32, i32) {
    %c0_i32 = arith.constant 0 : i32
    %c0_i32_0 = arith.constant 0 : i32
    return %c0_i32, %arg1 : i32, i32
  }
  func.func @transform_2(%arg0: i32, %arg1: i32) -> (i32, i32) {
    %c0_i32 = arith.constant 0 : i32
    %c0_i32_0 = arith.constant 0 : i32
    return %c0_i32, %arg1 : i32, i32
  }
  func.func @transform_3(%arg0: i32, %arg1: i32) -> (i32, i32) {
    %c0_i32 = arith.constant 0 : i32
    return %arg0, %arg1 : i32, i32
  }
}

module attributes {stable_mosaic.version = 11 : i64} {
  func.func @_lstm_seq_kernel(%arg0: i32, %arg1: memref<1x2x128xf32, #tpu.memory_space<vmem>>, %arg2: memref<32x128xbf16, #tpu.memory_space<vmem>>, %arg3: memref<1x2x32xf32, #tpu.memory_space<vmem>>, %arg4: memref<2x32xf32, #tpu.memory_space<vmem>>, %arg5: memref<2x32xf32, #tpu.memory_space<vmem>>) attributes {dimension_semantics = [#tpu.dimension_semantics<arbitrary>], iteration_bounds = array<i64: 3>, scalar_prefetch = 0 : i64, scratch_operands = 2 : i64, tpu.core_type = #tpu.core_type<tc>, window_params = [{transform_indices = @transform_0, window_bounds = array<i64: 1, 2, 128>}, {pipeline_mode = #tpu.pipeline_mode<synchronous>, transform_indices = @transform_1, window_bounds = array<i64: 32, 128>}, {transform_indices = @transform_2, window_bounds = array<i64: 1, 2, 32>}]} {
    %c0_i32 = arith.constant 0 : i32
    %0 = arith.cmpi eq, %arg0, %c0_i32 : i32
    %1 = arith.extui %0 : i1 to i32
    %c0_i32_0 = arith.constant 0 : i32
    %2 = arith.cmpi ne, %1, %c0_i32_0 : i32
    scf.if %2 {
      %cst_19 = arith.constant 0.000000e+00 : f32
      %41 = vector.broadcast %cst_19 : f32 to vector<2x32xf32>
      %c0_20 = arith.constant 0 : index
      %c0_21 = arith.constant 0 : index
      %42 = vector.load %arg4[%c0_20, %c0_21] : memref<2x32xf32, #tpu.memory_space<vmem>>, vector<2x32xf32>
      tpu.vector_store %arg4[%c0_20, %c0_21], %41 {strides = array<i32>} : memref<2x32xf32, #tpu.memory_space<vmem>>, vector<2x32xf32>,
      %cst_22 = arith.constant 0.000000e+00 : f32
      %43 = vector.broadcast %cst_22 : f32 to vector<2x32xf32>
      %c0_23 = arith.constant 0 : index
      %c0_24 = arith.constant 0 : index
      %44 = vector.load %arg5[%c0_23, %c0_24] : memref<2x32xf32, #tpu.memory_space<vmem>>, vector<2x32xf32>
      tpu.vector_store %arg5[%c0_23, %c0_24], %43 {strides = array<i32>} : memref<2x32xf32, #tpu.memory_space<vmem>>, vector<2x32xf32>,
    } else {
    }
    %c0 = arith.constant 0 : index
    %c0_1 = arith.constant 0 : index
    %c0_2 = arith.constant 0 : index
    %3 = vector.load %arg1[%c0, %c0_1, %c0_2] : memref<1x2x128xf32, #tpu.memory_space<vmem>>, vector<1x2x128xf32>
    %4 = vector.shape_cast %3 : vector<1x2x128xf32> to vector<2x128xf32>
    %c0_3 = arith.constant 0 : index
    %c0_4 = arith.constant 0 : index
    %5 = vector.load %arg4[%c0_3, %c0_4] : memref<2x32xf32, #tpu.memory_space<vmem>>, vector<2x32xf32>
    %6 = arith.truncf %5 : vector<2x32xf32> to vector<2x32xbf16>
    %c0_5 = arith.constant 0 : index
    %c0_6 = arith.constant 0 : index
    %7 = vector.load %arg2[%c0_5, %c0_6] : memref<32x128xbf16, #tpu.memory_space<vmem>>, vector<32x128xbf16>
    %cst = arith.constant dense<0.000000e+00> : vector<2x128xf32>
    %8 = tpu.matmul %6, %7, %cst {dimension_numbers = #tpu.dot_dimension_numbers<[1], [0], [0], [1], [0, 0, 1, 1], [], []>} : vector<2x32xbf16>, vector<32x128xbf16>, vector<2x128xf32> -> vector<2x128xf32>
    %9 = arith.addf %4, %8 : vector<2x128xf32>
    %10 = vector.extract_strided_slice %9 {offsets = [0, 0], sizes = [2, 32], strides = [1, 1]} : vector<2x128xf32> to vector<2x32xf32>
    %11 = arith.negf %10 : vector<2x32xf32>
    %12 = math.exp %11 : vector<2x32xf32>
    %cst_7 = arith.constant 1.000000e+00 : f32
    %13 = vector.broadcast %cst_7 : f32 to vector<2x32xf32>
    %14 = arith.addf %13, %12 : vector<2x32xf32>
    %15 = arith.divf %13, %14 : vector<2x32xf32>
    %16 = vector.extract_strided_slice %9 {offsets = [0, 32], sizes = [2, 32], strides = [1, 1]} : vector<2x128xf32> to vector<2x32xf32>
    %17 = arith.negf %16 : vector<2x32xf32>
    %18 = math.exp %17 : vector<2x32xf32>
    %cst_8 = arith.constant 1.000000e+00 : f32
    %19 = vector.broadcast %cst_8 : f32 to vector<2x32xf32>
    %20 = arith.addf %19, %18 : vector<2x32xf32>
    %21 = arith.divf %19, %20 : vector<2x32xf32>
    %22 = vector.extract_strided_slice %9 {offsets = [0, 64], sizes = [2, 32], strides = [1, 1]} : vector<2x128xf32> to vector<2x32xf32>
    %23 = math.tanh %22 : vector<2x32xf32>
    %24 = vector.extract_strided_slice %9 {offsets = [0, 96], sizes = [2, 32], strides = [1, 1]} : vector<2x128xf32> to vector<2x32xf32>
    %25 = arith.negf %24 : vector<2x32xf32>
    %26 = math.exp %25 : vector<2x32xf32>
    %cst_9 = arith.constant 1.000000e+00 : f32
    %27 = vector.broadcast %cst_9 : f32 to vector<2x32xf32>
    %28 = arith.addf %27, %26 : vector<2x32xf32>
    %29 = arith.divf %27, %28 : vector<2x32xf32>
    %c0_10 = arith.constant 0 : index
    %c0_11 = arith.constant 0 : index
    %30 = vector.load %arg5[%c0_10, %c0_11] : memref<2x32xf32, #tpu.memory_space<vmem>>, vector<2x32xf32>
    %31 = arith.mulf %21, %30 : vector<2x32xf32>
    %32 = arith.mulf %15, %23 : vector<2x32xf32>
    %33 = arith.addf %31, %32 : vector<2x32xf32>
    %c0_12 = arith.constant 0 : index
    %c0_13 = arith.constant 0 : index
    %34 = vector.load %arg5[%c0_12, %c0_13] : memref<2x32xf32, #tpu.memory_space<vmem>>, vector<2x32xf32>
    tpu.vector_store %arg5[%c0_12, %c0_13], %33 {strides = array<i32>} : memref<2x32xf32, #tpu.memory_space<vmem>>, vector<2x32xf32>,
    %35 = math.tanh %33 : vector<2x32xf32>
    %36 = arith.mulf %29, %35 : vector<2x32xf32>
    %c0_14 = arith.constant 0 : index
    %c0_15 = arith.constant 0 : index
    %37 = vector.load %arg4[%c0_14, %c0_15] : memref<2x32xf32, #tpu.memory_space<vmem>>, vector<2x32xf32>
    tpu.vector_store %arg4[%c0_14, %c0_15], %36 {strides = array<i32>} : memref<2x32xf32, #tpu.memory_space<vmem>>, vector<2x32xf32>,
    %c0_16 = arith.constant 0 : index
    %c0_17 = arith.constant 0 : index
    %c0_18 = arith.constant 0 : index
    %38 = vector.load %arg3[%c0_16, %c0_17, %c0_18] : memref<1x2x32xf32, #tpu.memory_space<vmem>>, vector<1x2x32xf32>
    %39 = vector.shape_cast %38 : vector<1x2x32xf32> to vector<2x32xf32>
    %40 = vector.shape_cast %36 : vector<2x32xf32> to vector<1x2x32xf32>
    tpu.vector_store %arg3[%c0_16, %c0_17, %c0_18], %40 {strides = array<i32>} : memref<1x2x32xf32, #tpu.memory_space<vmem>>, vector<1x2x32xf32>,
    return
  }
  func.func @transform_0(%arg0: i32) -> (i32, i32, i32) {
    %c0_i32 = arith.constant 0 : i32
    %c0_i32_0 = arith.constant 0 : i32
    %c0_i32_1 = arith.constant 0 : i32
    return %arg0, %c0_i32, %c0_i32_0 : i32, i32, i32
  }
  func.func @transform_1(%arg0: i32) -> (i32, i32) {
    %c0_i32 = arith.constant 0 : i32
    %c0_i32_0 = arith.constant 0 : i32
    %c0_i32_1 = arith.constant 0 : i32
    return %c0_i32, %c0_i32_0 : i32, i32
  }
  func.func @transform_2(%arg0: i32) -> (i32, i32, i32) {
    %c0_i32 = arith.constant 0 : i32
    %c0_i32_0 = arith.constant 0 : i32
    %c0_i32_1 = arith.constant 0 : i32
    return %arg0, %c0_i32, %c0_i32_0 : i32, i32, i32
  }
}

module attributes {stable_mosaic.version = 11 : i64} {
  func.func @_dec_glu_kernel(%arg0: i32, %arg1: memref<8x32xbf16, #tpu.memory_space<vmem>>, %arg2: memref<32x128xbf16, #tpu.memory_space<vmem>>, %arg3: memref<1x128xf32, #tpu.memory_space<vmem>>, %arg4: memref<32x128xbf16, #tpu.memory_space<vmem>>, %arg5: memref<1x128xf32, #tpu.memory_space<vmem>>, %arg6: memref<128x128xbf16, #tpu.memory_space<vmem>>, %arg7: memref<8x128xf32, #tpu.memory_space<vmem>>) attributes {dimension_semantics = [#tpu.dimension_semantics<parallel>], iteration_bounds = array<i64: 1>, scalar_prefetch = 0 : i64, scratch_operands = 0 : i64, tpu.core_type = #tpu.core_type<tc>, window_params = [{transform_indices = @transform_0, window_bounds = array<i64: 8, 32>}, {pipeline_mode = #tpu.pipeline_mode<synchronous>, transform_indices = @transform_1, window_bounds = array<i64: 32, 128>}, {pipeline_mode = #tpu.pipeline_mode<synchronous>, transform_indices = @transform_2, window_bounds = array<i64: 1, 128>}, {pipeline_mode = #tpu.pipeline_mode<synchronous>, transform_indices = @transform_3, window_bounds = array<i64: 32, 128>}, {pipeline_mode = #tpu.pipeline_mode<synchronous>, transform_indices = @transform_4, window_bounds = array<i64: 1, 128>}, {pipeline_mode = #tpu.pipeline_mode<synchronous>, transform_indices = @transform_5, window_bounds = array<i64: 128, 128>}, {transform_indices = @transform_6, window_bounds = array<i64: 8, 128>}]} {
    %c0 = arith.constant 0 : index
    %c0_0 = arith.constant 0 : index
    %0 = vector.load %arg1[%c0, %c0_0] : memref<8x32xbf16, #tpu.memory_space<vmem>>, vector<8x32xbf16>
    %c0_1 = arith.constant 0 : index
    %c0_2 = arith.constant 0 : index
    %1 = vector.load %arg2[%c0_1, %c0_2] : memref<32x128xbf16, #tpu.memory_space<vmem>>, vector<32x128xbf16>
    %cst = arith.constant dense<0.000000e+00> : vector<8x128xf32>
    %2 = tpu.matmul %0, %1, %cst {dimension_numbers = #tpu.dot_dimension_numbers<[1], [0], [0], [1], [0, 0, 1, 1], [], []>} : vector<8x32xbf16>, vector<32x128xbf16>, vector<8x128xf32> -> vector<8x128xf32>
    %c0_3 = arith.constant 0 : index
    %c0_4 = arith.constant 0 : index
    %3 = vector.load %arg3[%c0_3, %c0_4] : memref<1x128xf32, #tpu.memory_space<vmem>>, vector<1x128xf32>
    %4 = vector.broadcast %3 : vector<1x128xf32> to vector<8x128xf32>
    %5 = arith.addf %2, %4 : vector<8x128xf32>
    %c0_5 = arith.constant 0 : index
    %c0_6 = arith.constant 0 : index
    %6 = vector.load %arg1[%c0_5, %c0_6] : memref<8x32xbf16, #tpu.memory_space<vmem>>, vector<8x32xbf16>
    %c0_7 = arith.constant 0 : index
    %c0_8 = arith.constant 0 : index
    %7 = vector.load %arg4[%c0_7, %c0_8] : memref<32x128xbf16, #tpu.memory_space<vmem>>, vector<32x128xbf16>
    %cst_9 = arith.constant dense<0.000000e+00> : vector<8x128xf32>
    %8 = tpu.matmul %6, %7, %cst_9 {dimension_numbers = #tpu.dot_dimension_numbers<[1], [0], [0], [1], [0, 0, 1, 1], [], []>} : vector<8x32xbf16>, vector<32x128xbf16>, vector<8x128xf32> -> vector<8x128xf32>
    %c0_10 = arith.constant 0 : index
    %c0_11 = arith.constant 0 : index
    %9 = vector.load %arg5[%c0_10, %c0_11] : memref<1x128xf32, #tpu.memory_space<vmem>>, vector<1x128xf32>
    %10 = vector.broadcast %9 : vector<1x128xf32> to vector<8x128xf32>
    %11 = arith.addf %8, %10 : vector<8x128xf32>
    %12 = arith.negf %11 : vector<8x128xf32>
    %13 = math.exp %12 : vector<8x128xf32>
    %cst_12 = arith.constant 1.000000e+00 : f32
    %14 = vector.broadcast %cst_12 : f32 to vector<8x128xf32>
    %15 = arith.addf %14, %13 : vector<8x128xf32>
    %16 = arith.divf %14, %15 : vector<8x128xf32>
    %17 = arith.mulf %5, %16 : vector<8x128xf32>
    %18 = arith.truncf %17 : vector<8x128xf32> to vector<8x128xbf16>
    %c0_13 = arith.constant 0 : index
    %c0_14 = arith.constant 0 : index
    %19 = vector.load %arg6[%c0_13, %c0_14] : memref<128x128xbf16, #tpu.memory_space<vmem>>, vector<128x128xbf16>
    %cst_15 = arith.constant dense<0.000000e+00> : vector<8x128xf32>
    %20 = tpu.matmul %18, %19, %cst_15 {dimension_numbers = #tpu.dot_dimension_numbers<[1], [0], [0], [1], [0, 0, 1, 1], [], []>} : vector<8x128xbf16>, vector<128x128xbf16>, vector<8x128xf32> -> vector<8x128xf32>
    %c0_16 = arith.constant 0 : index
    %c0_17 = arith.constant 0 : index
    %21 = vector.load %arg7[%c0_16, %c0_17] : memref<8x128xf32, #tpu.memory_space<vmem>>, vector<8x128xf32>
    tpu.vector_store %arg7[%c0_16, %c0_17], %20 {strides = array<i32>} : memref<8x128xf32, #tpu.memory_space<vmem>>, vector<8x128xf32>,
    return
  }
  func.func @transform_0(%arg0: i32) -> (i32, i32) {
    %c0_i32 = arith.constant 0 : i32
    %c0_i32_0 = arith.constant 0 : i32
    return %arg0, %c0_i32 : i32, i32
  }
  func.func @transform_1(%arg0: i32) -> (i32, i32) {
    %c0_i32 = arith.constant 0 : i32
    %c0_i32_0 = arith.constant 0 : i32
    %c0_i32_1 = arith.constant 0 : i32
    return %c0_i32, %c0_i32_0 : i32, i32
  }
  func.func @transform_2(%arg0: i32) -> (i32, i32) {
    %c0_i32 = arith.constant 0 : i32
    %c0_i32_0 = arith.constant 0 : i32
    %c0_i32_1 = arith.constant 0 : i32
    return %c0_i32, %c0_i32_0 : i32, i32
  }
  func.func @transform_3(%arg0: i32) -> (i32, i32) {
    %c0_i32 = arith.constant 0 : i32
    %c0_i32_0 = arith.constant 0 : i32
    %c0_i32_1 = arith.constant 0 : i32
    return %c0_i32, %c0_i32_0 : i32, i32
  }
  func.func @transform_4(%arg0: i32) -> (i32, i32) {
    %c0_i32 = arith.constant 0 : i32
    %c0_i32_0 = arith.constant 0 : i32
    %c0_i32_1 = arith.constant 0 : i32
    return %c0_i32, %c0_i32_0 : i32, i32
  }
  func.func @transform_5(%arg0: i32) -> (i32, i32) {
    %c0_i32 = arith.constant 0 : i32
    %c0_i32_0 = arith.constant 0 : i32
    %c0_i32_1 = arith.constant 0 : i32
    return %c0_i32, %c0_i32_0 : i32, i32
  }
  func.func @transform_6(%arg0: i32) -> (i32, i32) {
    %c0_i32 = arith.constant 0 : i32
    %c0_i32_0 = arith.constant 0 : i32
    return %arg0, %c0_i32 : i32, i32
  }
}

module attributes {stable_mosaic.version = 11 : i64} {
  func.func @_dec_glu_kernel(%arg0: i32, %arg1: memref<32x16xbf16, #tpu.memory_space<vmem>>, %arg2: memref<16x128xbf16, #tpu.memory_space<vmem>>, %arg3: memref<1x128xf32, #tpu.memory_space<vmem>>, %arg4: memref<16x128xbf16, #tpu.memory_space<vmem>>, %arg5: memref<1x128xf32, #tpu.memory_space<vmem>>, %arg6: memref<128x128xbf16, #tpu.memory_space<vmem>>, %arg7: memref<32x128xf32, #tpu.memory_space<vmem>>) attributes {dimension_semantics = [#tpu.dimension_semantics<parallel>], iteration_bounds = array<i64: 1>, scalar_prefetch = 0 : i64, scratch_operands = 0 : i64, tpu.core_type = #tpu.core_type<tc>, window_params = [{transform_indices = @transform_0, window_bounds = array<i64: 32, 16>}, {pipeline_mode = #tpu.pipeline_mode<synchronous>, transform_indices = @transform_1, window_bounds = array<i64: 16, 128>}, {pipeline_mode = #tpu.pipeline_mode<synchronous>, transform_indices = @transform_2, window_bounds = array<i64: 1, 128>}, {pipeline_mode = #tpu.pipeline_mode<synchronous>, transform_indices = @transform_3, window_bounds = array<i64: 16, 128>}, {pipeline_mode = #tpu.pipeline_mode<synchronous>, transform_indices = @transform_4, window_bounds = array<i64: 1, 128>}, {pipeline_mode = #tpu.pipeline_mode<synchronous>, transform_indices = @transform_5, window_bounds = array<i64: 128, 128>}, {transform_indices = @transform_6, window_bounds = array<i64: 32, 128>}]} {
    %c0 = arith.constant 0 : index
    %c0_0 = arith.constant 0 : index
    %0 = vector.load %arg1[%c0, %c0_0] : memref<32x16xbf16, #tpu.memory_space<vmem>>, vector<32x16xbf16>
    %c0_1 = arith.constant 0 : index
    %c0_2 = arith.constant 0 : index
    %1 = vector.load %arg2[%c0_1, %c0_2] : memref<16x128xbf16, #tpu.memory_space<vmem>>, vector<16x128xbf16>
    %cst = arith.constant dense<0.000000e+00> : vector<32x128xf32>
    %2 = tpu.matmul %0, %1, %cst {dimension_numbers = #tpu.dot_dimension_numbers<[1], [0], [0], [1], [0, 0, 1, 1], [], []>} : vector<32x16xbf16>, vector<16x128xbf16>, vector<32x128xf32> -> vector<32x128xf32>
    %c0_3 = arith.constant 0 : index
    %c0_4 = arith.constant 0 : index
    %3 = vector.load %arg3[%c0_3, %c0_4] : memref<1x128xf32, #tpu.memory_space<vmem>>, vector<1x128xf32>
    %4 = vector.broadcast %3 : vector<1x128xf32> to vector<32x128xf32>
    %5 = arith.addf %2, %4 : vector<32x128xf32>
    %c0_5 = arith.constant 0 : index
    %c0_6 = arith.constant 0 : index
    %6 = vector.load %arg1[%c0_5, %c0_6] : memref<32x16xbf16, #tpu.memory_space<vmem>>, vector<32x16xbf16>
    %c0_7 = arith.constant 0 : index
    %c0_8 = arith.constant 0 : index
    %7 = vector.load %arg4[%c0_7, %c0_8] : memref<16x128xbf16, #tpu.memory_space<vmem>>, vector<16x128xbf16>
    %cst_9 = arith.constant dense<0.000000e+00> : vector<32x128xf32>
    %8 = tpu.matmul %6, %7, %cst_9 {dimension_numbers = #tpu.dot_dimension_numbers<[1], [0], [0], [1], [0, 0, 1, 1], [], []>} : vector<32x16xbf16>, vector<16x128xbf16>, vector<32x128xf32> -> vector<32x128xf32>
    %c0_10 = arith.constant 0 : index
    %c0_11 = arith.constant 0 : index
    %9 = vector.load %arg5[%c0_10, %c0_11] : memref<1x128xf32, #tpu.memory_space<vmem>>, vector<1x128xf32>
    %10 = vector.broadcast %9 : vector<1x128xf32> to vector<32x128xf32>
    %11 = arith.addf %8, %10 : vector<32x128xf32>
    %12 = arith.negf %11 : vector<32x128xf32>
    %13 = math.exp %12 : vector<32x128xf32>
    %cst_12 = arith.constant 1.000000e+00 : f32
    %14 = vector.broadcast %cst_12 : f32 to vector<32x128xf32>
    %15 = arith.addf %14, %13 : vector<32x128xf32>
    %16 = arith.divf %14, %15 : vector<32x128xf32>
    %17 = arith.mulf %5, %16 : vector<32x128xf32>
    %18 = arith.truncf %17 : vector<32x128xf32> to vector<32x128xbf16>
    %c0_13 = arith.constant 0 : index
    %c0_14 = arith.constant 0 : index
    %19 = vector.load %arg6[%c0_13, %c0_14] : memref<128x128xbf16, #tpu.memory_space<vmem>>, vector<128x128xbf16>
    %cst_15 = arith.constant dense<0.000000e+00> : vector<32x128xf32>
    %20 = tpu.matmul %18, %19, %cst_15 {dimension_numbers = #tpu.dot_dimension_numbers<[1], [0], [0], [1], [0, 0, 1, 1], [], []>} : vector<32x128xbf16>, vector<128x128xbf16>, vector<32x128xf32> -> vector<32x128xf32>
    %c0_16 = arith.constant 0 : index
    %c0_17 = arith.constant 0 : index
    %21 = vector.load %arg7[%c0_16, %c0_17] : memref<32x128xf32, #tpu.memory_space<vmem>>, vector<32x128xf32>
    tpu.vector_store %arg7[%c0_16, %c0_17], %20 {strides = array<i32>} : memref<32x128xf32, #tpu.memory_space<vmem>>, vector<32x128xf32>,
    return
  }
  func.func @transform_0(%arg0: i32) -> (i32, i32) {
    %c0_i32 = arith.constant 0 : i32
    %c0_i32_0 = arith.constant 0 : i32
    return %arg0, %c0_i32 : i32, i32
  }
  func.func @transform_1(%arg0: i32) -> (i32, i32) {
    %c0_i32 = arith.constant 0 : i32
    %c0_i32_0 = arith.constant 0 : i32
    %c0_i32_1 = arith.constant 0 : i32
    return %c0_i32, %c0_i32_0 : i32, i32
  }
  func.func @transform_2(%arg0: i32) -> (i32, i32) {
    %c0_i32 = arith.constant 0 : i32
    %c0_i32_0 = arith.constant 0 : i32
    %c0_i32_1 = arith.constant 0 : i32
    return %c0_i32, %c0_i32_0 : i32, i32
  }
  func.func @transform_3(%arg0: i32) -> (i32, i32) {
    %c0_i32 = arith.constant 0 : i32
    %c0_i32_0 = arith.constant 0 : i32
    %c0_i32_1 = arith.constant 0 : i32
    return %c0_i32, %c0_i32_0 : i32, i32
  }
  func.func @transform_4(%arg0: i32) -> (i32, i32) {
    %c0_i32 = arith.constant 0 : i32
    %c0_i32_0 = arith.constant 0 : i32
    %c0_i32_1 = arith.constant 0 : i32
    return %c0_i32, %c0_i32_0 : i32, i32
  }
  func.func @transform_5(%arg0: i32) -> (i32, i32) {
    %c0_i32 = arith.constant 0 : i32
    %c0_i32_0 = arith.constant 0 : i32
    %c0_i32_1 = arith.constant 0 : i32
    return %c0_i32, %c0_i32_0 : i32, i32
  }
  func.func @transform_6(%arg0: i32) -> (i32, i32) {
    %c0_i32 = arith.constant 0 : i32
    %c0_i32_0 = arith.constant 0 : i32
    return %arg0, %c0_i32 : i32, i32
  }
}

module attributes {stable_mosaic.version = 11 : i64} {
  func.func @_dec_glu_kernel(%arg0: i32, %arg1: memref<136x8xbf16, #tpu.memory_space<vmem>>, %arg2: memref<8x128xbf16, #tpu.memory_space<vmem>>, %arg3: memref<1x128xf32, #tpu.memory_space<vmem>>, %arg4: memref<8x128xbf16, #tpu.memory_space<vmem>>, %arg5: memref<1x128xf32, #tpu.memory_space<vmem>>, %arg6: memref<128x128xbf16, #tpu.memory_space<vmem>>, %arg7: memref<136x128xf32, #tpu.memory_space<vmem>>) attributes {dimension_semantics = [#tpu.dimension_semantics<parallel>], iteration_bounds = array<i64: 1>, scalar_prefetch = 0 : i64, scratch_operands = 0 : i64, tpu.core_type = #tpu.core_type<tc>, window_params = [{transform_indices = @transform_0, window_bounds = array<i64: 136, 8>}, {pipeline_mode = #tpu.pipeline_mode<synchronous>, transform_indices = @transform_1, window_bounds = array<i64: 8, 128>}, {pipeline_mode = #tpu.pipeline_mode<synchronous>, transform_indices = @transform_2, window_bounds = array<i64: 1, 128>}, {pipeline_mode = #tpu.pipeline_mode<synchronous>, transform_indices = @transform_3, window_bounds = array<i64: 8, 128>}, {pipeline_mode = #tpu.pipeline_mode<synchronous>, transform_indices = @transform_4, window_bounds = array<i64: 1, 128>}, {pipeline_mode = #tpu.pipeline_mode<synchronous>, transform_indices = @transform_5, window_bounds = array<i64: 128, 128>}, {transform_indices = @transform_6, window_bounds = array<i64: 136, 128>}]} {
    %c0 = arith.constant 0 : index
    %c0_0 = arith.constant 0 : index
    %0 = vector.load %arg1[%c0, %c0_0] : memref<136x8xbf16, #tpu.memory_space<vmem>>, vector<136x8xbf16>
    %c0_1 = arith.constant 0 : index
    %c0_2 = arith.constant 0 : index
    %1 = vector.load %arg2[%c0_1, %c0_2] : memref<8x128xbf16, #tpu.memory_space<vmem>>, vector<8x128xbf16>
    %cst = arith.constant dense<0.000000e+00> : vector<136x128xf32>
    %2 = tpu.matmul %0, %1, %cst {dimension_numbers = #tpu.dot_dimension_numbers<[1], [0], [0], [1], [0, 0, 1, 1], [], []>} : vector<136x8xbf16>, vector<8x128xbf16>, vector<136x128xf32> -> vector<136x128xf32>
    %c0_3 = arith.constant 0 : index
    %c0_4 = arith.constant 0 : index
    %3 = vector.load %arg3[%c0_3, %c0_4] : memref<1x128xf32, #tpu.memory_space<vmem>>, vector<1x128xf32>
    %4 = vector.broadcast %3 : vector<1x128xf32> to vector<136x128xf32>
    %5 = arith.addf %2, %4 : vector<136x128xf32>
    %c0_5 = arith.constant 0 : index
    %c0_6 = arith.constant 0 : index
    %6 = vector.load %arg1[%c0_5, %c0_6] : memref<136x8xbf16, #tpu.memory_space<vmem>>, vector<136x8xbf16>
    %c0_7 = arith.constant 0 : index
    %c0_8 = arith.constant 0 : index
    %7 = vector.load %arg4[%c0_7, %c0_8] : memref<8x128xbf16, #tpu.memory_space<vmem>>, vector<8x128xbf16>
    %cst_9 = arith.constant dense<0.000000e+00> : vector<136x128xf32>
    %8 = tpu.matmul %6, %7, %cst_9 {dimension_numbers = #tpu.dot_dimension_numbers<[1], [0], [0], [1], [0, 0, 1, 1], [], []>} : vector<136x8xbf16>, vector<8x128xbf16>, vector<136x128xf32> -> vector<136x128xf32>
    %c0_10 = arith.constant 0 : index
    %c0_11 = arith.constant 0 : index
    %9 = vector.load %arg5[%c0_10, %c0_11] : memref<1x128xf32, #tpu.memory_space<vmem>>, vector<1x128xf32>
    %10 = vector.broadcast %9 : vector<1x128xf32> to vector<136x128xf32>
    %11 = arith.addf %8, %10 : vector<136x128xf32>
    %12 = arith.negf %11 : vector<136x128xf32>
    %13 = math.exp %12 : vector<136x128xf32>
    %cst_12 = arith.constant 1.000000e+00 : f32
    %14 = vector.broadcast %cst_12 : f32 to vector<136x128xf32>
    %15 = arith.addf %14, %13 : vector<136x128xf32>
    %16 = arith.divf %14, %15 : vector<136x128xf32>
    %17 = arith.mulf %5, %16 : vector<136x128xf32>
    %18 = arith.truncf %17 : vector<136x128xf32> to vector<136x128xbf16>
    %c0_13 = arith.constant 0 : index
    %c0_14 = arith.constant 0 : index
    %19 = vector.load %arg6[%c0_13, %c0_14] : memref<128x128xbf16, #tpu.memory_space<vmem>>, vector<128x128xbf16>
    %cst_15 = arith.constant dense<0.000000e+00> : vector<136x128xf32>
    %20 = tpu.matmul %18, %19, %cst_15 {dimension_numbers = #tpu.dot_dimension_numbers<[1], [0], [0], [1], [0, 0, 1, 1], [], []>} : vector<136x128xbf16>, vector<128x128xbf16>, vector<136x128xf32> -> vector<136x128xf32>
    %c0_16 = arith.constant 0 : index
    %c0_17 = arith.constant 0 : index
    %21 = vector.load %arg7[%c0_16, %c0_17] : memref<136x128xf32, #tpu.memory_space<vmem>>, vector<136x128xf32>
    tpu.vector_store %arg7[%c0_16, %c0_17], %20 {strides = array<i32>} : memref<136x128xf32, #tpu.memory_space<vmem>>, vector<136x128xf32>,
    return
  }
  func.func @transform_0(%arg0: i32) -> (i32, i32) {
    %c0_i32 = arith.constant 0 : i32
    %c0_i32_0 = arith.constant 0 : i32
    return %arg0, %c0_i32 : i32, i32
  }
  func.func @transform_1(%arg0: i32) -> (i32, i32) {
    %c0_i32 = arith.constant 0 : i32
    %c0_i32_0 = arith.constant 0 : i32
    %c0_i32_1 = arith.constant 0 : i32
    return %c0_i32, %c0_i32_0 : i32, i32
  }
  func.func @transform_2(%arg0: i32) -> (i32, i32) {
    %c0_i32 = arith.constant 0 : i32
    %c0_i32_0 = arith.constant 0 : i32
    %c0_i32_1 = arith.constant 0 : i32
    return %c0_i32, %c0_i32_0 : i32, i32
  }
  func.func @transform_3(%arg0: i32) -> (i32, i32) {
    %c0_i32 = arith.constant 0 : i32
    %c0_i32_0 = arith.constant 0 : i32
    %c0_i32_1 = arith.constant 0 : i32
    return %c0_i32, %c0_i32_0 : i32, i32
  }
  func.func @transform_4(%arg0: i32) -> (i32, i32) {
    %c0_i32 = arith.constant 0 : i32
    %c0_i32_0 = arith.constant 0 : i32
    %c0_i32_1 = arith.constant 0 : i32
    return %c0_i32, %c0_i32_0 : i32, i32
  }
  func.func @transform_5(%arg0: i32) -> (i32, i32) {
    %c0_i32 = arith.constant 0 : i32
    %c0_i32_0 = arith.constant 0 : i32
    %c0_i32_1 = arith.constant 0 : i32
    return %c0_i32, %c0_i32_0 : i32, i32
  }
  func.func @transform_6(%arg0: i32) -> (i32, i32) {
    %c0_i32 = arith.constant 0 : i32
    %c0_i32_0 = arith.constant 0 : i32
    return %arg0, %c0_i32 : i32, i32
  }
}

</mosaic_0001>

<llo_original>
// kernel: _lambda_.14
$region0: #{_lambda_.14}
  #allocation0 [shape = 'u32[]', space=smem, size = 0x4, offset = 0x4, fixed_abs, tag = 'smem constant byte address 0x4 - core index']
  #allocation1 [shape = 'u32[144,128]{1,0:T(1,128)}', space=vmem, size = 0x12000, scoped, tag = 'internal scratch']
  %s0 = inlined_call_operand.vmem [shape: f32[8,256], index: 0, kind: input, shape index: {}, may-alias: {0,1}]
  %s1 = inlined_call_operand.vmem [shape: f32[8,256], index: 1, kind: input, shape index: {}, may-alias: {0,1}]
  %s2 = inlined_call_operand.vmem [shape: f32[128,128], index: 2, kind: input, shape index: {}]
  %s3 = inlined_call_operand.vmem [shape: f32[128,128], index: 3, kind: input, shape index: {}]
  %s4 = inlined_call_operand.vmem [shape: f32[8,128], index: 4, kind: output, shape index: {}]
  %s5 = sld [smem:[#allocation0]]
  $region26: #{_lambda_.14} parent=0
    _
  %s7 = ssub.s32 1, %s5
  %s8 = scalar_select 0, %s7, %s5
  // Predicated region
  $region2: #{_lambda_.14} parent=0 // pred_check
    _
  $region3: #{_lambda_.14} parent=0 // pred_check_branch
    %10 = sbr.rel (0) target = $region5
  $region4: #{_lambda_.14} parent=0 // pred_region
    _
  $region5: #{_lambda_.14} parent=0 // pred_fallthru
    _
  // Predicated region
  $region6: #{_lambda_.14} parent=0 // pred_check
    _
  $region7: #{_lambda_.14} parent=0 // pred_check_branch
    %12 = sbr.rel (0) target = $region9
  $region8: #{_lambda_.14} parent=0 // pred_region
    %s13 = sadd.s32 0, 1
    %p14 = scmp.lt.s32.totalorder %s13, 1
    %s15 = scalar_select %p14, %s13, 1
    %s16 = smul.addr %s15, 8
    %s17 = scalar_lea.vmem %s1, %s16
    %s18 = sadd.s32 0, 1
  $region9: #{_lambda_.14} parent=0 // pred_fallthru
    _
  // Predicated region
  $region10: #{_lambda_.14} parent=0 // pred_check
    _
  $region11: #{_lambda_.14} parent=0 // pred_check_branch
    %20 = sbr.rel (0) target = $region13
  $region12: #{_lambda_.14} parent=0 // pred_region
    _
  $region13: #{_lambda_.14} parent=0 // pred_fallthru
    _
  // Predicated region
  $region14: #{_lambda_.14} parent=0 // pred_check
    _
  $region15: #{_lambda_.14} parent=0 // pred_check_branch
    %22 = sbr.rel (0) target = $region17
  $region16: #{_lambda_.14} parent=0 // pred_region
    _
  $region17: #{_lambda_.14} parent=0 // pred_fallthru
    _
  %s23 = sadd.s32 0, 1
  %p24 = scmp.lt.s32.totalorder %s23, 1
  %s25 = scalar_select %p24, %s23, 1
  %s26 = smul.addr %s25, 8
  %s27 = scalar_lea.vmem %s1, %s26
  %s28 = sadd.s32 0, 1
  %p29 = scmp.lt.s32.totalorder %s28, 1
  %s30 = scalar_select %p29, %s28, 1
  %s31 = smul.addr %s30, 8
  %s32 = scalar_lea.vmem %s1, %s31
  %s33 = sadd.s32 0, 1
  %v34 = vld [vmem:[%s0] sm:$0xff]
  %v35 = vld [vmem:[%s2] sm:$0xff]
  %v36 = vld [vmem:[%s2 + $0x8] sm:$0xff]
  %v37 = vld [vmem:[%s2 + $0x10] sm:$0xff]
  %v38 = vld [vmem:[%s2 + $0x18] sm:$0xff]
  %v39 = vld [vmem:[%s2 + $0x20] sm:$0xff]
  %v40 = vld [vmem:[%s2 + $0x28] sm:$0xff]
  %v41 = vld [vmem:[%s2 + $0x30] sm:$0xff]
  %v42 = vld [vmem:[%s2 + $0x38] sm:$0xff]
  %v43 = vld [vmem:[%s2 + $0x40] sm:$0xff]
  %v44 = vld [vmem:[%s2 + $0x48] sm:$0xff]
  %v45 = vld [vmem:[%s2 + $0x50] sm:$0xff]
  %v46 = vld [vmem:[%s2 + $0x58] sm:$0xff]
  %v47 = vld [vmem:[%s2 + $0x60] sm:$0xff]
  %v48 = vld [vmem:[%s2 + $0x68] sm:$0xff]
  %v49 = vld [vmem:[%s2 + $0x70] sm:$0xff]
  %v50 = vld [vmem:[%s2 + $0x78] sm:$0xff]
  %v51 = vld [vmem:[%s32] sm:$0xff]
  %v52 = vld [vmem:[%s3] sm:$0xff]
  %v53 = vld [vmem:[%s3 + $0x8] sm:$0xff]
  %v54 = vld [vmem:[%s3 + $0x10] sm:$0xff]
  %v55 = vld [vmem:[%s3 + $0x18] sm:$0xff]
  %v56 = vld [vmem:[%s3 + $0x20] sm:$0xff]
  %v57 = vld [vmem:[%s3 + $0x28] sm:$0xff]
  %v58 = vld [vmem:[%s3 + $0x30] sm:$0xff]
  %v59 = vld [vmem:[%s3 + $0x38] sm:$0xff]
  %v60 = vld [vmem:[%s3 + $0x40] sm:$0xff]
  %v61 = vld [vmem:[%s3 + $0x48] sm:$0xff]
  %v62 = vld [vmem:[%s3 + $0x50] sm:$0xff]
  %v63 = vld [vmem:[%s3 + $0x58] sm:$0xff]
  %v64 = vld [vmem:[%s3 + $0x60] sm:$0xff]
  %v65 = vld [vmem:[%s3 + $0x68] sm:$0xff]
  %v66 = vld [vmem:[%s3 + $0x70] sm:$0xff]
  %v67 = vld [vmem:[%s3 + $0x78] sm:$0xff]
  %68 = vmatprep.subr.mxu0 0.0
  %69 = vmatpush1.msra.mxu0 %v52
  %70 = vmatprep.subr.mxu0 0.0
  %71 = vmatpush1.msra.mxu0 %v53
  %72 = vmatprep.subr.mxu0 0.0
  %73 = vmatpush1.msra.mxu0 %v54
  %74 = vmatprep.subr.mxu0 0.0
  %75 = vmatpush1.msra.mxu0 %v55
  %76 = vmatprep.subr.mxu0 0.0
  %77 = vmatpush1.msra.mxu0 %v56
  %78 = vmatprep.subr.mxu0 0.0
  %79 = vmatpush1.msra.mxu0 %v57
  %80 = vmatprep.subr.mxu0 0.0
  %81 = vmatpush1.msra.mxu0 %v58
  %82 = vmatprep.subr.mxu0 0.0
  %83 = vmatpush1.msra.mxu0 %v59
  %84 = vmatprep.subr.mxu0 0.0
  %85 = vmatpush1.msra.mxu0 %v60
  %86 = vmatprep.subr.mxu0 0.0
  %87 = vmatpush1.msra.mxu0 %v61
  %88 = vmatprep.subr.mxu0 0.0
  %89 = vmatpush1.msra.mxu0 %v62
  %90 = vmatprep.subr.mxu0 0.0
  %91 = vmatpush1.msra.mxu0 %v63
  %92 = vmatprep.subr.mxu0 0.0
  %93 = vmatpush1.msra.mxu0 %v64
  %94 = vmatprep.subr.mxu0 0.0
  %95 = vmatpush1.msra.mxu0 %v65
  %96 = vmatprep.subr.mxu0 0.0
  %97 = vmatpush1.msra.mxu0 %v66
  %98 = vmatprep.subr.mxu0 0.0
  %99 = vmatpush1.msra.mxu0 %v67
  %100 = vmatprep.subr.mxu0 0.0
  %101 = vmatpush1.msra.mxu0 0.0
  %102 = vmatprep.subr.mxu0 0.0
  %103 = vmatpush1.msra.mxu0 0.0
  %104 = vmatprep.subr.mxu0 0.0
  %105 = vmatpush1.msra.mxu0 0.0
  %106 = vmatprep.subr.mxu0 0.0
  %107 = vmatpush1.msra.mxu0 0.0
  %108 = vmatprep.subr.mxu0 0.0
  %109 = vmatpush1.msra.mxu0 0.0
  %110 = vmatprep.subr.mxu0 0.0
  %111 = vmatpush1.msra.mxu0 0.0
  %112 = vmatprep.subr.mxu0 0.0
  %113 = vmatpush1.msra.mxu0 0.0
  %114 = vmatprep.subr.mxu0 0.0
  %115 = vmatpush1.msra.mxu0 0.0
  %116 = vmatprep.subr.mxu0 0.0
  %117 = vmatpush1.msra.mxu0 0.0
  %118 = vmatprep.subr.mxu0 0.0
  %119 = vmatpush1.msra.mxu0 0.0
  %120 = vmatprep.subr.mxu0 0.0
  %121 = vmatpush1.msra.mxu0 0.0
  %122 = vmatprep.subr.mxu0 0.0
  %123 = vmatpush1.msra.mxu0 0.0
  %124 = vmatprep.subr.mxu0 0.0
  %125 = vmatpush1.msra.mxu0 0.0
  %126 = vmatprep.subr.mxu0 0.0
  %127 = vmatpush1.msra.mxu0 0.0
  %128 = vmatprep.subr.mxu0 0.0
  %129 = vmatpush1.msra.mxu0 0.0
  %130 = vmatprep.subr.mxu0 0.0
  %131 = vmatpush1.msra.mxu0 0.0
  %132 = vmatprep.mubr.f32.mxu0 0.0
  %133 = vmatmul.mubr.f32.gmra.mrb[0].mxu0 %v51
  %v134 = vpop.f32.mrb[0].mxu0
  %v135 = vadd.f32 0.0, %v134
  %v136 = vpop.f32.mrb[0].mxu0
  %137 = vdwg.mxu0
  %138 = vmatprep.subr.mxu0 0.0
  %139 = vmatpush1.msra.mxu0 %v35
  %140 = vmatprep.subr.mxu0 0.0
  %141 = vmatpush1.msra.mxu0 %v36
  %142 = vmatprep.subr.mxu0 0.0
  %143 = vmatpush1.msra.mxu0 %v37
  %144 = vmatprep.subr.mxu0 0.0
  %145 = vmatpush1.msra.mxu0 %v38
  %146 = vmatprep.subr.mxu0 0.0
  %147 = vmatpush1.msra.mxu0 %v39
  %148 = vmatprep.subr.mxu0 0.0
  %149 = vmatpush1.msra.mxu0 %v40
  %150 = vmatprep.subr.mxu0 0.0
  %151 = vmatpush1.msra.mxu0 %v41
  %152 = vmatprep.subr.mxu0 0.0
  %153 = vmatpush1.msra.mxu0 %v42
  %154 = vmatprep.subr.mxu0 0.0
  %155 = vmatpush1.msra.mxu0 %v43
  %156 = vmatprep.subr.mxu0 0.0
  %157 = vmatpush1.msra.mxu0 %v44
  %158 = vmatprep.subr.mxu0 0.0
  %159 = vmatpush1.msra.mxu0 %v45
  %160 = vmatprep.subr.mxu0 0.0
  %161 = vmatpush1.msra.mxu0 %v46
  %162 = vmatprep.subr.mxu0 0.0
  %163 = vmatpush1.msra.mxu0 %v47
  %164 = vmatprep.subr.mxu0 0.0
  %165 = vmatpush1.msra.mxu0 %v48
  %166 = vmatprep.subr.mxu0 0.0
  %167 = vmatpush1.msra.mxu0 %v49
  %168 = vmatprep.subr.mxu0 0.0
  %169 = vmatpush1.msra.mxu0 %v50
  %170 = vmatprep.subr.mxu0 0.0
  %171 = vmatpush1.msra.mxu0 0.0
  %172 = vmatprep.subr.mxu0 0.0
  %173 = vmatpush1.msra.mxu0 0.0
  %174 = vmatprep.subr.mxu0 0.0
  %175 = vmatpush1.msra.mxu0 0.0
  %176 = vmatprep.subr.mxu0 0.0
  %177 = vmatpush1.msra.mxu0 0.0
  %178 = vmatprep.subr.mxu0 0.0
  %179 = vmatpush1.msra.mxu0 0.0
  %180 = vmatprep.subr.mxu0 0.0
  %181 = vmatpush1.msra.mxu0 0.0
  %182 = vmatprep.subr.mxu0 0.0
  %183 = vmatpush1.msra.mxu0 0.0
  %184 = vmatprep.subr.mxu0 0.0
  %185 = vmatpush1.msra.mxu0 0.0
  %186 = vmatprep.subr.mxu0 0.0
  %187 = vmatpush1.msra.mxu0 0.0
  %188 = vmatprep.subr.mxu0 0.0
  %189 = vmatpush1.msra.mxu0 0.0
  %190 = vmatprep.subr.mxu0 0.0
  %191 = vmatpush1.msra.mxu0 0.0
  %192 = vmatprep.subr.mxu0 0.0
  %193 = vmatpush1.msra.mxu0 0.0
  %194 = vmatprep.subr.mxu0 0.0
  %195 = vmatpush1.msra.mxu0 0.0
  %196 = vmatprep.subr.mxu0 0.0
  %197 = vmatpush1.msra.mxu0 0.0
  %198 = vmatprep.subr.mxu0 0.0
  %199 = vmatpush1.msra.mxu0 0.0
  %200 = vmatprep.subr.mxu0 0.0
  %201 = vmatpush1.msra.mxu0 0.0
  %202 = vmatprep.mubr.f32.mxu0 0.0
  %203 = vmatmul.mubr.f32.gmra.mrb[0].mxu0 %v34
  %v204 = vpop.f32.mrb[0].mxu0
  %v205 = vadd.f32 %v135, %v204
  %v206 = vpop.f32.mrb[0].mxu0
  %207 = vdwg.mxu0
  %208 = vst [vmem:[%s4] sm:$0xff] %v205
  // Predicated region
  $region18: #{_lambda_.14} parent=0 // pred_check
    _
  $region19: #{_lambda_.14} parent=0 // pred_check_branch
    %210 = sbr.rel (0) target = $region21
  $region20: #{_lambda_.14} parent=0 // pred_region
    _
  $region21: #{_lambda_.14} parent=0 // pred_fallthru
    _
  // Predicated region
  $region22: #{_lambda_.14} parent=0 // pred_check
    _
  $region23: #{_lambda_.14} parent=0 // pred_check_branch
    %212 = sbr.rel (0) target = $region25
  $region24: #{_lambda_.14} parent=0 // pred_region
    _
  $region25: #{_lambda_.14} parent=0 // pred_fallthru
    _

// kernel: _lambda_.15
$region0: #{_lambda_.15}
  #allocation0 [shape = 'u32[]', space=smem, size = 0x4, offset = 0x4, fixed_abs, tag = 'smem constant byte address 0x4 - core index']
  #allocation1 [shape = 'u32[144,128]{1,0:T(1,128)}', space=vmem, size = 0x12000, scoped, tag = 'internal scratch']
  %s0 = inlined_call_operand.vmem [shape: f32[8,384], index: 0, kind: input, shape index: {}, may-alias: {0,1}]
  %s1 = inlined_call_operand.vmem [shape: f32[8,384], index: 1, kind: input, shape index: {}, may-alias: {0,1}]
  %s2 = inlined_call_operand.vmem [shape: f32[128,128], index: 2, kind: input, shape index: {}]
  %s3 = inlined_call_operand.vmem [shape: f32[128,128], index: 3, kind: input, shape index: {}]
  %s4 = inlined_call_operand.vmem [shape: f32[8,256], index: 4, kind: output, shape index: {}]
  %s5 = sld [smem:[#allocation0]]
  $region49: #{_lambda_.15} parent=0
    _
  %s7 = ssub.s32 1, %s5
  %s8 = scalar_select 0, %s7, %s5
  loop: start=0, step=1, limit=4
  $region2: #{_lambda_.15} parent=0 // loop_pre_header
    _
  $region3: #{_lambda_.15} parent=0 // loop_header
    %s10 = sphi 0, %s14
    %p11 = scmp.ge.s32.totalorder %s10, 4
    %s20 = sphi 0, %s22
    %s23 = sphi 0, %s20
    %s24 = sphi 0, %s23
    %s40 = sphi 0, %s24
    %s48 = sphi 0, %s50
    %s51 = sphi 0, %s48
    %s52 = sphi 0, %s51
    %s68 = sphi 0, %s52
    %s72 = sphi 0, %s72
    %s74 = sphi 0, %s72
    %s75 = sphi 0, %s74
    %s89 = sphi 0, %s75
    %s93 = sphi 0, %s93
    %s95 = sphi 0, %s93
    %s96 = sphi 0, %s95
    %s110 = sphi 0, %s96
    %s116 = sphi 0, %s118
    %s119 = sphi 0, %s116
    %s120 = sphi 0, %s119
    %s136 = sphi 0, %s120
  $region4: #{_lambda_.15} parent=0 // loop_header_branch
    %13 = sbr.rel (%p11) target = $region8
  $region5: #{_lambda_.15} parent=0 // loop_body
    %s15 = ssub.s32 %s10, 1
    %s16 = ssub.s32 %s10, 2
    %s17 = sadd.s32 %s10, 1
    %s18 = ssub.s32 %s10, %s17
    %p19 = scmp.eq.s32.totalorder %s18, 0
    %s21 = sadd.s32 %s20, 1
    %s22 = scalar_select %p19, %s20, %s21
    %p25 = pneg %p19
    %p26 = scmp.eq.s32.totalorder %s10, 1
    %p27 = por %p25, %p26
    %p28 = scmp.ne.s32.totalorder %s20, %s23
    %p29 = scmp.eq.s32.totalorder %s10, 0
    %p30 = por %p28, %p29
    %p31 = scmp.ne.s32.totalorder %s20, %s23
    %p32 = scmp.eq.s32.totalorder %s15, 1
    %p33 = por %p31, %p32
    %p34 = scmp.ne.s32.totalorder %s23, %s24
    %p35 = scmp.eq.s32.totalorder %s15, 0
    %p36 = por %p34, %p35
    %p37 = scmp.ne.s32.totalorder %s23, %s24
    %p38 = scmp.eq.s32.totalorder %s16, 1
    %p39 = por %p37, %p38
    %p41 = scmp.ne.s32.totalorder %s24, %s40
    %p42 = scmp.eq.s32.totalorder %s16, 0
    %p43 = por %p41, %p42
    %s44 = sadd.s32 %s10, 1
    %s45 = sadd.s32 %s17, 1
    %s46 = ssub.s32 %s44, %s45
    %p47 = scmp.eq.s32.totalorder %s46, 0
    %s49 = sadd.s32 %s48, 1
    %s50 = scalar_select %p47, %s48, %s49
    %p53 = pneg %p47
    %p54 = scmp.eq.s32.totalorder %s10, 1
    %p55 = por %p53, %p54
    %p56 = scmp.ne.s32.totalorder %s48, %s51
    %p57 = scmp.eq.s32.totalorder %s10, 0
    %p58 = por %p56, %p57
    %p59 = scmp.ne.s32.totalorder %s48, %s51
    %p60 = scmp.eq.s32.totalorder %s15, 1
    %p61 = por %p59, %p60
    %p62 = scmp.ne.s32.totalorder %s51, %s52
    %p63 = scmp.eq.s32.totalorder %s15, 0
    %p64 = por %p62, %p63
    %p65 = scmp.ne.s32.totalorder %s51, %s52
    %p66 = scmp.eq.s32.totalorder %s16, 1
    %p67 = por %p65, %p66
    %p69 = scmp.ne.s32.totalorder %s52, %s68
    %p70 = scmp.eq.s32.totalorder %s16, 0
    %p71 = por %p69, %p70
    %s73 = sadd.s32 %s72, 1
    %p76 = scmp.eq.s32.totalorder %s10, 1
    %p77 = scmp.ne.s32.totalorder %s72, %s74
    %p78 = scmp.eq.s32.totalorder %s10, 0
    %p79 = por %p77, %p78
    %p80 = scmp.ne.s32.totalorder %s72, %s74
    %p81 = scmp.eq.s32.totalorder %s15, 1
    %p82 = por %p80, %p81
    %p83 = scmp.ne.s32.totalorder %s74, %s75
    %p84 = scmp.eq.s32.totalorder %s15, 0
    %p85 = por %p83, %p84
    %p86 = scmp.ne.s32.totalorder %s74, %s75
    %p87 = scmp.eq.s32.totalorder %s16, 1
    %p88 = por %p86, %p87
    %p90 = scmp.ne.s32.totalorder %s75, %s89
    %p91 = scmp.eq.s32.totalorder %s16, 0
    %p92 = por %p90, %p91
    %s94 = sadd.s32 %s93, 1
    %p97 = scmp.eq.s32.totalorder %s10, 1
    %p98 = scmp.ne.s32.totalorder %s93, %s95
    %p99 = scmp.eq.s32.totalorder %s10, 0
    %p100 = por %p98, %p99
    %p101 = scmp.ne.s32.totalorder %s93, %s95
    %p102 = scmp.eq.s32.totalorder %s15, 1
    %p103 = por %p101, %p102
    %p104 = scmp.ne.s32.totalorder %s95, %s96
    %p105 = scmp.eq.s32.totalorder %s15, 0
    %p106 = por %p104, %p105
    %p107 = scmp.ne.s32.totalorder %s95, %s96
    %p108 = scmp.eq.s32.totalorder %s16, 1
    %p109 = por %p107, %p108
    %p111 = scmp.ne.s32.totalorder %s96, %s110
    %p112 = scmp.eq.s32.totalorder %s16, 0
    %p113 = por %p111, %p112
    %s114 = ssub.s32 %s10, %s17
    %p115 = scmp.eq.s32.totalorder %s114, 0
    %s117 = sadd.s32 %s116, 1
    %s118 = scalar_select %p115, %s116, %s117
    %p121 = pneg %p115
    %p122 = scmp.eq.s32.totalorder %s10, 1
    %p123 = por %p121, %p122
    %p124 = scmp.ne.s32.totalorder %s116, %s119
    %p125 = scmp.eq.s32.totalorder %s10, 0
    %p126 = por %p124, %p125
    %p127 = scmp.ne.s32.totalorder %s116, %s119
    %p128 = scmp.eq.s32.totalorder %s15, 1
    %p129 = por %p127, %p128
    %p130 = scmp.ne.s32.totalorder %s119, %s120
    %p131 = scmp.eq.s32.totalorder %s15, 0
    %p132 = por %p130, %p131
    %p133 = scmp.ne.s32.totalorder %s119, %s120
    %p134 = scmp.eq.s32.totalorder %s16, 1
    %p135 = por %p133, %p134
    %p137 = scmp.ne.s32.totalorder %s120, %s136
    %p138 = scmp.eq.s32.totalorder %s16, 0
    %p139 = por %p137, %p138
    %p140 = scmp.le.s32.totalorder 1, %s10
    %p141 = scmp.lt.s32.totalorder %s10, 3
    %p142 = pnand %p140, %p141
    %p143 = pneg %p142
    // Predicated region
    $region9: #{_lambda_.15} parent=5 // pred_check
      _
    $region10: #{_lambda_.15} parent=5 // pred_check_branch
      %145 = sbr.rel (%p142) target = $region12
    $region11: #{_lambda_.15} parent=5 // pred_region
      %s146 = ssub.s32 %s10, 1
      // Predicated region
      $region13: #{_lambda_.15} parent=11 // pred_check
        %p147 = pneg %p85
      $region14: #{_lambda_.15} parent=11 // pred_check_branch
        %149 = sbr.rel (%p147) target = $region16
      $region15: #{_lambda_.15} parent=11 // pred_region
        _
      $region16: #{_lambda_.15} parent=11 // pred_fallthru
        _
      // Predicated region
      $region17: #{_lambda_.15} parent=11 // pred_check
        %p150 = pneg %p106
      $region18: #{_lambda_.15} parent=11 // pred_check_branch
        %152 = sbr.rel (%p150) target = $region20
      $region19: #{_lambda_.15} parent=11 // pred_region
        _
      $region20: #{_lambda_.15} parent=11 // pred_fallthru
        _
    $region12: #{_lambda_.15} parent=5 // pred_fallthru
      _
    %p153 = scmp.lt.s32.totalorder %s10, 2
    // Predicated region
    $region21: #{_lambda_.15} parent=5 // pred_check
      %p154 = pneg %p153
    $region22: #{_lambda_.15} parent=5 // pred_check_branch
      %156 = sbr.rel (%p154) target = $region24
    $region23: #{_lambda_.15} parent=5 // pred_region
      // Predicated region
      $region25: #{_lambda_.15} parent=23 // pred_check
        %p157 = pneg %p30
      $region26: #{_lambda_.15} parent=23 // pred_check_branch
        %159 = sbr.rel (%p157) target = $region28
      $region27: #{_lambda_.15} parent=23 // pred_region
        %p160 = scmp.lt.s32.totalorder %s10, 2
        %s161 = scalar_select %p160, %s10, 2
        %s162 = smul.addr %s161, 8
        %s163 = scalar_lea.vmem %s0, %s162
      $region28: #{_lambda_.15} parent=23 // pred_fallthru
        _
      // Predicated region
      $region29: #{_lambda_.15} parent=23 // pred_check
        %p164 = pneg %p58
      $region30: #{_lambda_.15} parent=23 // pred_check_branch
        %166 = sbr.rel (%p164) target = $region32
      $region31: #{_lambda_.15} parent=23 // pred_region
        %s167 = sadd.s32 %s10, 1
        %p168 = scmp.lt.s32.totalorder %s167, 2
        %s169 = scalar_select %p168, %s167, 2
        %s170 = smul.addr %s169, 8
        %s171 = scalar_lea.vmem %s1, %s170
        %s172 = sadd.s32 %s10, 1
      $region32: #{_lambda_.15} parent=23 // pred_fallthru
        _
    $region24: #{_lambda_.15} parent=5 // pred_fallthru
      _
    %p173 = scmp.le.s32.totalorder 1, %s10
    %p174 = scmp.lt.s32.totalorder %s10, 3
    %p175 = pnand %p173, %p174
    %p176 = pneg %p175
    // Predicated region
    $region33: #{_lambda_.15} parent=5 // pred_check
      _
    $region34: #{_lambda_.15} parent=5 // pred_check_branch
      %178 = sbr.rel (%p175) target = $region36
    $region35: #{_lambda_.15} parent=5 // pred_region
      %s179 = ssub.s32 %s10, 1
      %p180 = scmp.lt.s32.totalorder %s15, 2
      %s181 = scalar_select %p180, %s15, 2
      %s182 = smul.addr %s181, 8
      %s183 = scalar_lea.vmem %s0, %s182
      %p184 = pneg %p36
      %p185 = pneg %p33
      %s186 = sadd.s32 %s15, 1
      %p187 = scmp.lt.s32.totalorder %s186, 2
      %s188 = scalar_select %p187, %s186, 2
      %s189 = smul.addr %s188, 8
      %s190 = scalar_lea.vmem %s1, %s189
      %p191 = pneg %p64
      %p192 = pneg %p61
      %p193 = pneg %p85
      %p194 = pneg %p82
      %p195 = pneg %p106
      %p196 = pneg %p103
      %p197 = pneg %p132
      %p198 = pneg %p129
      %p199 = scmp.lt.s32.totalorder %s15, 1
      %s200 = scalar_select %p199, %s15, 1
      %s201 = smul.addr %s200, 8
      %s202 = scalar_lea.vmem %s4, %s201
      %p203 = scmp.lt.s32.totalorder %s15, 2
      %s204 = scalar_select %p203, %s15, 2
      %s205 = smul.addr %s204, 8
      %s206 = scalar_lea.vmem %s0, %s205
      %s207 = sadd.s32 %s15, 1
      %p208 = scmp.lt.s32.totalorder %s207, 2
      %s209 = scalar_select %p208, %s207, 2
      %s210 = smul.addr %s209, 8
      %s211 = scalar_lea.vmem %s1, %s210
      %s212 = sadd.s32 %s15, 1
      %p213 = scmp.lt.s32.totalorder %s15, 1
      %s214 = scalar_select %p213, %s15, 1
      %s215 = smul.addr %s214, 8
      %s216 = scalar_lea.vmem %s4, %s215
      %v217 = vld [vmem:[%s206] sm:$0xff]
      %v218 = vld [vmem:[%s2] sm:$0xff]
      %v219 = vld [vmem:[%s2 + $0x8] sm:$0xff]
      %v220 = vld [vmem:[%s2 + $0x10] sm:$0xff]
      %v221 = vld [vmem:[%s2 + $0x18] sm:$0xff]
      %v222 = vld [vmem:[%s2 + $0x20] sm:$0xff]
      %v223 = vld [vmem:[%s2 + $0x28] sm:$0xff]
      %v224 = vld [vmem:[%s2 + $0x30] sm:$0xff]
      %v225 = vld [vmem:[%s2 + $0x38] sm:$0xff]
      %v226 = vld [vmem:[%s2 + $0x40] sm:$0xff]
      %v227 = vld [vmem:[%s2 + $0x48] sm:$0xff]
      %v228 = vld [vmem:[%s2 + $0x50] sm:$0xff]
      %v229 = vld [vmem:[%s2 + $0x58] sm:$0xff]
      %v230 = vld [vmem:[%s2 + $0x60] sm:$0xff]
      %v231 = vld [vmem:[%s2 + $0x68] sm:$0xff]
      %v232 = vld [vmem:[%s2 + $0x70] sm:$0xff]
      %v233 = vld [vmem:[%s2 + $0x78] sm:$0xff]
      %v234 = vld [vmem:[%s211] sm:$0xff]
      %v235 = vld [vmem:[%s3] sm:$0xff]
      %v236 = vld [vmem:[%s3 + $0x8] sm:$0xff]
      %v237 = vld [vmem:[%s3 + $0x10] sm:$0xff]
      %v238 = vld [vmem:[%s3 + $0x18] sm:$0xff]
      %v239 = vld [vmem:[%s3 + $0x20] sm:$0xff]
      %v240 = vld [vmem:[%s3 + $0x28] sm:$0xff]
      %v241 = vld [vmem:[%s3 + $0x30] sm:$0xff]
      %v242 = vld [vmem:[%s3 + $0x38] sm:$0xff]
      %v243 = vld [vmem:[%s3 + $0x40] sm:$0xff]
      %v244 = vld [vmem:[%s3 + $0x48] sm:$0xff]
      %v245 = vld [vmem:[%s3 + $0x50] sm:$0xff]
      %v246 = vld [vmem:[%s3 + $0x58] sm:$0xff]
      %v247 = vld [vmem:[%s3 + $0x60] sm:$0xff]
      %v248 = vld [vmem:[%s3 + $0x68] sm:$0xff]
      %v249 = vld [vmem:[%s3 + $0x70] sm:$0xff]
      %v250 = vld [vmem:[%s3 + $0x78] sm:$0xff]
      %251 = vmatprep.subr.mxu0 0.0
      %252 = vmatpush1.msra.mxu0 %v235
      %253 = vmatprep.subr.mxu0 0.0
      %254 = vmatpush1.msra.mxu0 %v236
      %255 = vmatprep.subr.mxu0 0.0
      %256 = vmatpush1.msra.mxu0 %v237
      %257 = vmatprep.subr.mxu0 0.0
      %258 = vmatpush1.msra.mxu0 %v238
      %259 = vmatprep.subr.mxu0 0.0
      %260 = vmatpush1.msra.mxu0 %v239
      %261 = vmatprep.subr.mxu0 0.0
      %262 = vmatpush1.msra.mxu0 %v240
      %263 = vmatprep.subr.mxu0 0.0
      %264 = vmatpush1.msra.mxu0 %v241
      %265 = vmatprep.subr.mxu0 0.0
      %266 = vmatpush1.msra.mxu0 %v242
      %267 = vmatprep.subr.mxu0 0.0
      %268 = vmatpush1.msra.mxu0 %v243
      %269 = vmatprep.subr.mxu0 0.0
      %270 = vmatpush1.msra.mxu0 %v244
      %271 = vmatprep.subr.mxu0 0.0
      %272 = vmatpush1.msra.mxu0 %v245
      %273 = vmatprep.subr.mxu0 0.0
      %274 = vmatpush1.msra.mxu0 %v246
      %275 = vmatprep.subr.mxu0 0.0
      %276 = vmatpush1.msra.mxu0 %v247
      %277 = vmatprep.subr.mxu0 0.0
      %278 = vmatpush1.msra.mxu0 %v248
      %279 = vmatprep.subr.mxu0 0.0
      %280 = vmatpush1.msra.mxu0 %v249
      %281 = vmatprep.subr.mxu0 0.0
      %282 = vmatpush1.msra.mxu0 %v250
      %283 = vmatprep.subr.mxu0 0.0
      %284 = vmatpush1.msra.mxu0 0.0
      %285 = vmatprep.subr.mxu0 0.0
      %286 = vmatpush1.msra.mxu0 0.0
      %287 = vmatprep.subr.mxu0 0.0
      %288 = vmatpush1.msra.mxu0 0.0
      %289 = vmatprep.subr.mxu0 0.0
      %290 = vmatpush1.msra.mxu0 0.0
      %291 = vmatprep.subr.mxu0 0.0
      %292 = vmatpush1.msra.mxu0 0.0
      %293 = vmatprep.subr.mxu0 0.0
      %294 = vmatpush1.msra.mxu0 0.0
      %295 = vmatprep.subr.mxu0 0.0
      %296 = vmatpush1.msra.mxu0 0.0
      %297 = vmatprep.subr.mxu0 0.0
      %298 = vmatpush1.msra.mxu0 0.0
      %299 = vmatprep.subr.mxu0 0.0
      %300 = vmatpush1.msra.mxu0 0.0
      %301 = vmatprep.subr.mxu0 0.0
      %302 = vmatpush1.msra.mxu0 0.0
      %303 = vmatprep.subr.mxu0 0.0
      %304 = vmatpush1.msra.mxu0 0.0
      %305 = vmatprep.subr.mxu0 0.0
      %306 = vmatpush1.msra.mxu0 0.0
      %307 = vmatprep.subr.mxu0 0.0
      %308 = vmatpush1.msra.mxu0 0.0
      %309 = vmatprep.subr.mxu0 0.0
      %310 = vmatpush1.msra.mxu0 0.0
      %311 = vmatprep.subr.mxu0 0.0
      %312 = vmatpush1.msra.mxu0 0.0
      %313 = vmatprep.subr.mxu0 0.0
      %314 = vmatpush1.msra.mxu0 0.0
      %315 = vmatprep.mubr.f32.mxu0 0.0
      %316 = vmatmul.mubr.f32.gmra.mrb[0].mxu0 %v234
      %v317 = vpop.f32.mrb[0].mxu0
      %v318 = vadd.f32 0.0, %v317
      %v319 = vpop.f32.mrb[0].mxu0
      %320 = vdwg.mxu0
      %321 = vmatprep.subr.mxu0 0.0
      %322 = vmatpush1.msra.mxu0 %v218
      %323 = vmatprep.subr.mxu0 0.0
      %324 = vmatpush1.msra.mxu0 %v219
      %325 = vmatprep.subr.mxu0 0.0
      %326 = vmatpush1.msra.mxu0 %v220
      %327 = vmatprep.subr.mxu0 0.0
      %328 = vmatpush1.msra.mxu0 %v221
      %329 = vmatprep.subr.mxu0 0.0
      %330 = vmatpush1.msra.mxu0 %v222
      %331 = vmatprep.subr.mxu0 0.0
      %332 = vmatpush1.msra.mxu0 %v223
      %333 = vmatprep.subr.mxu0 0.0
      %334 = vmatpush1.msra.mxu0 %v224
      %335 = vmatprep.subr.mxu0 0.0
      %336 = vmatpush1.msra.mxu0 %v225
      %337 = vmatprep.subr.mxu0 0.0
      %338 = vmatpush1.msra.mxu0 %v226
      %339 = vmatprep.subr.mxu0 0.0
      %340 = vmatpush1.msra.mxu0 %v227
      %341 = vmatprep.subr.mxu0 0.0
      %342 = vmatpush1.msra.mxu0 %v228
      %343 = vmatprep.subr.mxu0 0.0
      %344 = vmatpush1.msra.mxu0 %v229
      %345 = vmatprep.subr.mxu0 0.0
      %346 = vmatpush1.msra.mxu0 %v230
      %347 = vmatprep.subr.mxu0 0.0
      %348 = vmatpush1.msra.mxu0 %v231
      %349 = vmatprep.subr.mxu0 0.0
      %350 = vmatpush1.msra.mxu0 %v232
      %351 = vmatprep.subr.mxu0 0.0
      %352 = vmatpush1.msra.mxu0 %v233
      %353 = vmatprep.subr.mxu0 0.0
      %354 = vmatpush1.msra.mxu0 0.0
      %355 = vmatprep.subr.mxu0 0.0
      %356 = vmatpush1.msra.mxu0 0.0
      %357 = vmatprep.subr.mxu0 0.0
      %358 = vmatpush1.msra.mxu0 0.0
      %359 = vmatprep.subr.mxu0 0.0
      %360 = vmatpush1.msra.mxu0 0.0
      %361 = vmatprep.subr.mxu0 0.0
      %362 = vmatpush1.msra.mxu0 0.0
      %363 = vmatprep.subr.mxu0 0.0
      %364 = vmatpush1.msra.mxu0 0.0
      %365 = vmatprep.subr.mxu0 0.0
      %366 = vmatpush1.msra.mxu0 0.0
      %367 = vmatprep.subr.mxu0 0.0
      %368 = vmatpush1.msra.mxu0 0.0
      %369 = vmatprep.subr.mxu0 0.0
      %370 = vmatpush1.msra.mxu0 0.0
      %371 = vmatprep.subr.mxu0 0.0
      %372 = vmatpush1.msra.mxu0 0.0
      %373 = vmatprep.subr.mxu0 0.0
      %374 = vmatpush1.msra.mxu0 0.0
      %375 = vmatprep.subr.mxu0 0.0
      %376 = vmatpush1.msra.mxu0 0.0
      %377 = vmatprep.subr.mxu0 0.0
      %378 = vmatpush1.msra.mxu0 0.0
      %379 = vmatprep.subr.mxu0 0.0
      %380 = vmatpush1.msra.mxu0 0.0
      %381 = vmatprep.subr.mxu0 0.0
      %382 = vmatpush1.msra.mxu0 0.0
      %383 = vmatprep.subr.mxu0 0.0
      %384 = vmatpush1.msra.mxu0 0.0
      %385 = vmatprep.mubr.f32.mxu0 0.0
      %386 = vmatmul.mubr.f32.gmra.mrb[0].mxu0 %v217
      %v387 = vpop.f32.mrb[0].mxu0
      %v388 = vadd.f32 %v318, %v387
      %v389 = vpop.f32.mrb[0].mxu0
      %390 = vdwg.mxu0
      %391 = vst [vmem:[%s216] sm:$0xff] %v388
      %p392 = scmp.lt.s32.totalorder %s15, 1
      %s393 = scalar_select %p392, %s15, 1
      %s394 = smul.addr %s393, 8
      %s395 = scalar_lea.vmem %s4, %s394
      // Predicated region
      $region37: #{_lambda_.15} parent=35 // pred_check
        %p396 = pneg %p129
      $region38: #{_lambda_.15} parent=35 // pred_check_branch
        %398 = sbr.rel (%p396) target = $region40
      $region39: #{_lambda_.15} parent=35 // pred_region
        _
      $region40: #{_lambda_.15} parent=35 // pred_fallthru
        _
    $region36: #{_lambda_.15} parent=5 // pred_fallthru
      _
    %p399 = scmp.le.s32.totalorder 2, %s10
    // Predicated region
    $region41: #{_lambda_.15} parent=5 // pred_check
      %p400 = pneg %p399
    $region42: #{_lambda_.15} parent=5 // pred_check_branch
      %402 = sbr.rel (%p400) target = $region44
    $region43: #{_lambda_.15} parent=5 // pred_region
      %s403 = ssub.s32 %s10, 2
      // Predicated region
      $region45: #{_lambda_.15} parent=43 // pred_check
        %p404 = pneg %p135
      $region46: #{_lambda_.15} parent=43 // pred_check_branch
        %406 = sbr.rel (%p404) target = $region48
      $region47: #{_lambda_.15} parent=43 // pred_region
        %p407 = scmp.lt.s32.totalorder %s16, 1
        %s408 = scalar_select %p407, %s16, 1
        %s409 = smul.addr %s408, 8
        %s410 = scalar_lea.vmem %s4, %s409
      $region48: #{_lambda_.15} parent=43 // pred_fallthru
        _
    $region44: #{_lambda_.15} parent=5 // pred_fallthru
      _
  $region6: #{_lambda_.15} parent=0 // loop_footer
    %s14 = sadd.s32 1, %s10
  $region7: #{_lambda_.15} parent=0 // loop_footer_branch
    %9 = sbr.rel target = $region3
  $region8: #{_lambda_.15} parent=0 // loop_exit
    _

// kernel: _lambda_.16
$region0: #{_lambda_.16}
  #allocation0 [shape = 'u32[]', space=smem, size = 0x4, offset = 0x4, fixed_abs, tag = 'smem constant byte address 0x4 - core index']
  #allocation1 [shape = 'u32[144,128]{1,0:T(1,128)}', space=vmem, size = 0x12000, scoped, tag = 'internal scratch']
  %s0 = inlined_call_operand.vmem [shape: bf16[136,8], index: 0, kind: input, shape index: {}]
  %s1 = inlined_call_operand.vmem [shape: bf16[8,128], index: 1, kind: input, shape index: {}]
  %s2 = inlined_call_operand.vmem [shape: f32[1,128], index: 2, kind: input, shape index: {}]
  %s3 = inlined_call_operand.vmem [shape: bf16[128,128], index: 3, kind: input, shape index: {}]
  %s4 = inlined_call_operand.vmem [shape: f32[1,128], index: 4, kind: input, shape index: {}]
  %s5 = inlined_call_operand.vmem [shape: bf16[128,128], index: 5, kind: input, shape index: {}]
  %s6 = inlined_call_operand.vmem [shape: f32[1,128], index: 6, kind: input, shape index: {}]
  %s7 = inlined_call_operand.vmem [shape: f32[136,128], index: 7, kind: output, shape index: {}]
  %s8 = sld [smem:[#allocation0]]
  $region38: #{_lambda_.16} parent=0
    _
  %s10 = ssub.s32 1, %s8
  %s11 = scalar_select 0, %s10, %s8
  // Predicated region
  $region2: #{_lambda_.16} parent=0 // pred_check
    _
  $region3: #{_lambda_.16} parent=0 // pred_check_branch
    %13 = sbr.rel (0) target = $region5
  $region4: #{_lambda_.16} parent=0 // pred_region
    _
  $region5: #{_lambda_.16} parent=0 // pred_fallthru
    _
  // Predicated region
  $region6: #{_lambda_.16} parent=0 // pred_check
    _
  $region7: #{_lambda_.16} parent=0 // pred_check_branch
    %15 = sbr.rel (0) target = $region9
  $region8: #{_lambda_.16} parent=0 // pred_region
    _
  $region9: #{_lambda_.16} parent=0 // pred_fallthru
    _
  // Predicated region
  $region10: #{_lambda_.16} parent=0 // pred_check
    _
  $region11: #{_lambda_.16} parent=0 // pred_check_branch
    %17 = sbr.rel (0) target = $region13
  $region12: #{_lambda_.16} parent=0 // pred_region
    _
  $region13: #{_lambda_.16} parent=0 // pred_fallthru
    _
  // Predicated region
  $region14: #{_lambda_.16} parent=0 // pred_check
    _
  $region15: #{_lambda_.16} parent=0 // pred_check_branch
    %19 = sbr.rel (0) target = $region17
  $region16: #{_lambda_.16} parent=0 // pred_region
    _
  $region17: #{_lambda_.16} parent=0 // pred_fallthru
    _
  // Predicated region
  $region18: #{_lambda_.16} parent=0 // pred_check
    _
  $region19: #{_lambda_.16} parent=0 // pred_check_branch
    %21 = sbr.rel (0) target = $region21
  $region20: #{_lambda_.16} parent=0 // pred_region
    _
  $region21: #{_lambda_.16} parent=0 // pred_fallthru
    _
  // Predicated region
  $region22: #{_lambda_.16} parent=0 // pred_check
    _
  $region23: #{_lambda_.16} parent=0 // pred_check_branch
    %23 = sbr.rel (0) target = $region25
  $region24: #{_lambda_.16} parent=0 // pred_region
    _
  $region25: #{_lambda_.16} parent=0 // pred_fallthru
    _
  // Predicated region
  $region26: #{_lambda_.16} parent=0 // pred_check
    _
  $region27: #{_lambda_.16} parent=0 // pred_check_branch
    %25 = sbr.rel (0) target = $region29
  $region28: #{_lambda_.16} parent=0 // pred_region
    _
  $region29: #{_lambda_.16} parent=0 // pred_fallthru
    _
  %v27 = vld [vmem:[%s0] sm:$0xf]
  %v28 = vld [vmem:[%s0 + $0x4] sm:$0xf]
  %v29 = vld [vmem:[%s0 + $0x8] sm:$0xf]
  %v30 = vld [vmem:[%s0 + $0xc] sm:$0xf]
  %v31 = vld [vmem:[%s0 + $0x10] sm:$0xf]
  %v32 = vld [vmem:[%s0 + $0x14] sm:$0xf]
  %v33 = vld [vmem:[%s0 + $0x18] sm:$0xf]
  %v34 = vld [vmem:[%s0 + $0x1c] sm:$0xf]
  %v35 = vld [vmem:[%s0 + $0x20] sm:$0xf]
  %v36 = vld [vmem:[%s0 + $0x24] sm:$0xf]
  %v37 = vld [vmem:[%s0 + $0x28] sm:$0xf]
  %v38 = vld [vmem:[%s0 + $0x2c] sm:$0xf]
  %v39 = vld [vmem:[%s0 + $0x30] sm:$0xf]
  %v40 = vld [vmem:[%s0 + $0x34] sm:$0xf]
  %v41 = vld [vmem:[%s0 + $0x38] sm:$0xf]
  %v42 = vld [vmem:[%s0 + $0x3c] sm:$0xf]
  %v43 = vld [vmem:[%s0 + $0x40] sm:$0xf]
  %v44 = vld [vmem:[%s1] sm:$0xf]
  %v45 = vld [vmem:[%s2] sm:$0x1]
  %v47 = vlaneseq
  %v48 = vshrl.u32 %v47, 7
  %v49 = vsub.s32 0, %v48
  %v50 = vrot.slane %v45, %v49
  %v69 = vunpack.c.l.b16 %v27
  %v70 = vunpack.c.l.b16 %v28
  %v71 = vunpack.c.l.b16 %v29
  %v72 = vunpack.c.l.b16 %v30
  %v73 = vunpack.c.l.b16 %v31
  %v74 = vunpack.c.l.b16 %v32
  %v75 = vunpack.c.l.b16 %v33
  %v76 = vunpack.c.l.b16 %v34
  %v77 = vunpack.c.l.b16 %v35
  %v78 = vunpack.c.l.b16 %v36
  %v79 = vunpack.c.l.b16 %v37
  %v80 = vunpack.c.l.b16 %v38
  %v81 = vunpack.c.l.b16 %v39
  %v82 = vunpack.c.l.b16 %v40
  %v83 = vunpack.c.l.b16 %v41
  %v84 = vunpack.c.l.b16 %v42
  %v85 = vunpack.c.l.b16 %v43
  %v86 = vpack.c.b16 %v70, %v69
  %v87 = vpack.c.b16 %v72, %v71
  %v88 = vpack.c.b16 %v74, %v73
  %v89 = vpack.c.b16 %v76, %v75
  %v90 = vpack.c.b16 %v78, %v77
  %v91 = vpack.c.b16 %v80, %v79
  %v92 = vpack.c.b16 %v82, %v81
  %v93 = vpack.c.b16 %v84, %v83
  %v94 = vpack.c.b16 %v85, %v85
  %vm95 = vcmask 64512
  %v97 = vsel %vm95, %v86, 0
  %v100 = vsel %vm95, %v87, 0
  %v103 = vsel %vm95, %v88, 0
  %v106 = vsel %vm95, %v89, 0
  %v109 = vsel %vm95, %v90, 0
  %v112 = vsel %vm95, %v91, 0
  %v115 = vsel %vm95, %v92, 0
  %v118 = vsel %vm95, %v93, 0
  %v121 = vsel %vm95, %v94, 0
  %vm123 = vcmask 1043456
  %v125 = vsel %vm123, %v44, 0
  %127 = vmatprep.subr.bf16.mxu0 0
  %128 = vmatpush1.bf16.msra.mxu0 %v125
  %129 = vmatprep.subr.bf16.mxu0 0
  %130 = vmatpush1.bf16.msra.mxu0 0
  %131 = vmatprep.subr.bf16.mxu0 0
  %132 = vmatpush1.bf16.msra.mxu0 0
  %133 = vmatprep.subr.bf16.mxu0 0
  %134 = vmatpush1.bf16.msra.mxu0 0
  %135 = vmatprep.subr.bf16.mxu0 0
  %136 = vmatpush1.bf16.msra.mxu0 0
  %137 = vmatprep.subr.bf16.mxu0 0
  %138 = vmatpush1.bf16.msra.mxu0 0
  %139 = vmatprep.subr.bf16.mxu0 0
  %140 = vmatpush1.bf16.msra.mxu0 0
  %141 = vmatprep.subr.bf16.mxu0 0
  %142 = vmatpush1.bf16.msra.mxu0 0
  %143 = vmatprep.subr.bf16.mxu0 0
  %144 = vmatpush1.bf16.msra.mxu0 0
  %145 = vmatprep.subr.bf16.mxu0 0
  %146 = vmatpush1.bf16.msra.mxu0 0
  %147 = vmatprep.subr.bf16.mxu0 0
  %148 = vmatpush1.bf16.msra.mxu0 0
  %149 = vmatprep.subr.bf16.mxu0 0
  %150 = vmatpush1.bf16.msra.mxu0 0
  %151 = vmatprep.subr.bf16.mxu0 0
  %152 = vmatpush1.bf16.msra.mxu0 0
  %153 = vmatprep.subr.bf16.mxu0 0
  %154 = vmatpush1.bf16.msra.mxu0 0
  %155 = vmatprep.subr.bf16.mxu0 0
  %156 = vmatpush1.bf16.msra.mxu0 0
  %157 = vmatprep.subr.bf16.mxu0 0
  %158 = vmatpush1.bf16.msra.mxu0 0
  %159 = vmatprep.mubr.bf16.mxu0 0
  %160 = vmatmul.mubr.bf16.gmra.mrb[0].mxu0 %v97
  %v161 = vpop.f32.mrb[0].mxu0
  %v162 = vadd.f32 %v50, %v161
  %v163 = vpop.f32.mrb[0].mxu0
  %v164 = vpop.f32.mrb[0].mxu0
  %v165 = vadd.f32 %v50, %v164
  %v166 = vpop.f32.mrb[0].mxu0
  %167 = vmatprep.mubr.bf16.mxu0 0
  %168 = vmatmul.mubr.bf16.gmra.mrb[0].mxu0 %v100
  %v169 = vpop.f32.mrb[0].mxu0
  %v170 = vadd.f32 %v50, %v169
  %v171 = vpop.f32.mrb[0].mxu0
  %v172 = vpop.f32.mrb[0].mxu0
  %v173 = vadd.f32 %v50, %v172
  %v174 = vpop.f32.mrb[0].mxu0
  %175 = vmatprep.mubr.bf16.mxu0 0
  %176 = vmatmul.mubr.bf16.gmra.mrb[0].mxu0 %v103
  %v177 = vpop.f32.mrb[0].mxu0
  %v178 = vadd.f32 %v50, %v177
  %v179 = vpop.f32.mrb[0].mxu0
  %v180 = vpop.f32.mrb[0].mxu0
  %v181 = vadd.f32 %v50, %v180
  %v182 = vpop.f32.mrb[0].mxu0
  %183 = vmatprep.mubr.bf16.mxu0 0
  %184 = vmatmul.mubr.bf16.gmra.mrb[0].mxu0 %v106
  %v185 = vpop.f32.mrb[0].mxu0
  %v186 = vadd.f32 %v50, %v185
  %v187 = vpop.f32.mrb[0].mxu0
  %v188 = vpop.f32.mrb[0].mxu0
  %v189 = vadd.f32 %v50, %v188
  %v190 = vpop.f32.mrb[0].mxu0
  %191 = vmatprep.mubr.bf16.mxu0 0
  %192 = vmatmul.mubr.bf16.gmra.mrb[0].mxu0 %v109
  %v193 = vpop.f32.mrb[0].mxu0
  %v194 = vadd.f32 %v50, %v193
  %v195 = vpop.f32.mrb[0].mxu0
  %v196 = vpop.f32.mrb[0].mxu0
  %v197 = vadd.f32 %v50, %v196
  %v198 = vpop.f32.mrb[0].mxu0
  %199 = vmatprep.mubr.bf16.mxu0 0
  %200 = vmatmul.mubr.bf16.gmra.mrb[0].mxu0 %v112
  %v201 = vpop.f32.mrb[0].mxu0
  %v202 = vadd.f32 %v50, %v201
  %v203 = vpop.f32.mrb[0].mxu0
  %v204 = vpop.f32.mrb[0].mxu0
  %v205 = vadd.f32 %v50, %v204
  %v206 = vpop.f32.mrb[0].mxu0
  %207 = vmatprep.mubr.bf16.mxu0 0
  %208 = vmatmul.mubr.bf16.gmra.mrb[0].mxu0 %v115
  %v209 = vpop.f32.mrb[0].mxu0
  %v210 = vadd.f32 %v50, %v209
  %v211 = vpop.f32.mrb[0].mxu0
  %v212 = vpop.f32.mrb[0].mxu0
  %v213 = vadd.f32 %v50, %v212
  %v214 = vpop.f32.mrb[0].mxu0
  %215 = vmatprep.mubr.bf16.mxu0 0
  %216 = vmatmul.mubr.bf16.gmra.mrb[0].mxu0 %v118
  %v217 = vpop.f32.mrb[0].mxu0
  %v218 = vadd.f32 %v50, %v217
  %v219 = vpop.f32.mrb[0].mxu0
  %v220 = vpop.f32.mrb[0].mxu0
  %v221 = vadd.f32 %v50, %v220
  %v222 = vpop.f32.mrb[0].mxu0
  %223 = vmatprep.mubr.bf16.mxu0 0
  %224 = vmatmul.mubr.bf16.gmra.mrb[0].mxu0 %v121
  %v225 = vpop.f32.mrb[0].mxu0
  %v226 = vadd.f32 %v50, %v225
  %v227 = vpop.f32.mrb[0].mxu0
  %v228 = vpop.f32.mrb[0].mxu0
  %v229 = vpop.f32.mrb[0].mxu0
  %230 = vdwg.mxu0
  %v231 = vmax.f32 %v162, 0.0
  %v232 = vmax.f32 %v165, 0.0
  %v233 = vmax.f32 %v170, 0.0
  %v234 = vmax.f32 %v173, 0.0
  %v235 = vmax.f32 %v178, 0.0
  %v236 = vmax.f32 %v181, 0.0
  %v237 = vmax.f32 %v186, 0.0
  %v238 = vmax.f32 %v189, 0.0
  %v239 = vmax.f32 %v194, 0.0
  %v240 = vmax.f32 %v197, 0.0
  %v241 = vmax.f32 %v202, 0.0
  %v242 = vmax.f32 %v205, 0.0
  %v243 = vmax.f32 %v210, 0.0
  %v244 = vmax.f32 %v213, 0.0
  %v245 = vmax.f32 %v218, 0.0
  %v246 = vmax.f32 %v221, 0.0
  %v247 = vmax.f32 %v226, 0.0
  %v248 = vpack.c.bf16 %v232, %v231
  %v249 = vpack.c.bf16 %v234, %v233
  %v250 = vpack.c.bf16 %v236, %v235
  %v251 = vpack.c.bf16 %v238, %v237
  %v252 = vpack.c.bf16 %v240, %v239
  %v253 = vpack.c.bf16 %v242, %v241
  %v254 = vpack.c.bf16 %v244, %v243
  %v255 = vpack.c.bf16 %v246, %v245
  %v256 = vpack.c.bf16 %v247, %v247
  %v257 = vld [vmem:[%s3] sm:$0xf]
  %v258 = vld [vmem:[%s3 + $0x4] sm:$0xf]
  %v259 = vld [vmem:[%s3 + $0x8] sm:$0xf]
  %v260 = vld [vmem:[%s3 + $0xc] sm:$0xf]
  %v261 = vld [vmem:[%s3 + $0x10] sm:$0xf]
  %v262 = vld [vmem:[%s3 + $0x14] sm:$0xf]
  %v263 = vld [vmem:[%s3 + $0x18] sm:$0xf]
  %v264 = vld [vmem:[%s3 + $0x1c] sm:$0xf]
  %v265 = vld [vmem:[%s3 + $0x20] sm:$0xf]
  %v266 = vld [vmem:[%s3 + $0x24] sm:$0xf]
  %v267 = vld [vmem:[%s3 + $0x28] sm:$0xf]
  %v268 = vld [vmem:[%s3 + $0x2c] sm:$0xf]
  %v269 = vld [vmem:[%s3 + $0x30] sm:$0xf]
  %v270 = vld [vmem:[%s3 + $0x34] sm:$0xf]
  %v271 = vld [vmem:[%s3 + $0x38] sm:$0xf]
  %v272 = vld [vmem:[%s3 + $0x3c] sm:$0xf]
  %v273 = vld [vmem:[%s4] sm:$0x1]
  %v275 = vlaneseq
  %v276 = vshrl.u32 %v275, 7
  %v277 = vsub.s32 0, %v276
  %v278 = vrot.slane %v273, %v277
  %v296 = vunpack.c.l.b16 %v257
  %v297 = vunpack.c.l.b16 %v258
  %v298 = vunpack.c.l.b16 %v259
  %v299 = vunpack.c.l.b16 %v260
  %v300 = vunpack.c.l.b16 %v261
  %v301 = vunpack.c.l.b16 %v262
  %v302 = vunpack.c.l.b16 %v263
  %v303 = vunpack.c.l.b16 %v264
  %v304 = vunpack.c.l.b16 %v265
  %v305 = vunpack.c.l.b16 %v266
  %v306 = vunpack.c.l.b16 %v267
  %v307 = vunpack.c.l.b16 %v268
  %v308 = vunpack.c.l.b16 %v269
  %v309 = vunpack.c.l.b16 %v270
  %v310 = vunpack.c.l.b16 %v271
  %v311 = vunpack.c.l.b16 %v272
  %v312 = vpack.c.b16 %v297, %v296
  %v313 = vpack.c.b16 %v299, %v298
  %v314 = vpack.c.b16 %v301, %v300
  %v315 = vpack.c.b16 %v303, %v302
  %v316 = vpack.c.b16 %v305, %v304
  %v317 = vpack.c.b16 %v307, %v306
  %v318 = vpack.c.b16 %v309, %v308
  %v319 = vpack.c.b16 %v311, %v310
  %328 = vmatprep.subr.bf16.mxu0 0
  %329 = vmatpush1.bf16.msra.mxu0 %v312
  %330 = vmatprep.subr.bf16.mxu0 0
  %331 = vmatpush1.bf16.msra.mxu0 %v313
  %332 = vmatprep.subr.bf16.mxu0 0
  %333 = vmatpush1.bf16.msra.mxu0 %v314
  %334 = vmatprep.subr.bf16.mxu0 0
  %335 = vmatpush1.bf16.msra.mxu0 %v315
  %336 = vmatprep.subr.bf16.mxu0 0
  %337 = vmatpush1.bf16.msra.mxu0 %v316
  %338 = vmatprep.subr.bf16.mxu0 0
  %339 = vmatpush1.bf16.msra.mxu0 %v317
  %340 = vmatprep.subr.bf16.mxu0 0
  %341 = vmatpush1.bf16.msra.mxu0 %v318
  %342 = vmatprep.subr.bf16.mxu0 0
  %343 = vmatpush1.bf16.msra.mxu0 %v319
  %344 = vmatprep.subr.bf16.mxu0 0
  %345 = vmatpush1.bf16.msra.mxu0 0
  %346 = vmatprep.subr.bf16.mxu0 0
  %347 = vmatpush1.bf16.msra.mxu0 0
  %348 = vmatprep.subr.bf16.mxu0 0
  %349 = vmatpush1.bf16.msra.mxu0 0
  %350 = vmatprep.subr.bf16.mxu0 0
  %351 = vmatpush1.bf16.msra.mxu0 0
  %352 = vmatprep.subr.bf16.mxu0 0
  %353 = vmatpush1.bf16.msra.mxu0 0
  %354 = vmatprep.subr.bf16.mxu0 0
  %355 = vmatpush1.bf16.msra.mxu0 0
  %356 = vmatprep.subr.bf16.mxu0 0
  %357 = vmatpush1.bf16.msra.mxu0 0
  %358 = vmatprep.subr.bf16.mxu0 0
  %359 = vmatpush1.bf16.msra.mxu0 0
  %360 = vmatprep.mubr.bf16.mxu0 0
  %361 = vmatmul.mubr.bf16.gmra.mrb[0].mxu0 %v248
  %v362 = vpop.f32.mrb[0].mxu0
  %v363 = vadd.f32 %v278, %v362
  %v364 = vpop.f32.mrb[0].mxu0
  %v365 = vpop.f32.mrb[0].mxu0
  %v366 = vadd.f32 %v278, %v365
  %v367 = vpop.f32.mrb[0].mxu0
  %368 = vmatprep.mubr.bf16.mxu0 0
  %369 = vmatmul.mubr.bf16.gmra.mrb[0].mxu0 %v249
  %v370 = vpop.f32.mrb[0].mxu0
  %v371 = vadd.f32 %v278, %v370
  %v372 = vpop.f32.mrb[0].mxu0
  %v373 = vpop.f32.mrb[0].mxu0
  %v374 = vadd.f32 %v278, %v373
  %v375 = vpop.f32.mrb[0].mxu0
  %376 = vmatprep.mubr.bf16.mxu0 0
  %377 = vmatmul.mubr.bf16.gmra.mrb[0].mxu0 %v250
  %v378 = vpop.f32.mrb[0].mxu0
  %v379 = vadd.f32 %v278, %v378
  %v380 = vpop.f32.mrb[0].mxu0
  %v381 = vpop.f32.mrb[0].mxu0
  %v382 = vadd.f32 %v278, %v381
  %v383 = vpop.f32.mrb[0].mxu0
  %384 = vmatprep.mubr.bf16.mxu0 0
  %385 = vmatmul.mubr.bf16.gmra.mrb[0].mxu0 %v251
  %v386 = vpop.f32.mrb[0].mxu0
  %v387 = vadd.f32 %v278, %v386
  %v388 = vpop.f32.mrb[0].mxu0
  %v389 = vpop.f32.mrb[0].mxu0
  %v390 = vadd.f32 %v278, %v389
  %v391 = vpop.f32.mrb[0].mxu0
  %392 = vmatprep.mubr.bf16.mxu0 0
  %393 = vmatmul.mubr.bf16.gmra.mrb[0].mxu0 %v252
  %v394 = vpop.f32.mrb[0].mxu0
  %v395 = vadd.f32 %v278, %v394
  %v396 = vpop.f32.mrb[0].mxu0
  %v397 = vpop.f32.mrb[0].mxu0
  %v398 = vadd.f32 %v278, %v397
  %v399 = vpop.f32.mrb[0].mxu0
  %400 = vmatprep.mubr.bf16.mxu0 0
  %401 = vmatmul.mubr.bf16.gmra.mrb[0].mxu0 %v253
  %v402 = vpop.f32.mrb[0].mxu0
  %v403 = vadd.f32 %v278, %v402
  %v404 = vpop.f32.mrb[0].mxu0
  %v405 = vpop.f32.mrb[0].mxu0
  %v406 = vadd.f32 %v278, %v405
  %v407 = vpop.f32.mrb[0].mxu0
  %408 = vmatprep.mubr.bf16.mxu0 0
  %409 = vmatmul.mubr.bf16.gmra.mrb[0].mxu0 %v254
  %v410 = vpop.f32.mrb[0].mxu0
  %v411 = vadd.f32 %v278, %v410
  %v412 = vpop.f32.mrb[0].mxu0
  %v413 = vpop.f32.mrb[0].mxu0
  %v414 = vadd.f32 %v278, %v413
  %v415 = vpop.f32.mrb[0].mxu0
  %416 = vmatprep.mubr.bf16.mxu0 0
  %417 = vmatmul.mubr.bf16.gmra.mrb[0].mxu0 %v255
  %v418 = vpop.f32.mrb[0].mxu0
  %v419 = vadd.f32 %v278, %v418
  %v420 = vpop.f32.mrb[0].mxu0
  %v421 = vpop.f32.mrb[0].mxu0
  %v422 = vadd.f32 %v278, %v421
  %v423 = vpop.f32.mrb[0].mxu0
  %424 = vmatprep.mubr.bf16.mxu0 0
  %425 = vmatmul.mubr.bf16.gmra.mrb[0].mxu0 %v256
  %v426 = vpop.f32.mrb[0].mxu0
  %v427 = vadd.f32 %v278, %v426
  %v428 = vpop.f32.mrb[0].mxu0
  %v429 = vpop.f32.mrb[0].mxu0
  %v430 = vpop.f32.mrb[0].mxu0
  %431 = vdwg.mxu0
  %v432 = vld [vmem:[%s5] sm:$0xf]
  %v433 = vld [vmem:[%s5 + $0x4] sm:$0xf]
  %v434 = vld [vmem:[%s5 + $0x8] sm:$0xf]
  %v435 = vld [vmem:[%s5 + $0xc] sm:$0xf]
  %v436 = vld [vmem:[%s5 + $0x10] sm:$0xf]
  %v437 = vld [vmem:[%s5 + $0x14] sm:$0xf]
  %v438 = vld [vmem:[%s5 + $0x18] sm:$0xf]
  %v439 = vld [vmem:[%s5 + $0x1c] sm:$0xf]
  %v440 = vld [vmem:[%s5 + $0x20] sm:$0xf]
  %v441 = vld [vmem:[%s5 + $0x24] sm:$0xf]
  %v442 = vld [vmem:[%s5 + $0x28] sm:$0xf]
  %v443 = vld [vmem:[%s5 + $0x2c] sm:$0xf]
  %v444 = vld [vmem:[%s5 + $0x30] sm:$0xf]
  %v445 = vld [vmem:[%s5 + $0x34] sm:$0xf]
  %v446 = vld [vmem:[%s5 + $0x38] sm:$0xf]
  %v447 = vld [vmem:[%s5 + $0x3c] sm:$0xf]
  %v448 = vld [vmem:[%s6] sm:$0x1]
  %v450 = vlaneseq
  %v451 = vshrl.u32 %v450, 7
  %v452 = vsub.s32 0, %v451
  %v453 = vrot.slane %v448, %v452
  %v471 = vunpack.c.l.b16 %v432
  %v472 = vunpack.c.l.b16 %v433
  %v473 = vunpack.c.l.b16 %v434
  %v474 = vunpack.c.l.b16 %v435
  %v475 = vunpack.c.l.b16 %v436
  %v476 = vunpack.c.l.b16 %v437
  %v477 = vunpack.c.l.b16 %v438
  %v478 = vunpack.c.l.b16 %v439
  %v479 = vunpack.c.l.b16 %v440
  %v480 = vunpack.c.l.b16 %v441
  %v481 = vunpack.c.l.b16 %v442
  %v482 = vunpack.c.l.b16 %v443
  %v483 = vunpack.c.l.b16 %v444
  %v484 = vunpack.c.l.b16 %v445
  %v485 = vunpack.c.l.b16 %v446
  %v486 = vunpack.c.l.b16 %v447
  %v487 = vpack.c.b16 %v472, %v471
  %v488 = vpack.c.b16 %v474, %v473
  %v489 = vpack.c.b16 %v476, %v475
  %v490 = vpack.c.b16 %v478, %v477
  %v491 = vpack.c.b16 %v480, %v479
  %v492 = vpack.c.b16 %v482, %v481
  %v493 = vpack.c.b16 %v484, %v483
  %v494 = vpack.c.b16 %v486, %v485
  %503 = vmatprep.subr.bf16.mxu0 0
  %504 = vmatpush1.bf16.msra.mxu0 %v487
  %505 = vmatprep.subr.bf16.mxu0 0
  %506 = vmatpush1.bf16.msra.mxu0 %v488
  %507 = vmatprep.subr.bf16.mxu0 0
  %508 = vmatpush1.bf16.msra.mxu0 %v489
  %509 = vmatprep.subr.bf16.mxu0 0
  %510 = vmatpush1.bf16.msra.mxu0 %v490
  %511 = vmatprep.subr.bf16.mxu0 0
  %512 = vmatpush1.bf16.msra.mxu0 %v491
  %513 = vmatprep.subr.bf16.mxu0 0
  %514 = vmatpush1.bf16.msra.mxu0 %v492
  %515 = vmatprep.subr.bf16.mxu0 0
  %516 = vmatpush1.bf16.msra.mxu0 %v493
  %517 = vmatprep.subr.bf16.mxu0 0
  %518 = vmatpush1.bf16.msra.mxu0 %v494
  %519 = vmatprep.subr.bf16.mxu0 0
  %520 = vmatpush1.bf16.msra.mxu0 0
  %521 = vmatprep.subr.bf16.mxu0 0
  %522 = vmatpush1.bf16.msra.mxu0 0
  %523 = vmatprep.subr.bf16.mxu0 0
  %524 = vmatpush1.bf16.msra.mxu0 0
  %525 = vmatprep.subr.bf16.mxu0 0
  %526 = vmatpush1.bf16.msra.mxu0 0
  %527 = vmatprep.subr.bf16.mxu0 0
  %528 = vmatpush1.bf16.msra.mxu0 0
  %529 = vmatprep.subr.bf16.mxu0 0
  %530 = vmatpush1.bf16.msra.mxu0 0
  %531 = vmatprep.subr.bf16.mxu0 0
  %532 = vmatpush1.bf16.msra.mxu0 0
  %533 = vmatprep.subr.bf16.mxu0 0
  %534 = vmatpush1.bf16.msra.mxu0 0
  %535 = vmatprep.mubr.bf16.mxu0 0
  %536 = vmatmul.mubr.bf16.gmra.mrb[0].mxu0 %v248
  %v537 = vpop.f32.mrb[0].mxu0
  %v538 = vadd.f32 %v453, %v537
  %v539 = vpop.f32.mrb[0].mxu0
  %v540 = vpop.f32.mrb[0].mxu0
  %v541 = vadd.f32 %v453, %v540
  %v542 = vpop.f32.mrb[0].mxu0
  %543 = vmatprep.mubr.bf16.mxu0 0
  %544 = vmatmul.mubr.bf16.gmra.mrb[0].mxu0 %v249
  %v545 = vpop.f32.mrb[0].mxu0
  %v546 = vadd.f32 %v453, %v545
  %v547 = vpop.f32.mrb[0].mxu0
  %v548 = vpop.f32.mrb[0].mxu0
  %v549 = vadd.f32 %v453, %v548
  %v550 = vpop.f32.mrb[0].mxu0
  %551 = vmatprep.mubr.bf16.mxu0 0
  %552 = vmatmul.mubr.bf16.gmra.mrb[0].mxu0 %v250
  %v553 = vpop.f32.mrb[0].mxu0
  %v554 = vadd.f32 %v453, %v553
  %v555 = vpop.f32.mrb[0].mxu0
  %v556 = vpop.f32.mrb[0].mxu0
  %v557 = vadd.f32 %v453, %v556
  %v558 = vpop.f32.mrb[0].mxu0
  %559 = vmatprep.mubr.bf16.mxu0 0
  %560 = vmatmul.mubr.bf16.gmra.mrb[0].mxu0 %v251
  %v561 = vpop.f32.mrb[0].mxu0
  %v562 = vadd.f32 %v453, %v561
  %v563 = vpop.f32.mrb[0].mxu0
  %v564 = vpop.f32.mrb[0].mxu0
  %v565 = vadd.f32 %v453, %v564
  %v566 = vpop.f32.mrb[0].mxu0
  %567 = vmatprep.mubr.bf16.mxu0 0
  %568 = vmatmul.mubr.bf16.gmra.mrb[0].mxu0 %v252
  %v569 = vpop.f32.mrb[0].mxu0
  %v570 = vadd.f32 %v453, %v569
  %v571 = vpop.f32.mrb[0].mxu0
  %v572 = vpop.f32.mrb[0].mxu0
  %v573 = vadd.f32 %v453, %v572
  %v574 = vpop.f32.mrb[0].mxu0
  %575 = vmatprep.mubr.bf16.mxu0 0
  %576 = vmatmul.mubr.bf16.gmra.mrb[0].mxu0 %v253
  %v577 = vpop.f32.mrb[0].mxu0
  %v578 = vadd.f32 %v453, %v577
  %v579 = vpop.f32.mrb[0].mxu0
  %v580 = vpop.f32.mrb[0].mxu0
  %v581 = vadd.f32 %v453, %v580
  %v582 = vpop.f32.mrb[0].mxu0
  %583 = vmatprep.mubr.bf16.mxu0 0
  %584 = vmatmul.mubr.bf16.gmra.mrb[0].mxu0 %v254
  %v585 = vpop.f32.mrb[0].mxu0
  %v586 = vadd.f32 %v453, %v585
  %v587 = vpop.f32.mrb[0].mxu0
  %v588 = vpop.f32.mrb[0].mxu0
  %v589 = vadd.f32 %v453, %v588
  %v590 = vpop.f32.mrb[0].mxu0
  %591 = vmatprep.mubr.bf16.mxu0 0
  %592 = vmatmul.mubr.bf16.gmra.mrb[0].mxu0 %v255
  %v593 = vpop.f32.mrb[0].mxu0
  %v594 = vadd.f32 %v453, %v593
  %v595 = vpop.f32.mrb[0].mxu0
  %v596 = vpop.f32.mrb[0].mxu0
  %v597 = vadd.f32 %v453, %v596
  %v598 = vpop.f32.mrb[0].mxu0
  %599 = vmatprep.mubr.bf16.mxu0 0
  %600 = vmatmul.mubr.bf16.gmra.mrb[0].mxu0 %v256
  %v601 = vpop.f32.mrb[0].mxu0
  %v602 = vadd.f32 %v453, %v601
  %v603 = vpop.f32.mrb[0].mxu0
  %v604 = vpop.f32.mrb[0].mxu0
  %v605 = vpop.f32.mrb[0].mxu0
  %606 = vdwg.mxu0
  %v607 = vxor.u32 %v538, 2147483648
  %v608 = vxor.u32 %v541, 2147483648
  %v609 = vxor.u32 %v546, 2147483648
  %v610 = vxor.u32 %v549, 2147483648
  %v611 = vxor.u32 %v554, 2147483648
  %v612 = vxor.u32 %v557, 2147483648
  %v613 = vxor.u32 %v562, 2147483648
  %v614 = vxor.u32 %v565, 2147483648
  %v615 = vxor.u32 %v570, 2147483648
  %v616 = vxor.u32 %v573, 2147483648
  %v617 = vxor.u32 %v578, 2147483648
  %v618 = vxor.u32 %v581, 2147483648
  %v619 = vxor.u32 %v586, 2147483648
  %v620 = vxor.u32 %v589, 2147483648
  %v621 = vxor.u32 %v594, 2147483648
  %v622 = vxor.u32 %v597, 2147483648
  %v623 = vxor.u32 %v602, 2147483648
  %v624 = vmul.f32 %v607, 1.442695
  %v625 = vpow.pop %v624
  %v626 = vmul.f32 %v608, 1.442695
  %v627 = vpow.pop %v626
  %v628 = vmul.f32 %v609, 1.442695
  %v629 = vpow.pop %v628
  %v630 = vmul.f32 %v610, 1.442695
  %v631 = vpow.pop %v630
  %v632 = vmul.f32 %v611, 1.442695
  %v633 = vpow.pop %v632
  %v634 = vmul.f32 %v612, 1.442695
  %v635 = vpow.pop %v634
  %v636 = vmul.f32 %v613, 1.442695
  %v637 = vpow.pop %v636
  %v638 = vmul.f32 %v614, 1.442695
  %v639 = vpow.pop %v638
  %v640 = vmul.f32 %v615, 1.442695
  %v641 = vpow.pop %v640
  %v642 = vmul.f32 %v616, 1.442695
  %v643 = vpow.pop %v642
  %v644 = vmul.f32 %v617, 1.442695
  %v645 = vpow.pop %v644
  %v646 = vmul.f32 %v618, 1.442695
  %v647 = vpow.pop %v646
  %v648 = vmul.f32 %v619, 1.442695
  %v649 = vpow.pop %v648
  %v650 = vmul.f32 %v620, 1.442695
  %v651 = vpow.pop %v650
  %v652 = vmul.f32 %v621, 1.442695
  %v653 = vpow.pop %v652
  %v654 = vmul.f32 %v622, 1.442695
  %v655 = vpow.pop %v654
  %v656 = vmul.f32 %v623, 1.442695
  %v657 = vpow.pop %v656
  %v658 = vadd.f32 %v625, 1.0
  %v659 = vadd.f32 %v627, 1.0
  %v660 = vadd.f32 %v629, 1.0
  %v661 = vadd.f32 %v631, 1.0
  %v662 = vadd.f32 %v633, 1.0
  %v663 = vadd.f32 %v635, 1.0
  %v664 = vadd.f32 %v637, 1.0
  %v665 = vadd.f32 %v639, 1.0
  %v666 = vadd.f32 %v641, 1.0
  %v667 = vadd.f32 %v643, 1.0
  %v668 = vadd.f32 %v645, 1.0
  %v669 = vadd.f32 %v647, 1.0
  %v670 = vadd.f32 %v649, 1.0
  %v671 = vadd.f32 %v651, 1.0
  %v672 = vadd.f32 %v653, 1.0
  %v673 = vadd.f32 %v655, 1.0
  %v674 = vadd.f32 %v657, 1.0
  %v675 = vrcp.pop %v658
  %v676 = vmul.f32 1.0, %v675
  %v677 = vrcp.pop %v659
  %v678 = vmul.f32 1.0, %v677
  %v679 = vrcp.pop %v660
  %v680 = vmul.f32 1.0, %v679
  %v681 = vrcp.pop %v661
  %v682 = vmul.f32 1.0, %v681
  %v683 = vrcp.pop %v662
  %v684 = vmul.f32 1.0, %v683
  %v685 = vrcp.pop %v663
  %v686 = vmul.f32 1.0, %v685
  %v687 = vrcp.pop %v664
  %v688 = vmul.f32 1.0, %v687
  %v689 = vrcp.pop %v665
  %v690 = vmul.f32 1.0, %v689
  %v691 = vrcp.pop %v666
  %v692 = vmul.f32 1.0, %v691
  %v693 = vrcp.pop %v667
  %v694 = vmul.f32 1.0, %v693
  %v695 = vrcp.pop %v668
  %v696 = vmul.f32 1.0, %v695
  %v697 = vrcp.pop %v669
  %v698 = vmul.f32 1.0, %v697
  %v699 = vrcp.pop %v670
  %v700 = vmul.f32 1.0, %v699
  %v701 = vrcp.pop %v671
  %v702 = vmul.f32 1.0, %v701
  %v703 = vrcp.pop %v672
  %v704 = vmul.f32 1.0, %v703
  %v705 = vrcp.pop %v673
  %v706 = vmul.f32 1.0, %v705
  %v707 = vrcp.pop %v674
  %v708 = vmul.f32 1.0, %v707
  %v709 = vmul.f32 %v363, %v676
  %v710 = vmul.f32 %v366, %v678
  %v711 = vmul.f32 %v371, %v680
  %v712 = vmul.f32 %v374, %v682
  %v713 = vmul.f32 %v379, %v684
  %v714 = vmul.f32 %v382, %v686
  %v715 = vmul.f32 %v387, %v688
  %v716 = vmul.f32 %v390, %v690
  %v717 = vmul.f32 %v395, %v692
  %v718 = vmul.f32 %v398, %v694
  %v719 = vmul.f32 %v403, %v696
  %v720 = vmul.f32 %v406, %v698
  %v721 = vmul.f32 %v411, %v700
  %v722 = vmul.f32 %v414, %v702
  %v723 = vmul.f32 %v419, %v704
  %v724 = vmul.f32 %v422, %v706
  %v725 = vmul.f32 %v427, %v708
  %726 = vst [vmem:[%s7] sm:$0xff] %v709
  %727 = vst [vmem:[%s7 + $0x8] sm:$0xff] %v710
  %728 = vst [vmem:[%s7 + $0x10] sm:$0xff] %v711
  %729 = vst [vmem:[%s7 + $0x18] sm:$0xff] %v712
  %730 = vst [vmem:[%s7 + $0x20] sm:$0xff] %v713
  %731 = vst [vmem:[%s7 + $0x28] sm:$0xff] %v714
  %732 = vst [vmem:[%s7 + $0x30] sm:$0xff] %v715
  %733 = vst [vmem:[%s7 + $0x38] sm:$0xff] %v716
  %734 = vst [vmem:[%s7 + $0x40] sm:$0xff] %v717
  %735 = vst [vmem:[%s7 + $0x48] sm:$0xff] %v718
  %736 = vst [vmem:[%s7 + $0x50] sm:$0xff] %v719
  %737 = vst [vmem:[%s7 + $0x58] sm:$0xff] %v720
  %738 = vst [vmem:[%s7 + $0x60] sm:$0xff] %v721
  %739 = vst [vmem:[%s7 + $0x68] sm:$0xff] %v722
  %740 = vst [vmem:[%s7 + $0x70] sm:$0xff] %v723
  %741 = vst [vmem:[%s7 + $0x78] sm:$0xff] %v724
  %742 = vst [vmem:[%s7 + $0x80] sm:$0xff] %v725
  // Predicated region
  $region30: #{_lambda_.16} parent=0 // pred_check
    _
  $region31: #{_lambda_.16} parent=0 // pred_check_branch
    %744 = sbr.rel (0) target = $region33
  $region32: #{_lambda_.16} parent=0 // pred_region
    _
  $region33: #{_lambda_.16} parent=0 // pred_fallthru
    _
  // Predicated region
  $region34: #{_lambda_.16} parent=0 // pred_check
    _
  $region35: #{_lambda_.16} parent=0 // pred_check_branch
    %746 = sbr.rel (0) target = $region37
  $region36: #{_lambda_.16} parent=0 // pred_region
    _
  $region37: #{_lambda_.16} parent=0 // pred_fallthru
    _

// kernel: _lambda_.17
$region0: #{_lambda_.17}
  #allocation0 [shape = 'u32[]', space=smem, size = 0x4, offset = 0x4, fixed_abs, tag = 'smem constant byte address 0x4 - core index']
  #allocation1 [shape = 'u32[144,128]{1,0:T(1,128)}', space=vmem, size = 0x12000, scoped, tag = 'internal scratch']
  %s0 = inlined_call_operand.vmem [shape: bf16[32,64], index: 0, kind: input, shape index: {}]
  %s1 = inlined_call_operand.vmem [shape: bf16[64,128], index: 1, kind: input, shape index: {}]
  %s2 = inlined_call_operand.vmem [shape: f32[1,128], index: 2, kind: input, shape index: {}]
  %s3 = inlined_call_operand.vmem [shape: bf16[128,128], index: 3, kind: input, shape index: {}]
  %s4 = inlined_call_operand.vmem [shape: f32[1,128], index: 4, kind: input, shape index: {}]
  %s5 = inlined_call_operand.vmem [shape: bf16[128,128], index: 5, kind: input, shape index: {}]
  %s6 = inlined_call_operand.vmem [shape: f32[1,128], index: 6, kind: input, shape index: {}]
  %s7 = inlined_call_operand.vmem [shape: f32[32,128], index: 7, kind: output, shape index: {}]
  %s8 = sld [smem:[#allocation0]]
  $region38: #{_lambda_.17} parent=0
    _
  %s10 = ssub.s32 1, %s8
  %s11 = scalar_select 0, %s10, %s8
  // Predicated region
  $region2: #{_lambda_.17} parent=0 // pred_check
    _
  $region3: #{_lambda_.17} parent=0 // pred_check_branch
    %13 = sbr.rel (0) target = $region5
  $region4: #{_lambda_.17} parent=0 // pred_region
    _
  $region5: #{_lambda_.17} parent=0 // pred_fallthru
    _
  // Predicated region
  $region6: #{_lambda_.17} parent=0 // pred_check
    _
  $region7: #{_lambda_.17} parent=0 // pred_check_branch
    %15 = sbr.rel (0) target = $region9
  $region8: #{_lambda_.17} parent=0 // pred_region
    _
  $region9: #{_lambda_.17} parent=0 // pred_fallthru
    _
  // Predicated region
  $region10: #{_lambda_.17} parent=0 // pred_check
    _
  $region11: #{_lambda_.17} parent=0 // pred_check_branch
    %17 = sbr.rel (0) target = $region13
  $region12: #{_lambda_.17} parent=0 // pred_region
    _
  $region13: #{_lambda_.17} parent=0 // pred_fallthru
    _
  // Predicated region
  $region14: #{_lambda_.17} parent=0 // pred_check
    _
  $region15: #{_lambda_.17} parent=0 // pred_check_branch
    %19 = sbr.rel (0) target = $region17
  $region16: #{_lambda_.17} parent=0 // pred_region
    _
  $region17: #{_lambda_.17} parent=0 // pred_fallthru
    _
  // Predicated region
  $region18: #{_lambda_.17} parent=0 // pred_check
    _
  $region19: #{_lambda_.17} parent=0 // pred_check_branch
    %21 = sbr.rel (0) target = $region21
  $region20: #{_lambda_.17} parent=0 // pred_region
    _
  $region21: #{_lambda_.17} parent=0 // pred_fallthru
    _
  // Predicated region
  $region22: #{_lambda_.17} parent=0 // pred_check
    _
  $region23: #{_lambda_.17} parent=0 // pred_check_branch
    %23 = sbr.rel (0) target = $region25
  $region24: #{_lambda_.17} parent=0 // pred_region
    _
  $region25: #{_lambda_.17} parent=0 // pred_fallthru
    _
  // Predicated region
  $region26: #{_lambda_.17} parent=0 // pred_check
    _
  $region27: #{_lambda_.17} parent=0 // pred_check_branch
    %25 = sbr.rel (0) target = $region29
  $region28: #{_lambda_.17} parent=0 // pred_region
    _
  $region29: #{_lambda_.17} parent=0 // pred_fallthru
    _
  %v27 = vld [vmem:[%s0] sm:$0xf]
  %v28 = vld [vmem:[%s0 + $0x4] sm:$0xf]
  %v29 = vld [vmem:[%s0 + $0x8] sm:$0xf]
  %v30 = vld [vmem:[%s0 + $0xc] sm:$0xf]
  %v31 = vld [vmem:[%s1] sm:$0xf]
  %v32 = vld [vmem:[%s1 + $0x4] sm:$0xf]
  %v33 = vld [vmem:[%s1 + $0x8] sm:$0xf]
  %v34 = vld [vmem:[%s1 + $0xc] sm:$0xf]
  %v35 = vld [vmem:[%s1 + $0x10] sm:$0xf]
  %v36 = vld [vmem:[%s1 + $0x14] sm:$0xf]
  %v37 = vld [vmem:[%s1 + $0x18] sm:$0xf]
  %v38 = vld [vmem:[%s1 + $0x1c] sm:$0xf]
  %v39 = vld [vmem:[%s2] sm:$0x1]
  %v41 = vlaneseq
  %v42 = vshrl.u32 %v41, 7
  %v43 = vsub.s32 0, %v42
  %v44 = vrot.slane %v39, %v43
  %v50 = vunpack.c.l.b16 %v27
  %v51 = vunpack.c.l.b16 %v28
  %v52 = vunpack.c.l.b16 %v29
  %v53 = vunpack.c.l.b16 %v30
  %v54 = vpack.c.b16 %v51, %v50
  %v55 = vpack.c.b16 %v53, %v52
  %v64 = vunpack.c.l.b16 %v31
  %v65 = vunpack.c.l.b16 %v32
  %v66 = vunpack.c.l.b16 %v33
  %v67 = vunpack.c.l.b16 %v34
  %v68 = vunpack.c.l.b16 %v35
  %v69 = vunpack.c.l.b16 %v36
  %v70 = vunpack.c.l.b16 %v37
  %v71 = vunpack.c.l.b16 %v38
  %v72 = vpack.c.b16 %v65, %v64
  %v73 = vpack.c.b16 %v67, %v66
  %v74 = vpack.c.b16 %v69, %v68
  %v75 = vpack.c.b16 %v71, %v70
  %vm80 = vcmask 523264
  %v82 = vsel %vm80, %v54, 0
  %v85 = vsel %vm80, %v55, 0
  %87 = vmatprep.subr.bf16.mxu0 0
  %88 = vmatpush1.bf16.msra.mxu0 %v72
  %89 = vmatprep.subr.bf16.mxu0 0
  %90 = vmatpush1.bf16.msra.mxu0 %v73
  %91 = vmatprep.subr.bf16.mxu0 0
  %92 = vmatpush1.bf16.msra.mxu0 %v74
  %93 = vmatprep.subr.bf16.mxu0 0
  %94 = vmatpush1.bf16.msra.mxu0 %v75
  %95 = vmatprep.subr.bf16.mxu0 0
  %96 = vmatpush1.bf16.msra.mxu0 0
  %97 = vmatprep.subr.bf16.mxu0 0
  %98 = vmatpush1.bf16.msra.mxu0 0
  %99 = vmatprep.subr.bf16.mxu0 0
  %100 = vmatpush1.bf16.msra.mxu0 0
  %101 = vmatprep.subr.bf16.mxu0 0
  %102 = vmatpush1.bf16.msra.mxu0 0
  %103 = vmatprep.subr.bf16.mxu0 0
  %104 = vmatpush1.bf16.msra.mxu0 0
  %105 = vmatprep.subr.bf16.mxu0 0
  %106 = vmatpush1.bf16.msra.mxu0 0
  %107 = vmatprep.subr.bf16.mxu0 0
  %108 = vmatpush1.bf16.msra.mxu0 0
  %109 = vmatprep.subr.bf16.mxu0 0
  %110 = vmatpush1.bf16.msra.mxu0 0
  %111 = vmatprep.subr.bf16.mxu0 0
  %112 = vmatpush1.bf16.msra.mxu0 0
  %113 = vmatprep.subr.bf16.mxu0 0
  %114 = vmatpush1.bf16.msra.mxu0 0
  %115 = vmatprep.subr.bf16.mxu0 0
  %116 = vmatpush1.bf16.msra.mxu0 0
  %117 = vmatprep.subr.bf16.mxu0 0
  %118 = vmatpush1.bf16.msra.mxu0 0
  %119 = vmatprep.mubr.bf16.mxu0 0
  %120 = vmatmul.mubr.bf16.gmra.mrb[0].mxu0 %v82
  %v121 = vpop.f32.mrb[0].mxu0
  %v122 = vadd.f32 %v44, %v121
  %v123 = vpop.f32.mrb[0].mxu0
  %v124 = vpop.f32.mrb[0].mxu0
  %v125 = vadd.f32 %v44, %v124
  %v126 = vpop.f32.mrb[0].mxu0
  %127 = vmatprep.mubr.bf16.mxu0 0
  %128 = vmatmul.mubr.bf16.gmra.mrb[0].mxu0 %v85
  %v129 = vpop.f32.mrb[0].mxu0
  %v130 = vadd.f32 %v44, %v129
  %v131 = vpop.f32.mrb[0].mxu0
  %v132 = vpop.f32.mrb[0].mxu0
  %v133 = vadd.f32 %v44, %v132
  %v134 = vpop.f32.mrb[0].mxu0
  %135 = vdwg.mxu0
  %v136 = vmax.f32 %v122, 0.0
  %v137 = vmax.f32 %v125, 0.0
  %v138 = vmax.f32 %v130, 0.0
  %v139 = vmax.f32 %v133, 0.0
  %v140 = vpack.c.bf16 %v137, %v136
  %v141 = vpack.c.bf16 %v139, %v138
  %v142 = vld [vmem:[%s3] sm:$0xf]
  %v143 = vld [vmem:[%s3 + $0x4] sm:$0xf]
  %v144 = vld [vmem:[%s3 + $0x8] sm:$0xf]
  %v145 = vld [vmem:[%s3 + $0xc] sm:$0xf]
  %v146 = vld [vmem:[%s3 + $0x10] sm:$0xf]
  %v147 = vld [vmem:[%s3 + $0x14] sm:$0xf]
  %v148 = vld [vmem:[%s3 + $0x18] sm:$0xf]
  %v149 = vld [vmem:[%s3 + $0x1c] sm:$0xf]
  %v150 = vld [vmem:[%s3 + $0x20] sm:$0xf]
  %v151 = vld [vmem:[%s3 + $0x24] sm:$0xf]
  %v152 = vld [vmem:[%s3 + $0x28] sm:$0xf]
  %v153 = vld [vmem:[%s3 + $0x2c] sm:$0xf]
  %v154 = vld [vmem:[%s3 + $0x30] sm:$0xf]
  %v155 = vld [vmem:[%s3 + $0x34] sm:$0xf]
  %v156 = vld [vmem:[%s3 + $0x38] sm:$0xf]
  %v157 = vld [vmem:[%s3 + $0x3c] sm:$0xf]
  %v158 = vld [vmem:[%s4] sm:$0x1]
  %v160 = vlaneseq
  %v161 = vshrl.u32 %v160, 7
  %v162 = vsub.s32 0, %v161
  %v163 = vrot.slane %v158, %v162
  %v181 = vunpack.c.l.b16 %v142
  %v182 = vunpack.c.l.b16 %v143
  %v183 = vunpack.c.l.b16 %v144
  %v184 = vunpack.c.l.b16 %v145
  %v185 = vunpack.c.l.b16 %v146
  %v186 = vunpack.c.l.b16 %v147
  %v187 = vunpack.c.l.b16 %v148
  %v188 = vunpack.c.l.b16 %v149
  %v189 = vunpack.c.l.b16 %v150
  %v190 = vunpack.c.l.b16 %v151
  %v191 = vunpack.c.l.b16 %v152
  %v192 = vunpack.c.l.b16 %v153
  %v193 = vunpack.c.l.b16 %v154
  %v194 = vunpack.c.l.b16 %v155
  %v195 = vunpack.c.l.b16 %v156
  %v196 = vunpack.c.l.b16 %v157
  %v197 = vpack.c.b16 %v182, %v181
  %v198 = vpack.c.b16 %v184, %v183
  %v199 = vpack.c.b16 %v186, %v185
  %v200 = vpack.c.b16 %v188, %v187
  %v201 = vpack.c.b16 %v190, %v189
  %v202 = vpack.c.b16 %v192, %v191
  %v203 = vpack.c.b16 %v194, %v193
  %v204 = vpack.c.b16 %v196, %v195
  %213 = vmatprep.subr.bf16.mxu0 0
  %214 = vmatpush1.bf16.msra.mxu0 %v197
  %215 = vmatprep.subr.bf16.mxu0 0
  %216 = vmatpush1.bf16.msra.mxu0 %v198
  %217 = vmatprep.subr.bf16.mxu0 0
  %218 = vmatpush1.bf16.msra.mxu0 %v199
  %219 = vmatprep.subr.bf16.mxu0 0
  %220 = vmatpush1.bf16.msra.mxu0 %v200
  %221 = vmatprep.subr.bf16.mxu0 0
  %222 = vmatpush1.bf16.msra.mxu0 %v201
  %223 = vmatprep.subr.bf16.mxu0 0
  %224 = vmatpush1.bf16.msra.mxu0 %v202
  %225 = vmatprep.subr.bf16.mxu0 0
  %226 = vmatpush1.bf16.msra.mxu0 %v203
  %227 = vmatprep.subr.bf16.mxu0 0
  %228 = vmatpush1.bf16.msra.mxu0 %v204
  %229 = vmatprep.subr.bf16.mxu0 0
  %230 = vmatpush1.bf16.msra.mxu0 0
  %231 = vmatprep.subr.bf16.mxu0 0
  %232 = vmatpush1.bf16.msra.mxu0 0
  %233 = vmatprep.subr.bf16.mxu0 0
  %234 = vmatpush1.bf16.msra.mxu0 0
  %235 = vmatprep.subr.bf16.mxu0 0
  %236 = vmatpush1.bf16.msra.mxu0 0
  %237 = vmatprep.subr.bf16.mxu0 0
  %238 = vmatpush1.bf16.msra.mxu0 0
  %239 = vmatprep.subr.bf16.mxu0 0
  %240 = vmatpush1.bf16.msra.mxu0 0
  %241 = vmatprep.subr.bf16.mxu0 0
  %242 = vmatpush1.bf16.msra.mxu0 0
  %243 = vmatprep.subr.bf16.mxu0 0
  %244 = vmatpush1.bf16.msra.mxu0 0
  %245 = vmatprep.mubr.bf16.mxu0 0
  %246 = vmatmul.mubr.bf16.gmra.mrb[0].mxu0 %v140
  %v247 = vpop.f32.mrb[0].mxu0
  %v248 = vadd.f32 %v163, %v247
  %v249 = vpop.f32.mrb[0].mxu0
  %v250 = vpop.f32.mrb[0].mxu0
  %v251 = vadd.f32 %v163, %v250
  %v252 = vpop.f32.mrb[0].mxu0
  %253 = vmatprep.mubr.bf16.mxu0 0
  %254 = vmatmul.mubr.bf16.gmra.mrb[0].mxu0 %v141
  %v255 = vpop.f32.mrb[0].mxu0
  %v256 = vadd.f32 %v163, %v255
  %v257 = vpop.f32.mrb[0].mxu0
  %v258 = vpop.f32.mrb[0].mxu0
  %v259 = vadd.f32 %v163, %v258
  %v260 = vpop.f32.mrb[0].mxu0
  %261 = vdwg.mxu0
  %v262 = vld [vmem:[%s5] sm:$0xf]
  %v263 = vld [vmem:[%s5 + $0x4] sm:$0xf]
  %v264 = vld [vmem:[%s5 + $0x8] sm:$0xf]
  %v265 = vld [vmem:[%s5 + $0xc] sm:$0xf]
  %v266 = vld [vmem:[%s5 + $0x10] sm:$0xf]
  %v267 = vld [vmem:[%s5 + $0x14] sm:$0xf]
  %v268 = vld [vmem:[%s5 + $0x18] sm:$0xf]
  %v269 = vld [vmem:[%s5 + $0x1c] sm:$0xf]
  %v270 = vld [vmem:[%s5 + $0x20] sm:$0xf]
  %v271 = vld [vmem:[%s5 + $0x24] sm:$0xf]
  %v272 = vld [vmem:[%s5 + $0x28] sm:$0xf]
  %v273 = vld [vmem:[%s5 + $0x2c] sm:$0xf]
  %v274 = vld [vmem:[%s5 + $0x30] sm:$0xf]
  %v275 = vld [vmem:[%s5 + $0x34] sm:$0xf]
  %v276 = vld [vmem:[%s5 + $0x38] sm:$0xf]
  %v277 = vld [vmem:[%s5 + $0x3c] sm:$0xf]
  %v278 = vld [vmem:[%s6] sm:$0x1]
  %v280 = vlaneseq
  %v281 = vshrl.u32 %v280, 7
  %v282 = vsub.s32 0, %v281
  %v283 = vrot.slane %v278, %v282
  %v301 = vunpack.c.l.b16 %v262
  %v302 = vunpack.c.l.b16 %v263
  %v303 = vunpack.c.l.b16 %v264
  %v304 = vunpack.c.l.b16 %v265
  %v305 = vunpack.c.l.b16 %v266
  %v306 = vunpack.c.l.b16 %v267
  %v307 = vunpack.c.l.b16 %v268
  %v308 = vunpack.c.l.b16 %v269
  %v309 = vunpack.c.l.b16 %v270
  %v310 = vunpack.c.l.b16 %v271
  %v311 = vunpack.c.l.b16 %v272
  %v312 = vunpack.c.l.b16 %v273
  %v313 = vunpack.c.l.b16 %v274
  %v314 = vunpack.c.l.b16 %v275
  %v315 = vunpack.c.l.b16 %v276
  %v316 = vunpack.c.l.b16 %v277
  %v317 = vpack.c.b16 %v302, %v301
  %v318 = vpack.c.b16 %v304, %v303
  %v319 = vpack.c.b16 %v306, %v305
  %v320 = vpack.c.b16 %v308, %v307
  %v321 = vpack.c.b16 %v310, %v309
  %v322 = vpack.c.b16 %v312, %v311
  %v323 = vpack.c.b16 %v314, %v313
  %v324 = vpack.c.b16 %v316, %v315
  %333 = vmatprep.subr.bf16.mxu0 0
  %334 = vmatpush1.bf16.msra.mxu0 %v317
  %335 = vmatprep.subr.bf16.mxu0 0
  %336 = vmatpush1.bf16.msra.mxu0 %v318
  %337 = vmatprep.subr.bf16.mxu0 0
  %338 = vmatpush1.bf16.msra.mxu0 %v319
  %339 = vmatprep.subr.bf16.mxu0 0
  %340 = vmatpush1.bf16.msra.mxu0 %v320
  %341 = vmatprep.subr.bf16.mxu0 0
  %342 = vmatpush1.bf16.msra.mxu0 %v321
  %343 = vmatprep.subr.bf16.mxu0 0
  %344 = vmatpush1.bf16.msra.mxu0 %v322
  %345 = vmatprep.subr.bf16.mxu0 0
  %346 = vmatpush1.bf16.msra.mxu0 %v323
  %347 = vmatprep.subr.bf16.mxu0 0
  %348 = vmatpush1.bf16.msra.mxu0 %v324
  %349 = vmatprep.subr.bf16.mxu0 0
  %350 = vmatpush1.bf16.msra.mxu0 0
  %351 = vmatprep.subr.bf16.mxu0 0
  %352 = vmatpush1.bf16.msra.mxu0 0
  %353 = vmatprep.subr.bf16.mxu0 0
  %354 = vmatpush1.bf16.msra.mxu0 0
  %355 = vmatprep.subr.bf16.mxu0 0
  %356 = vmatpush1.bf16.msra.mxu0 0
  %357 = vmatprep.subr.bf16.mxu0 0
  %358 = vmatpush1.bf16.msra.mxu0 0
  %359 = vmatprep.subr.bf16.mxu0 0
  %360 = vmatpush1.bf16.msra.mxu0 0
  %361 = vmatprep.subr.bf16.mxu0 0
  %362 = vmatpush1.bf16.msra.mxu0 0
  %363 = vmatprep.subr.bf16.mxu0 0
  %364 = vmatpush1.bf16.msra.mxu0 0
  %365 = vmatprep.mubr.bf16.mxu0 0
  %366 = vmatmul.mubr.bf16.gmra.mrb[0].mxu0 %v140
  %v367 = vpop.f32.mrb[0].mxu0
  %v368 = vadd.f32 %v283, %v367
  %v369 = vpop.f32.mrb[0].mxu0
  %v370 = vpop.f32.mrb[0].mxu0
  %v371 = vadd.f32 %v283, %v370
  %v372 = vpop.f32.mrb[0].mxu0
  %373 = vmatprep.mubr.bf16.mxu0 0
  %374 = vmatmul.mubr.bf16.gmra.mrb[0].mxu0 %v141
  %v375 = vpop.f32.mrb[0].mxu0
  %v376 = vadd.f32 %v283, %v375
  %v377 = vpop.f32.mrb[0].mxu0
  %v378 = vpop.f32.mrb[0].mxu0
  %v379 = vadd.f32 %v283, %v378
  %v380 = vpop.f32.mrb[0].mxu0
  %381 = vdwg.mxu0
  %v382 = vxor.u32 %v368, 2147483648
  %v383 = vxor.u32 %v371, 2147483648
  %v384 = vxor.u32 %v376, 2147483648
  %v385 = vxor.u32 %v379, 2147483648
  %v386 = vmul.f32 %v382, 1.442695
  %v387 = vpow.pop %v386
  %v388 = vmul.f32 %v383, 1.442695
  %v389 = vpow.pop %v388
  %v390 = vmul.f32 %v384, 1.442695
  %v391 = vpow.pop %v390
  %v392 = vmul.f32 %v385, 1.442695
  %v393 = vpow.pop %v392
  %v394 = vadd.f32 %v387, 1.0
  %v395 = vadd.f32 %v389, 1.0
  %v396 = vadd.f32 %v391, 1.0
  %v397 = vadd.f32 %v393, 1.0
  %v398 = vrcp.pop %v394
  %v399 = vmul.f32 1.0, %v398
  %v400 = vrcp.pop %v395
  %v401 = vmul.f32 1.0, %v400
  %v402 = vrcp.pop %v396
  %v403 = vmul.f32 1.0, %v402
  %v404 = vrcp.pop %v397
  %v405 = vmul.f32 1.0, %v404
  %v406 = vmul.f32 %v248, %v399
  %v407 = vmul.f32 %v251, %v401
  %v408 = vmul.f32 %v256, %v403
  %v409 = vmul.f32 %v259, %v405
  %410 = vst [vmem:[%s7] sm:$0xff] %v406
  %411 = vst [vmem:[%s7 + $0x8] sm:$0xff] %v407
  %412 = vst [vmem:[%s7 + $0x10] sm:$0xff] %v408
  %413 = vst [vmem:[%s7 + $0x18] sm:$0xff] %v409
  // Predicated region
  $region30: #{_lambda_.17} parent=0 // pred_check
    _
  $region31: #{_lambda_.17} parent=0 // pred_check_branch
    %415 = sbr.rel (0) target = $region33
  $region32: #{_lambda_.17} parent=0 // pred_region
    _
  $region33: #{_lambda_.17} parent=0 // pred_fallthru
    _
  // Predicated region
  $region34: #{_lambda_.17} parent=0 // pred_check
    _
  $region35: #{_lambda_.17} parent=0 // pred_check_branch
    %417 = sbr.rel (0) target = $region37
  $region36: #{_lambda_.17} parent=0 // pred_region
    _
  $region37: #{_lambda_.17} parent=0 // pred_fallthru
    _

// kernel: _lambda_.19
$region0: #{_lambda_.19}
  #allocation0 [shape = 'u32[]', space=smem, size = 0x4, offset = 0x4, fixed_abs, tag = 'smem constant byte address 0x4 - core index']
  #allocation1 [shape = 'u32[144,128]{1,0:T(1,128)}', space=vmem, size = 0x12000, scoped, tag = 'internal scratch']
  %s0 = inlined_call_operand.vmem [shape: bf16[8,32], index: 0, kind: input, shape index: {}]
  %s1 = inlined_call_operand.vmem [shape: bf16[32,128], index: 1, kind: input, shape index: {}]
  %s2 = inlined_call_operand.vmem [shape: f32[1,128], index: 2, kind: input, shape index: {}]
  %s3 = inlined_call_operand.vmem [shape: f32[8,128], index: 3, kind: output, shape index: {}]
  %s4 = sld [smem:[#allocation0]]
  $region22: #{_lambda_.19} parent=0
    _
  %s6 = ssub.s32 1, %s4
  %s7 = scalar_select 0, %s6, %s4
  // Predicated region
  $region2: #{_lambda_.19} parent=0 // pred_check
    _
  $region3: #{_lambda_.19} parent=0 // pred_check_branch
    %9 = sbr.rel (0) target = $region5
  $region4: #{_lambda_.19} parent=0 // pred_region
    _
  $region5: #{_lambda_.19} parent=0 // pred_fallthru
    _
  // Predicated region
  $region6: #{_lambda_.19} parent=0 // pred_check
    _
  $region7: #{_lambda_.19} parent=0 // pred_check_branch
    %11 = sbr.rel (0) target = $region9
  $region8: #{_lambda_.19} parent=0 // pred_region
    _
  $region9: #{_lambda_.19} parent=0 // pred_fallthru
    _
  // Predicated region
  $region10: #{_lambda_.19} parent=0 // pred_check
    _
  $region11: #{_lambda_.19} parent=0 // pred_check_branch
    %13 = sbr.rel (0) target = $region13
  $region12: #{_lambda_.19} parent=0 // pred_region
    _
  $region13: #{_lambda_.19} parent=0 // pred_fallthru
    _
  %v15 = vld [vmem:[%s0] sm:$0xf]
  %v16 = vld [vmem:[%s1] sm:$0xf]
  %v17 = vld [vmem:[%s1 + $0x4] sm:$0xf]
  %v18 = vld [vmem:[%s1 + $0x8] sm:$0xf]
  %v19 = vld [vmem:[%s1 + $0xc] sm:$0xf]
  %v20 = vld [vmem:[%s2] sm:$0x1]
  %v22 = vlaneseq
  %v23 = vshrl.u32 %v22, 7
  %v24 = vsub.s32 0, %v23
  %v25 = vrot.slane %v20, %v24
  %v31 = vunpack.c.l.b16 %v16
  %v32 = vunpack.c.l.b16 %v17
  %v33 = vunpack.c.l.b16 %v18
  %v34 = vunpack.c.l.b16 %v19
  %v35 = vpack.c.b16 %v32, %v31
  %v36 = vpack.c.b16 %v34, %v33
  %vm39 = vcmask 261120
  %v41 = vsel %vm39, %v15, 0
  %43 = vmatprep.subr.bf16.mxu0 0
  %44 = vmatpush1.bf16.msra.mxu0 %v35
  %45 = vmatprep.subr.bf16.mxu0 0
  %46 = vmatpush1.bf16.msra.mxu0 %v36
  %47 = vmatprep.subr.bf16.mxu0 0
  %48 = vmatpush1.bf16.msra.mxu0 0
  %49 = vmatprep.subr.bf16.mxu0 0
  %50 = vmatpush1.bf16.msra.mxu0 0
  %51 = vmatprep.subr.bf16.mxu0 0
  %52 = vmatpush1.bf16.msra.mxu0 0
  %53 = vmatprep.subr.bf16.mxu0 0
  %54 = vmatpush1.bf16.msra.mxu0 0
  %55 = vmatprep.subr.bf16.mxu0 0
  %56 = vmatpush1.bf16.msra.mxu0 0
  %57 = vmatprep.subr.bf16.mxu0 0
  %58 = vmatpush1.bf16.msra.mxu0 0
  %59 = vmatprep.subr.bf16.mxu0 0
  %60 = vmatpush1.bf16.msra.mxu0 0
  %61 = vmatprep.subr.bf16.mxu0 0
  %62 = vmatpush1.bf16.msra.mxu0 0
  %63 = vmatprep.subr.bf16.mxu0 0
  %64 = vmatpush1.bf16.msra.mxu0 0
  %65 = vmatprep.subr.bf16.mxu0 0
  %66 = vmatpush1.bf16.msra.mxu0 0
  %67 = vmatprep.subr.bf16.mxu0 0
  %68 = vmatpush1.bf16.msra.mxu0 0
  %69 = vmatprep.subr.bf16.mxu0 0
  %70 = vmatpush1.bf16.msra.mxu0 0
  %71 = vmatprep.subr.bf16.mxu0 0
  %72 = vmatpush1.bf16.msra.mxu0 0
  %73 = vmatprep.subr.bf16.mxu0 0
  %74 = vmatpush1.bf16.msra.mxu0 0
  %75 = vmatprep.mubr.bf16.mxu0 0
  %76 = vmatmul.mubr.bf16.gmra.mrb[0].mxu0 %v41
  %v77 = vpop.f32.mrb[0].mxu0
  %v78 = vadd.f32 %v25, %v77
  %v79 = vpop.f32.mrb[0].mxu0
  %v80 = vpop.f32.mrb[0].mxu0
  %v81 = vpop.f32.mrb[0].mxu0
  %82 = vdwg.mxu0
  %83 = vst [vmem:[%s3] sm:$0xff] %v78
  // Predicated region
  $region14: #{_lambda_.19} parent=0 // pred_check
    _
  $region15: #{_lambda_.19} parent=0 // pred_check_branch
    %85 = sbr.rel (0) target = $region17
  $region16: #{_lambda_.19} parent=0 // pred_region
    _
  $region17: #{_lambda_.19} parent=0 // pred_fallthru
    _
  // Predicated region
  $region18: #{_lambda_.19} parent=0 // pred_check
    _
  $region19: #{_lambda_.19} parent=0 // pred_check_branch
    %87 = sbr.rel (0) target = $region21
  $region20: #{_lambda_.19} parent=0 // pred_region
    _
  $region21: #{_lambda_.19} parent=0 // pred_fallthru
    _

// kernel: _lambda_.18
$region0: #{_lambda_.18}
  #allocation0 [shape = 'u32[]', space=smem, size = 0x4, offset = 0x4, fixed_abs, tag = 'smem constant byte address 0x4 - core index']
  #allocation1 [shape = 'u32[144,128]{1,0:T(1,128)}', space=vmem, size = 0x12000, scoped, tag = 'internal scratch']
  %s0 = inlined_call_operand.vmem [shape: bf16[8,128], index: 0, kind: input, shape index: {}]
  %s1 = inlined_call_operand.vmem [shape: bf16[128,128], index: 1, kind: input, shape index: {}]
  %s2 = inlined_call_operand.vmem [shape: f32[1,128], index: 2, kind: input, shape index: {}]
  %s3 = inlined_call_operand.vmem [shape: bf16[128,128], index: 3, kind: input, shape index: {}]
  %s4 = inlined_call_operand.vmem [shape: f32[1,128], index: 4, kind: input, shape index: {}]
  %s5 = inlined_call_operand.vmem [shape: bf16[128,128], index: 5, kind: input, shape index: {}]
  %s6 = inlined_call_operand.vmem [shape: f32[1,128], index: 6, kind: input, shape index: {}]
  %s7 = inlined_call_operand.vmem [shape: f32[8,128], index: 7, kind: output, shape index: {}]
  %s8 = sld [smem:[#allocation0]]
  $region38: #{_lambda_.18} parent=0
    _
  %s10 = ssub.s32 1, %s8
  %s11 = scalar_select 0, %s10, %s8
  // Predicated region
  $region2: #{_lambda_.18} parent=0 // pred_check
    _
  $region3: #{_lambda_.18} parent=0 // pred_check_branch
    %13 = sbr.rel (0) target = $region5
  $region4: #{_lambda_.18} parent=0 // pred_region
    _
  $region5: #{_lambda_.18} parent=0 // pred_fallthru
    _
  // Predicated region
  $region6: #{_lambda_.18} parent=0 // pred_check
    _
  $region7: #{_lambda_.18} parent=0 // pred_check_branch
    %15 = sbr.rel (0) target = $region9
  $region8: #{_lambda_.18} parent=0 // pred_region
    _
  $region9: #{_lambda_.18} parent=0 // pred_fallthru
    _
  // Predicated region
  $region10: #{_lambda_.18} parent=0 // pred_check
    _
  $region11: #{_lambda_.18} parent=0 // pred_check_branch
    %17 = sbr.rel (0) target = $region13
  $region12: #{_lambda_.18} parent=0 // pred_region
    _
  $region13: #{_lambda_.18} parent=0 // pred_fallthru
    _
  // Predicated region
  $region14: #{_lambda_.18} parent=0 // pred_check
    _
  $region15: #{_lambda_.18} parent=0 // pred_check_branch
    %19 = sbr.rel (0) target = $region17
  $region16: #{_lambda_.18} parent=0 // pred_region
    _
  $region17: #{_lambda_.18} parent=0 // pred_fallthru
    _
  // Predicated region
  $region18: #{_lambda_.18} parent=0 // pred_check
    _
  $region19: #{_lambda_.18} parent=0 // pred_check_branch
    %21 = sbr.rel (0) target = $region21
  $region20: #{_lambda_.18} parent=0 // pred_region
    _
  $region21: #{_lambda_.18} parent=0 // pred_fallthru
    _
  // Predicated region
  $region22: #{_lambda_.18} parent=0 // pred_check
    _
  $region23: #{_lambda_.18} parent=0 // pred_check_branch
    %23 = sbr.rel (0) target = $region25
  $region24: #{_lambda_.18} parent=0 // pred_region
    _
  $region25: #{_lambda_.18} parent=0 // pred_fallthru
    _
  // Predicated region
  $region26: #{_lambda_.18} parent=0 // pred_check
    _
  $region27: #{_lambda_.18} parent=0 // pred_check_branch
    %25 = sbr.rel (0) target = $region29
  $region28: #{_lambda_.18} parent=0 // pred_region
    _
  $region29: #{_lambda_.18} parent=0 // pred_fallthru
    _
  %v27 = vld [vmem:[%s0] sm:$0xf]
  %v28 = vld [vmem:[%s1] sm:$0xf]
  %v29 = vld [vmem:[%s1 + $0x4] sm:$0xf]
  %v30 = vld [vmem:[%s1 + $0x8] sm:$0xf]
  %v31 = vld [vmem:[%s1 + $0xc] sm:$0xf]
  %v32 = vld [vmem:[%s1 + $0x10] sm:$0xf]
  %v33 = vld [vmem:[%s1 + $0x14] sm:$0xf]
  %v34 = vld [vmem:[%s1 + $0x18] sm:$0xf]
  %v35 = vld [vmem:[%s1 + $0x1c] sm:$0xf]
  %v36 = vld [vmem:[%s1 + $0x20] sm:$0xf]
  %v37 = vld [vmem:[%s1 + $0x24] sm:$0xf]
  %v38 = vld [vmem:[%s1 + $0x28] sm:$0xf]
  %v39 = vld [vmem:[%s1 + $0x2c] sm:$0xf]
  %v40 = vld [vmem:[%s1 + $0x30] sm:$0xf]
  %v41 = vld [vmem:[%s1 + $0x34] sm:$0xf]
  %v42 = vld [vmem:[%s1 + $0x38] sm:$0xf]
  %v43 = vld [vmem:[%s1 + $0x3c] sm:$0xf]
  %v44 = vld [vmem:[%s2] sm:$0x1]
  %v46 = vlaneseq
  %v47 = vshrl.u32 %v46, 7
  %v48 = vsub.s32 0, %v47
  %v49 = vrot.slane %v44, %v48
  %v67 = vunpack.c.l.b16 %v28
  %v68 = vunpack.c.l.b16 %v29
  %v69 = vunpack.c.l.b16 %v30
  %v70 = vunpack.c.l.b16 %v31
  %v71 = vunpack.c.l.b16 %v32
  %v72 = vunpack.c.l.b16 %v33
  %v73 = vunpack.c.l.b16 %v34
  %v74 = vunpack.c.l.b16 %v35
  %v75 = vunpack.c.l.b16 %v36
  %v76 = vunpack.c.l.b16 %v37
  %v77 = vunpack.c.l.b16 %v38
  %v78 = vunpack.c.l.b16 %v39
  %v79 = vunpack.c.l.b16 %v40
  %v80 = vunpack.c.l.b16 %v41
  %v81 = vunpack.c.l.b16 %v42
  %v82 = vunpack.c.l.b16 %v43
  %v83 = vpack.c.b16 %v68, %v67
  %v84 = vpack.c.b16 %v70, %v69
  %v85 = vpack.c.b16 %v72, %v71
  %v86 = vpack.c.b16 %v74, %v73
  %v87 = vpack.c.b16 %v76, %v75
  %v88 = vpack.c.b16 %v78, %v77
  %v89 = vpack.c.b16 %v80, %v79
  %v90 = vpack.c.b16 %v82, %v81
  %99 = vmatprep.subr.bf16.mxu0 0
  %100 = vmatpush1.bf16.msra.mxu0 %v83
  %101 = vmatprep.subr.bf16.mxu0 0
  %102 = vmatpush1.bf16.msra.mxu0 %v84
  %103 = vmatprep.subr.bf16.mxu0 0
  %104 = vmatpush1.bf16.msra.mxu0 %v85
  %105 = vmatprep.subr.bf16.mxu0 0
  %106 = vmatpush1.bf16.msra.mxu0 %v86
  %107 = vmatprep.subr.bf16.mxu0 0
  %108 = vmatpush1.bf16.msra.mxu0 %v87
  %109 = vmatprep.subr.bf16.mxu0 0
  %110 = vmatpush1.bf16.msra.mxu0 %v88
  %111 = vmatprep.subr.bf16.mxu0 0
  %112 = vmatpush1.bf16.msra.mxu0 %v89
  %113 = vmatprep.subr.bf16.mxu0 0
  %114 = vmatpush1.bf16.msra.mxu0 %v90
  %115 = vmatprep.subr.bf16.mxu0 0
  %116 = vmatpush1.bf16.msra.mxu0 0
  %117 = vmatprep.subr.bf16.mxu0 0
  %118 = vmatpush1.bf16.msra.mxu0 0
  %119 = vmatprep.subr.bf16.mxu0 0
  %120 = vmatpush1.bf16.msra.mxu0 0
  %121 = vmatprep.subr.bf16.mxu0 0
  %122 = vmatpush1.bf16.msra.mxu0 0
  %123 = vmatprep.subr.bf16.mxu0 0
  %124 = vmatpush1.bf16.msra.mxu0 0
  %125 = vmatprep.subr.bf16.mxu0 0
  %126 = vmatpush1.bf16.msra.mxu0 0
  %127 = vmatprep.subr.bf16.mxu0 0
  %128 = vmatpush1.bf16.msra.mxu0 0
  %129 = vmatprep.subr.bf16.mxu0 0
  %130 = vmatpush1.bf16.msra.mxu0 0
  %131 = vmatprep.mubr.bf16.mxu0 0
  %132 = vmatmul.mubr.bf16.gmra.mrb[0].mxu0 %v27
  %v133 = vpop.f32.mrb[0].mxu0
  %v134 = vadd.f32 %v49, %v133
  %v135 = vpop.f32.mrb[0].mxu0
  %v136 = vpop.f32.mrb[0].mxu0
  %v137 = vpop.f32.mrb[0].mxu0
  %138 = vdwg.mxu0
  %v139 = vmax.f32 %v134, 0.0
  %v140 = vpack.c.bf16 %v139, %v139
  %v141 = vld [vmem:[%s3] sm:$0xf]
  %v142 = vld [vmem:[%s3 + $0x4] sm:$0xf]
  %v143 = vld [vmem:[%s3 + $0x8] sm:$0xf]
  %v144 = vld [vmem:[%s3 + $0xc] sm:$0xf]
  %v145 = vld [vmem:[%s3 + $0x10] sm:$0xf]
  %v146 = vld [vmem:[%s3 + $0x14] sm:$0xf]
  %v147 = vld [vmem:[%s3 + $0x18] sm:$0xf]
  %v148 = vld [vmem:[%s3 + $0x1c] sm:$0xf]
  %v149 = vld [vmem:[%s3 + $0x20] sm:$0xf]
  %v150 = vld [vmem:[%s3 + $0x24] sm:$0xf]
  %v151 = vld [vmem:[%s3 + $0x28] sm:$0xf]
  %v152 = vld [vmem:[%s3 + $0x2c] sm:$0xf]
  %v153 = vld [vmem:[%s3 + $0x30] sm:$0xf]
  %v154 = vld [vmem:[%s3 + $0x34] sm:$0xf]
  %v155 = vld [vmem:[%s3 + $0x38] sm:$0xf]
  %v156 = vld [vmem:[%s3 + $0x3c] sm:$0xf]
  %v157 = vld [vmem:[%s4] sm:$0x1]
  %v159 = vlaneseq
  %v160 = vshrl.u32 %v159, 7
  %v161 = vsub.s32 0, %v160
  %v162 = vrot.slane %v157, %v161
  %v180 = vunpack.c.l.b16 %v141
  %v181 = vunpack.c.l.b16 %v142
  %v182 = vunpack.c.l.b16 %v143
  %v183 = vunpack.c.l.b16 %v144
  %v184 = vunpack.c.l.b16 %v145
  %v185 = vunpack.c.l.b16 %v146
  %v186 = vunpack.c.l.b16 %v147
  %v187 = vunpack.c.l.b16 %v148
  %v188 = vunpack.c.l.b16 %v149
  %v189 = vunpack.c.l.b16 %v150
  %v190 = vunpack.c.l.b16 %v151
  %v191 = vunpack.c.l.b16 %v152
  %v192 = vunpack.c.l.b16 %v153
  %v193 = vunpack.c.l.b16 %v154
  %v194 = vunpack.c.l.b16 %v155
  %v195 = vunpack.c.l.b16 %v156
  %v196 = vpack.c.b16 %v181, %v180
  %v197 = vpack.c.b16 %v183, %v182
  %v198 = vpack.c.b16 %v185, %v184
  %v199 = vpack.c.b16 %v187, %v186
  %v200 = vpack.c.b16 %v189, %v188
  %v201 = vpack.c.b16 %v191, %v190
  %v202 = vpack.c.b16 %v193, %v192
  %v203 = vpack.c.b16 %v195, %v194
  %212 = vmatprep.subr.bf16.mxu0 0
  %213 = vmatpush1.bf16.msra.mxu0 %v196
  %214 = vmatprep.subr.bf16.mxu0 0
  %215 = vmatpush1.bf16.msra.mxu0 %v197
  %216 = vmatprep.subr.bf16.mxu0 0
  %217 = vmatpush1.bf16.msra.mxu0 %v198
  %218 = vmatprep.subr.bf16.mxu0 0
  %219 = vmatpush1.bf16.msra.mxu0 %v199
  %220 = vmatprep.subr.bf16.mxu0 0
  %221 = vmatpush1.bf16.msra.mxu0 %v200
  %222 = vmatprep.subr.bf16.mxu0 0
  %223 = vmatpush1.bf16.msra.mxu0 %v201
  %224 = vmatprep.subr.bf16.mxu0 0
  %225 = vmatpush1.bf16.msra.mxu0 %v202
  %226 = vmatprep.subr.bf16.mxu0 0
  %227 = vmatpush1.bf16.msra.mxu0 %v203
  %228 = vmatprep.subr.bf16.mxu0 0
  %229 = vmatpush1.bf16.msra.mxu0 0
  %230 = vmatprep.subr.bf16.mxu0 0
  %231 = vmatpush1.bf16.msra.mxu0 0
  %232 = vmatprep.subr.bf16.mxu0 0
  %233 = vmatpush1.bf16.msra.mxu0 0
  %234 = vmatprep.subr.bf16.mxu0 0
  %235 = vmatpush1.bf16.msra.mxu0 0
  %236 = vmatprep.subr.bf16.mxu0 0
  %237 = vmatpush1.bf16.msra.mxu0 0
  %238 = vmatprep.subr.bf16.mxu0 0
  %239 = vmatpush1.bf16.msra.mxu0 0
  %240 = vmatprep.subr.bf16.mxu0 0
  %241 = vmatpush1.bf16.msra.mxu0 0
  %242 = vmatprep.subr.bf16.mxu0 0
  %243 = vmatpush1.bf16.msra.mxu0 0
  %244 = vmatprep.mubr.bf16.mxu0 0
  %245 = vmatmul.mubr.bf16.gmra.mrb[0].mxu0 %v140
  %v246 = vpop.f32.mrb[0].mxu0
  %v247 = vadd.f32 %v162, %v246
  %v248 = vpop.f32.mrb[0].mxu0
  %v249 = vpop.f32.mrb[0].mxu0
  %v250 = vpop.f32.mrb[0].mxu0
  %251 = vdwg.mxu0
  %v252 = vld [vmem:[%s5] sm:$0xf]
  %v253 = vld [vmem:[%s5 + $0x4] sm:$0xf]
  %v254 = vld [vmem:[%s5 + $0x8] sm:$0xf]
  %v255 = vld [vmem:[%s5 + $0xc] sm:$0xf]
  %v256 = vld [vmem:[%s5 + $0x10] sm:$0xf]
  %v257 = vld [vmem:[%s5 + $0x14] sm:$0xf]
  %v258 = vld [vmem:[%s5 + $0x18] sm:$0xf]
  %v259 = vld [vmem:[%s5 + $0x1c] sm:$0xf]
  %v260 = vld [vmem:[%s5 + $0x20] sm:$0xf]
  %v261 = vld [vmem:[%s5 + $0x24] sm:$0xf]
  %v262 = vld [vmem:[%s5 + $0x28] sm:$0xf]
  %v263 = vld [vmem:[%s5 + $0x2c] sm:$0xf]
  %v264 = vld [vmem:[%s5 + $0x30] sm:$0xf]
  %v265 = vld [vmem:[%s5 + $0x34] sm:$0xf]
  %v266 = vld [vmem:[%s5 + $0x38] sm:$0xf]
  %v267 = vld [vmem:[%s5 + $0x3c] sm:$0xf]
  %v268 = vld [vmem:[%s6] sm:$0x1]
  %v270 = vlaneseq
  %v271 = vshrl.u32 %v270, 7
  %v272 = vsub.s32 0, %v271
  %v273 = vrot.slane %v268, %v272
  %v291 = vunpack.c.l.b16 %v252
  %v292 = vunpack.c.l.b16 %v253
  %v293 = vunpack.c.l.b16 %v254
  %v294 = vunpack.c.l.b16 %v255
  %v295 = vunpack.c.l.b16 %v256
  %v296 = vunpack.c.l.b16 %v257
  %v297 = vunpack.c.l.b16 %v258
  %v298 = vunpack.c.l.b16 %v259
  %v299 = vunpack.c.l.b16 %v260
  %v300 = vunpack.c.l.b16 %v261
  %v301 = vunpack.c.l.b16 %v262
  %v302 = vunpack.c.l.b16 %v263
  %v303 = vunpack.c.l.b16 %v264
  %v304 = vunpack.c.l.b16 %v265
  %v305 = vunpack.c.l.b16 %v266
  %v306 = vunpack.c.l.b16 %v267
  %v307 = vpack.c.b16 %v292, %v291
  %v308 = vpack.c.b16 %v294, %v293
  %v309 = vpack.c.b16 %v296, %v295
  %v310 = vpack.c.b16 %v298, %v297
  %v311 = vpack.c.b16 %v300, %v299
  %v312 = vpack.c.b16 %v302, %v301
  %v313 = vpack.c.b16 %v304, %v303
  %v314 = vpack.c.b16 %v306, %v305
  %323 = vmatprep.subr.bf16.mxu0 0
  %324 = vmatpush1.bf16.msra.mxu0 %v307
  %325 = vmatprep.subr.bf16.mxu0 0
  %326 = vmatpush1.bf16.msra.mxu0 %v308
  %327 = vmatprep.subr.bf16.mxu0 0
  %328 = vmatpush1.bf16.msra.mxu0 %v309
  %329 = vmatprep.subr.bf16.mxu0 0
  %330 = vmatpush1.bf16.msra.mxu0 %v310
  %331 = vmatprep.subr.bf16.mxu0 0
  %332 = vmatpush1.bf16.msra.mxu0 %v311
  %333 = vmatprep.subr.bf16.mxu0 0
  %334 = vmatpush1.bf16.msra.mxu0 %v312
  %335 = vmatprep.subr.bf16.mxu0 0
  %336 = vmatpush1.bf16.msra.mxu0 %v313
  %337 = vmatprep.subr.bf16.mxu0 0
  %338 = vmatpush1.bf16.msra.mxu0 %v314
  %339 = vmatprep.subr.bf16.mxu0 0
  %340 = vmatpush1.bf16.msra.mxu0 0
  %341 = vmatprep.subr.bf16.mxu0 0
  %342 = vmatpush1.bf16.msra.mxu0 0
  %343 = vmatprep.subr.bf16.mxu0 0
  %344 = vmatpush1.bf16.msra.mxu0 0
  %345 = vmatprep.subr.bf16.mxu0 0
  %346 = vmatpush1.bf16.msra.mxu0 0
  %347 = vmatprep.subr.bf16.mxu0 0
  %348 = vmatpush1.bf16.msra.mxu0 0
  %349 = vmatprep.subr.bf16.mxu0 0
  %350 = vmatpush1.bf16.msra.mxu0 0
  %351 = vmatprep.subr.bf16.mxu0 0
  %352 = vmatpush1.bf16.msra.mxu0 0
  %353 = vmatprep.subr.bf16.mxu0 0
  %354 = vmatpush1.bf16.msra.mxu0 0
  %355 = vmatprep.mubr.bf16.mxu0 0
  %356 = vmatmul.mubr.bf16.gmra.mrb[0].mxu0 %v140
  %v357 = vpop.f32.mrb[0].mxu0
  %v358 = vadd.f32 %v273, %v357
  %v359 = vpop.f32.mrb[0].mxu0
  %v360 = vpop.f32.mrb[0].mxu0
  %v361 = vpop.f32.mrb[0].mxu0
  %362 = vdwg.mxu0
  %v363 = vxor.u32 %v358, 2147483648
  %v364 = vmul.f32 %v363, 1.442695
  %v365 = vpow.pop %v364
  %v366 = vadd.f32 %v365, 1.0
  %v367 = vrcp.pop %v366
  %v368 = vmul.f32 1.0, %v367
  %v369 = vmul.f32 %v247, %v368
  %370 = vst [vmem:[%s7] sm:$0xff] %v369
  // Predicated region
  $region30: #{_lambda_.18} parent=0 // pred_check
    _
  $region31: #{_lambda_.18} parent=0 // pred_check_branch
    %372 = sbr.rel (0) target = $region33
  $region32: #{_lambda_.18} parent=0 // pred_region
    _
  $region33: #{_lambda_.18} parent=0 // pred_fallthru
    _
  // Predicated region
  $region34: #{_lambda_.18} parent=0 // pred_check
    _
  $region35: #{_lambda_.18} parent=0 // pred_check_branch
    %374 = sbr.rel (0) target = $region37
  $region36: #{_lambda_.18} parent=0 // pred_region
    _
  $region37: #{_lambda_.18} parent=0 // pred_fallthru
    _

// kernel: _lambda_.20
$region0: #{_lambda_.20}
  #allocation0 [shape = 'u32[]', space=smem, size = 0x4, offset = 0x4, fixed_abs, tag = 'smem constant byte address 0x4 - core index']
  #allocation1 [shape = 'u32[144,128]{1,0:T(1,128)}', space=vmem, size = 0x12000, scoped, tag = 'internal scratch']
  #allocation2 [shape = 'f32[2,32]{1,0:T(2,128)}', space=vmem, size = 0x400, scoped, tag = 'scratch operand']
  #allocation3 [shape = 'f32[2,32]{1,0:T(2,128)}', space=vmem, size = 0x400, scoped, tag = 'scratch operand']
  %s0 = inlined_call_operand.vmem [shape: f32[3,2,128], index: 0, kind: input, shape index: {}]
  %s1 = inlined_call_operand.vmem [shape: bf16[32,128], index: 1, kind: input, shape index: {}]
  %s2 = inlined_call_operand.vmem [shape: f32[3,2,32], index: 2, kind: output, shape index: {}]
  %s3 = sld [smem:[#allocation0]]
  $region45: #{_lambda_.20} parent=0
    _
  %s5 = ssub.s32 1, %s3
  %s6 = scalar_select 0, %s5, %s3
  loop: start=0, step=1, limit=5
  $region2: #{_lambda_.20} parent=0 // loop_pre_header
    _
  $region3: #{_lambda_.20} parent=0 // loop_header
    %s8 = sphi 0, %s12
    %p9 = scmp.ge.s32.totalorder %s8, 5
    %s18 = sphi 0, %s20
    %s21 = sphi 0, %s18
    %s22 = sphi 0, %s21
    %s38 = sphi 0, %s22
    %s42 = sphi 0, %s42
    %s44 = sphi 0, %s42
    %s45 = sphi 0, %s44
    %s59 = sphi 0, %s45
    %s65 = sphi 0, %s67
    %s68 = sphi 0, %s65
    %s69 = sphi 0, %s68
    %s85 = sphi 0, %s69
  $region4: #{_lambda_.20} parent=0 // loop_header_branch
    %11 = sbr.rel (%p9) target = $region8
  $region5: #{_lambda_.20} parent=0 // loop_body
    %s13 = ssub.s32 %s8, 1
    %s14 = ssub.s32 %s8, 2
    %s15 = sadd.s32 %s8, 1
    %s16 = ssub.s32 %s8, %s15
    %p17 = scmp.eq.s32.totalorder %s16, 0
    %s19 = sadd.s32 %s18, 1
    %s20 = scalar_select %p17, %s18, %s19
    %p23 = pneg %p17
    %p24 = scmp.eq.s32.totalorder %s8, 2
    %p25 = por %p23, %p24
    %p26 = scmp.ne.s32.totalorder %s18, %s21
    %p27 = scmp.eq.s32.totalorder %s8, 0
    %p28 = por %p26, %p27
    %p29 = scmp.ne.s32.totalorder %s18, %s21
    %p30 = scmp.eq.s32.totalorder %s13, 2
    %p31 = por %p29, %p30
    %p32 = scmp.ne.s32.totalorder %s21, %s22
    %p33 = scmp.eq.s32.totalorder %s13, 0
    %p34 = por %p32, %p33
    %p35 = scmp.ne.s32.totalorder %s21, %s22
    %p36 = scmp.eq.s32.totalorder %s14, 2
    %p37 = por %p35, %p36
    %p39 = scmp.ne.s32.totalorder %s22, %s38
    %p40 = scmp.eq.s32.totalorder %s14, 0
    %p41 = por %p39, %p40
    %s43 = sadd.s32 %s42, 1
    %p46 = scmp.eq.s32.totalorder %s8, 2
    %p47 = scmp.ne.s32.totalorder %s42, %s44
    %p48 = scmp.eq.s32.totalorder %s8, 0
    %p49 = por %p47, %p48
    %p50 = scmp.ne.s32.totalorder %s42, %s44
    %p51 = scmp.eq.s32.totalorder %s13, 2
    %p52 = por %p50, %p51
    %p53 = scmp.ne.s32.totalorder %s44, %s45
    %p54 = scmp.eq.s32.totalorder %s13, 0
    %p55 = por %p53, %p54
    %p56 = scmp.ne.s32.totalorder %s44, %s45
    %p57 = scmp.eq.s32.totalorder %s14, 2
    %p58 = por %p56, %p57
    %p60 = scmp.ne.s32.totalorder %s45, %s59
    %p61 = scmp.eq.s32.totalorder %s14, 0
    %p62 = por %p60, %p61
    %s63 = ssub.s32 %s8, %s15
    %p64 = scmp.eq.s32.totalorder %s63, 0
    %s66 = sadd.s32 %s65, 1
    %s67 = scalar_select %p64, %s65, %s66
    %p70 = pneg %p64
    %p71 = scmp.eq.s32.totalorder %s8, 2
    %p72 = por %p70, %p71
    %p73 = scmp.ne.s32.totalorder %s65, %s68
    %p74 = scmp.eq.s32.totalorder %s8, 0
    %p75 = por %p73, %p74
    %p76 = scmp.ne.s32.totalorder %s65, %s68
    %p77 = scmp.eq.s32.totalorder %s13, 2
    %p78 = por %p76, %p77
    %p79 = scmp.ne.s32.totalorder %s68, %s69
    %p80 = scmp.eq.s32.totalorder %s13, 0
    %p81 = por %p79, %p80
    %p82 = scmp.ne.s32.totalorder %s68, %s69
    %p83 = scmp.eq.s32.totalorder %s14, 2
    %p84 = por %p82, %p83
    %p86 = scmp.ne.s32.totalorder %s69, %s85
    %p87 = scmp.eq.s32.totalorder %s14, 0
    %p88 = por %p86, %p87
    %p89 = scmp.le.s32.totalorder 1, %s8
    %p90 = scmp.lt.s32.totalorder %s8, 4
    %p91 = pnand %p89, %p90
    %p92 = pneg %p91
    // Predicated region
    $region9: #{_lambda_.20} parent=5 // pred_check
      _
    $region10: #{_lambda_.20} parent=5 // pred_check_branch
      %94 = sbr.rel (%p91) target = $region12
    $region11: #{_lambda_.20} parent=5 // pred_region
      %s95 = ssub.s32 %s8, 1
      // Predicated region
      $region13: #{_lambda_.20} parent=11 // pred_check
        %p96 = pneg %p55
      $region14: #{_lambda_.20} parent=11 // pred_check_branch
        %98 = sbr.rel (%p96) target = $region16
      $region15: #{_lambda_.20} parent=11 // pred_region
        _
      $region16: #{_lambda_.20} parent=11 // pred_fallthru
        _
    $region12: #{_lambda_.20} parent=5 // pred_fallthru
      _
    %p99 = scmp.lt.s32.totalorder %s8, 3
    // Predicated region
    $region17: #{_lambda_.20} parent=5 // pred_check
      %p100 = pneg %p99
    $region18: #{_lambda_.20} parent=5 // pred_check_branch
      %102 = sbr.rel (%p100) target = $region20
    $region19: #{_lambda_.20} parent=5 // pred_region
      // Predicated region
      $region21: #{_lambda_.20} parent=19 // pred_check
        %p103 = pneg %p28
      $region22: #{_lambda_.20} parent=19 // pred_check_branch
        %105 = sbr.rel (%p103) target = $region24
      $region23: #{_lambda_.20} parent=19 // pred_region
        %p106 = scmp.lt.s32.totalorder %s8, 2
        %s107 = scalar_select %p106, %s8, 2
        %s108 = smul.addr %s107, 2
        %s109 = scalar_lea.vmem %s0, %s108
      $region24: #{_lambda_.20} parent=19 // pred_fallthru
        _
    $region20: #{_lambda_.20} parent=5 // pred_fallthru
      _
    %p110 = scmp.le.s32.totalorder 1, %s8
    %p111 = scmp.lt.s32.totalorder %s8, 4
    %p112 = pnand %p110, %p111
    %p113 = pneg %p112
    // Predicated region
    $region25: #{_lambda_.20} parent=5 // pred_check
      _
    $region26: #{_lambda_.20} parent=5 // pred_check_branch
      %115 = sbr.rel (%p112) target = $region28
    $region27: #{_lambda_.20} parent=5 // pred_region
      %s116 = ssub.s32 %s8, 1
      %p117 = scmp.lt.s32.totalorder %s13, 2
      %s118 = scalar_select %p117, %s13, 2
      %s119 = smul.addr %s118, 2
      %s120 = scalar_lea.vmem %s0, %s119
      %p121 = pneg %p34
      %p122 = pneg %p31
      %p123 = pneg %p55
      %p124 = pneg %p52
      %p125 = pneg %p81
      %p126 = pneg %p78
      %p127 = scmp.lt.s32.totalorder %s13, 2
      %s128 = scalar_select %p127, %s13, 2
      %s129 = smul.addr %s128, 2
      %s130 = scalar_lea.vmem %s2, %s129
      %p131 = scmp.lt.s32.totalorder %s13, 2
      %s132 = scalar_select %p131, %s13, 2
      %s133 = smul.addr %s132, 2
      %s134 = scalar_lea.vmem %s0, %s133
      %p135 = scmp.lt.s32.totalorder %s13, 2
      %s136 = scalar_select %p135, %s13, 2
      %s137 = smul.addr %s136, 2
      %s138 = scalar_lea.vmem %s2, %s137
      %p140 = scmp.eq.s32.totalorder %s13, 0
      // Predicated region
      $region29: #{_lambda_.20} parent=27 // pred_check
        %p141 = pneg %p140
      $region30: #{_lambda_.20} parent=27 // pred_check_branch
        %143 = sbr.rel (%p141) target = $region32
      $region31: #{_lambda_.20} parent=27 // pred_region
        %vm144 = vcmask 254976
        %145 = vst.msk [vmem:[#allocation2] sm:$0x3] %vm144, 0.0
        %146 = vst.msk [vmem:[#allocation3] sm:$0x3] %vm144, 0.0
      $region32: #{_lambda_.20} parent=27 // pred_fallthru
        _
      %v147 = vld [vmem:[%s134] sm:$0x3]
      %v148 = vld [vmem:[#allocation2] sm:$0x3]
      %v149 = vpack.c.bf16 %v148, %v148
      %v150 = vld [vmem:[%s1] sm:$0xf]
      %v151 = vld [vmem:[%s1 + $0x4] sm:$0xf]
      %v152 = vld [vmem:[%s1 + $0x8] sm:$0xf]
      %v153 = vld [vmem:[%s1 + $0xc] sm:$0xf]
      %v158 = vunpack.c.l.b16 %v150
      %v159 = vunpack.c.l.b16 %v151
      %v160 = vunpack.c.l.b16 %v152
      %v161 = vunpack.c.l.b16 %v153
      %v162 = vpack.c.b16 %v159, %v158
      %v163 = vpack.c.b16 %v161, %v160
      %vm166 = vcmask 261120
      %v168 = vsel %vm166, %v149, 0
      %170 = vmatprep.subr.bf16.mxu0 0
      %171 = vmatpush1.bf16.msra.mxu0 %v162
      %172 = vmatprep.subr.bf16.mxu0 0
      %173 = vmatpush1.bf16.msra.mxu0 %v163
      %174 = vmatprep.subr.bf16.mxu0 0
      %175 = vmatpush1.bf16.msra.mxu0 0
      %176 = vmatprep.subr.bf16.mxu0 0
      %177 = vmatpush1.bf16.msra.mxu0 0
      %178 = vmatprep.subr.bf16.mxu0 0
      %179 = vmatpush1.bf16.msra.mxu0 0
      %180 = vmatprep.subr.bf16.mxu0 0
      %181 = vmatpush1.bf16.msra.mxu0 0
      %182 = vmatprep.subr.bf16.mxu0 0
      %183 = vmatpush1.bf16.msra.mxu0 0
      %184 = vmatprep.subr.bf16.mxu0 0
      %185 = vmatpush1.bf16.msra.mxu0 0
      %186 = vmatprep.subr.bf16.mxu0 0
      %187 = vmatpush1.bf16.msra.mxu0 0
      %188 = vmatprep.subr.bf16.mxu0 0
      %189 = vmatpush1.bf16.msra.mxu0 0
      %190 = vmatprep.subr.bf16.mxu0 0
      %191 = vmatpush1.bf16.msra.mxu0 0
      %192 = vmatprep.subr.bf16.mxu0 0
      %193 = vmatpush1.bf16.msra.mxu0 0
      %194 = vmatprep.subr.bf16.mxu0 0
      %195 = vmatpush1.bf16.msra.mxu0 0
      %196 = vmatprep.subr.bf16.mxu0 0
      %197 = vmatpush1.bf16.msra.mxu0 0
      %198 = vmatprep.subr.bf16.mxu0 0
      %199 = vmatpush1.bf16.msra.mxu0 0
      %200 = vmatprep.subr.bf16.mxu0 0
      %201 = vmatpush1.bf16.msra.mxu0 0
      %202 = vmatprep.mubr.bf16.mxu0 0
      %203 = vmatmul.mubr.bf16.gmra.mrb[0].mxu0 %v168
      %v204 = vpop.f32.mrb[0].mxu0
      %v205 = vadd.f32 0.0, %v204
      %v206 = vpop.f32.mrb[0].mxu0
      %v207 = vpop.f32.mrb[0].mxu0
      %v208 = vpop.f32.mrb[0].mxu0
      %209 = vdwg.mxu0
      %v210 = vadd.f32 %v147, %v205
      %v211 = vxor.u32 %v210, 2147483648
      %v212 = vmul.f32 %v211, 1.442695
      %v213 = vpow.pop %v212
      %v214 = vadd.f32 %v213, 1.0
      %v215 = vrcp.pop %v214
      %v216 = vmul.f32 1.0, %v215
      %v217 = vtanh.pop %v210
      %v218 = vld [vmem:[#allocation3] sm:$0x3]
      %220 = vrot.lane.b32.xlu0 %v218, 32
      %v221 = vpop.permute.xlu0 %220
      %v223 = vmul.f32 %v216, %v221
      %225 = vrot.lane.b32.xlu0 %v217, 64
      %v226 = vpop.permute.xlu0 %225
      %v228 = vmul.f32 %v216, %v226
      %230 = vrot.lane.b32.xlu0 %v228, 32
      %v231 = vpop.permute.xlu0 %230
      %v233 = vadd.f32 %v223, %v231
      %235 = vrot.lane.b32.xlu0 %v233, 96
      %v236 = vpop.permute.xlu0 %235
      %vm238 = vcmask 254976
      %239 = vst.msk [vmem:[#allocation3] sm:$0x3] %vm238, %v236
      %v240 = vtanh.pop %v233
      %242 = vrot.lane.b32.xlu0 %v240, 64
      %v243 = vpop.permute.xlu0 %242
      %v245 = vmul.f32 %v216, %v243
      %247 = vrot.lane.b32.xlu0 %v245, 32
      %v248 = vpop.permute.xlu0 %247
      %250 = vst.msk [vmem:[#allocation2] sm:$0x3] %vm238, %v248
      %251 = vst.msk [vmem:[%s138] sm:$0x3] %vm238, %v248
      %p252 = scmp.lt.s32.totalorder %s13, 2
      %s253 = scalar_select %p252, %s13, 2
      %s254 = smul.addr %s253, 2
      %s255 = scalar_lea.vmem %s2, %s254
      // Predicated region
      $region33: #{_lambda_.20} parent=27 // pred_check
        %p256 = pneg %p78
      $region34: #{_lambda_.20} parent=27 // pred_check_branch
        %258 = sbr.rel (%p256) target = $region36
      $region35: #{_lambda_.20} parent=27 // pred_region
        _
      $region36: #{_lambda_.20} parent=27 // pred_fallthru
        _
    $region28: #{_lambda_.20} parent=5 // pred_fallthru
      _
    %p259 = scmp.le.s32.totalorder 2, %s8
    // Predicated region
    $region37: #{_lambda_.20} parent=5 // pred_check
      %p260 = pneg %p259
    $region38: #{_lambda_.20} parent=5 // pred_check_branch
      %262 = sbr.rel (%p260) target = $region40
    $region39: #{_lambda_.20} parent=5 // pred_region
      %s263 = ssub.s32 %s8, 2
      // Predicated region
      $region41: #{_lambda_.20} parent=39 // pred_check
        %p264 = pneg %p84
      $region42: #{_lambda_.20} parent=39 // pred_check_branch
        %266 = sbr.rel (%p264) target = $region44
      $region43: #{_lambda_.20} parent=39 // pred_region
        %p267 = scmp.lt.s32.totalorder %s14, 2
        %s268 = scalar_select %p267, %s14, 2
        %s269 = smul.addr %s268, 2
        %s270 = scalar_lea.vmem %s2, %s269
      $region44: #{_lambda_.20} parent=39 // pred_fallthru
        _
    $region40: #{_lambda_.20} parent=5 // pred_fallthru
      _
  $region6: #{_lambda_.20} parent=0 // loop_footer
    %s12 = sadd.s32 1, %s8
  $region7: #{_lambda_.20} parent=0 // loop_footer_branch
    %7 = sbr.rel target = $region3
  $region8: #{_lambda_.20} parent=0 // loop_exit
    _

// kernel: _lambda_.23
$region0: #{_lambda_.23}
  #allocation0 [shape = 'u32[]', space=smem, size = 0x4, offset = 0x4, fixed_abs, tag = 'smem constant byte address 0x4 - core index']
  #allocation1 [shape = 'u32[144,128]{1,0:T(1,128)}', space=vmem, size = 0x12000, scoped, tag = 'internal scratch']
  %s0 = inlined_call_operand.vmem [shape: bf16[8,32], index: 0, kind: input, shape index: {}]
  %s1 = inlined_call_operand.vmem [shape: bf16[32,128], index: 1, kind: input, shape index: {}]
  %s2 = inlined_call_operand.vmem [shape: f32[1,128], index: 2, kind: input, shape index: {}]
  %s3 = inlined_call_operand.vmem [shape: bf16[32,128], index: 3, kind: input, shape index: {}]
  %s4 = inlined_call_operand.vmem [shape: f32[1,128], index: 4, kind: input, shape index: {}]
  %s5 = inlined_call_operand.vmem [shape: bf16[128,128], index: 5, kind: input, shape index: {}]
  %s6 = inlined_call_operand.vmem [shape: f32[8,128], index: 6, kind: output, shape index: {}]
  %s7 = sld [smem:[#allocation0]]
  $region34: #{_lambda_.23} parent=0
    _
  %s9 = ssub.s32 1, %s7
  %s10 = scalar_select 0, %s9, %s7
  // Predicated region
  $region2: #{_lambda_.23} parent=0 // pred_check
    _
  $region3: #{_lambda_.23} parent=0 // pred_check_branch
    %12 = sbr.rel (0) target = $region5
  $region4: #{_lambda_.23} parent=0 // pred_region
    _
  $region5: #{_lambda_.23} parent=0 // pred_fallthru
    _
  // Predicated region
  $region6: #{_lambda_.23} parent=0 // pred_check
    _
  $region7: #{_lambda_.23} parent=0 // pred_check_branch
    %14 = sbr.rel (0) target = $region9
  $region8: #{_lambda_.23} parent=0 // pred_region
    _
  $region9: #{_lambda_.23} parent=0 // pred_fallthru
    _
  // Predicated region
  $region10: #{_lambda_.23} parent=0 // pred_check
    _
  $region11: #{_lambda_.23} parent=0 // pred_check_branch
    %16 = sbr.rel (0) target = $region13
  $region12: #{_lambda_.23} parent=0 // pred_region
    _
  $region13: #{_lambda_.23} parent=0 // pred_fallthru
    _
  // Predicated region
  $region14: #{_lambda_.23} parent=0 // pred_check
    _
  $region15: #{_lambda_.23} parent=0 // pred_check_branch
    %18 = sbr.rel (0) target = $region17
  $region16: #{_lambda_.23} parent=0 // pred_region
    _
  $region17: #{_lambda_.23} parent=0 // pred_fallthru
    _
  // Predicated region
  $region18: #{_lambda_.23} parent=0 // pred_check
    _
  $region19: #{_lambda_.23} parent=0 // pred_check_branch
    %20 = sbr.rel (0) target = $region21
  $region20: #{_lambda_.23} parent=0 // pred_region
    _
  $region21: #{_lambda_.23} parent=0 // pred_fallthru
    _
  // Predicated region
  $region22: #{_lambda_.23} parent=0 // pred_check
    _
  $region23: #{_lambda_.23} parent=0 // pred_check_branch
    %22 = sbr.rel (0) target = $region25
  $region24: #{_lambda_.23} parent=0 // pred_region
    _
  $region25: #{_lambda_.23} parent=0 // pred_fallthru
    _
  %v24 = vld [vmem:[%s0] sm:$0xf]
  %v25 = vld [vmem:[%s1] sm:$0xf]
  %v26 = vld [vmem:[%s1 + $0x4] sm:$0xf]
  %v27 = vld [vmem:[%s1 + $0x8] sm:$0xf]
  %v28 = vld [vmem:[%s1 + $0xc] sm:$0xf]
  %v29 = vld [vmem:[%s2] sm:$0x1]
  %v31 = vlaneseq
  %v32 = vshrl.u32 %v31, 7
  %v33 = vsub.s32 0, %v32
  %v34 = vrot.slane %v29, %v33
  %v40 = vunpack.c.l.b16 %v25
  %v41 = vunpack.c.l.b16 %v26
  %v42 = vunpack.c.l.b16 %v27
  %v43 = vunpack.c.l.b16 %v28
  %v44 = vpack.c.b16 %v41, %v40
  %v45 = vpack.c.b16 %v43, %v42
  %vm48 = vcmask 261120
  %v50 = vsel %vm48, %v24, 0
  %52 = vmatprep.subr.bf16.mxu0 0
  %53 = vmatpush1.bf16.msra.mxu0 %v44
  %54 = vmatprep.subr.bf16.mxu0 0
  %55 = vmatpush1.bf16.msra.mxu0 %v45
  %56 = vmatprep.subr.bf16.mxu0 0
  %57 = vmatpush1.bf16.msra.mxu0 0
  %58 = vmatprep.subr.bf16.mxu0 0
  %59 = vmatpush1.bf16.msra.mxu0 0
  %60 = vmatprep.subr.bf16.mxu0 0
  %61 = vmatpush1.bf16.msra.mxu0 0
  %62 = vmatprep.subr.bf16.mxu0 0
  %63 = vmatpush1.bf16.msra.mxu0 0
  %64 = vmatprep.subr.bf16.mxu0 0
  %65 = vmatpush1.bf16.msra.mxu0 0
  %66 = vmatprep.subr.bf16.mxu0 0
  %67 = vmatpush1.bf16.msra.mxu0 0
  %68 = vmatprep.subr.bf16.mxu0 0
  %69 = vmatpush1.bf16.msra.mxu0 0
  %70 = vmatprep.subr.bf16.mxu0 0
  %71 = vmatpush1.bf16.msra.mxu0 0
  %72 = vmatprep.subr.bf16.mxu0 0
  %73 = vmatpush1.bf16.msra.mxu0 0
  %74 = vmatprep.subr.bf16.mxu0 0
  %75 = vmatpush1.bf16.msra.mxu0 0
  %76 = vmatprep.subr.bf16.mxu0 0
  %77 = vmatpush1.bf16.msra.mxu0 0
  %78 = vmatprep.subr.bf16.mxu0 0
  %79 = vmatpush1.bf16.msra.mxu0 0
  %80 = vmatprep.subr.bf16.mxu0 0
  %81 = vmatpush1.bf16.msra.mxu0 0
  %82 = vmatprep.subr.bf16.mxu0 0
  %83 = vmatpush1.bf16.msra.mxu0 0
  %84 = vmatprep.mubr.bf16.mxu0 0
  %85 = vmatmul.mubr.bf16.gmra.mrb[0].mxu0 %v50
  %v86 = vpop.f32.mrb[0].mxu0
  %v87 = vadd.f32 %v34, %v86
  %v88 = vpop.f32.mrb[0].mxu0
  %v89 = vpop.f32.mrb[0].mxu0
  %v90 = vpop.f32.mrb[0].mxu0
  %91 = vdwg.mxu0
  %v92 = vld [vmem:[%s3] sm:$0xf]
  %v93 = vld [vmem:[%s3 + $0x4] sm:$0xf]
  %v94 = vld [vmem:[%s3 + $0x8] sm:$0xf]
  %v95 = vld [vmem:[%s3 + $0xc] sm:$0xf]
  %v96 = vld [vmem:[%s4] sm:$0x1]
  %v98 = vlaneseq
  %v99 = vshrl.u32 %v98, 7
  %v100 = vsub.s32 0, %v99
  %v101 = vrot.slane %v96, %v100
  %v107 = vunpack.c.l.b16 %v92
  %v108 = vunpack.c.l.b16 %v93
  %v109 = vunpack.c.l.b16 %v94
  %v110 = vunpack.c.l.b16 %v95
  %v111 = vpack.c.b16 %v108, %v107
  %v112 = vpack.c.b16 %v110, %v109
  %115 = vmatprep.subr.bf16.mxu0 0
  %116 = vmatpush1.bf16.msra.mxu0 %v111
  %117 = vmatprep.subr.bf16.mxu0 0
  %118 = vmatpush1.bf16.msra.mxu0 %v112
  %119 = vmatprep.subr.bf16.mxu0 0
  %120 = vmatpush1.bf16.msra.mxu0 0
  %121 = vmatprep.subr.bf16.mxu0 0
  %122 = vmatpush1.bf16.msra.mxu0 0
  %123 = vmatprep.subr.bf16.mxu0 0
  %124 = vmatpush1.bf16.msra.mxu0 0
  %125 = vmatprep.subr.bf16.mxu0 0
  %126 = vmatpush1.bf16.msra.mxu0 0
  %127 = vmatprep.subr.bf16.mxu0 0
  %128 = vmatpush1.bf16.msra.mxu0 0
  %129 = vmatprep.subr.bf16.mxu0 0
  %130 = vmatpush1.bf16.msra.mxu0 0
  %131 = vmatprep.subr.bf16.mxu0 0
  %132 = vmatpush1.bf16.msra.mxu0 0
  %133 = vmatprep.subr.bf16.mxu0 0
  %134 = vmatpush1.bf16.msra.mxu0 0
  %135 = vmatprep.subr.bf16.mxu0 0
  %136 = vmatpush1.bf16.msra.mxu0 0
  %137 = vmatprep.subr.bf16.mxu0 0
  %138 = vmatpush1.bf16.msra.mxu0 0
  %139 = vmatprep.subr.bf16.mxu0 0
  %140 = vmatpush1.bf16.msra.mxu0 0
  %141 = vmatprep.subr.bf16.mxu0 0
  %142 = vmatpush1.bf16.msra.mxu0 0
  %143 = vmatprep.subr.bf16.mxu0 0
  %144 = vmatpush1.bf16.msra.mxu0 0
  %145 = vmatprep.subr.bf16.mxu0 0
  %146 = vmatpush1.bf16.msra.mxu0 0
  %147 = vmatprep.mubr.bf16.mxu0 0
  %148 = vmatmul.mubr.bf16.gmra.mrb[0].mxu0 %v50
  %v149 = vpop.f32.mrb[0].mxu0
  %v150 = vadd.f32 %v101, %v149
  %v151 = vpop.f32.mrb[0].mxu0
  %v152 = vpop.f32.mrb[0].mxu0
  %v153 = vpop.f32.mrb[0].mxu0
  %154 = vdwg.mxu0
  %v155 = vxor.u32 %v150, 2147483648
  %v156 = vmul.f32 %v155, 1.442695
  %v157 = vpow.pop %v156
  %v158 = vadd.f32 %v157, 1.0
  %v159 = vrcp.pop %v158
  %v160 = vmul.f32 1.0, %v159
  %v161 = vmul.f32 %v87, %v160
  %v162 = vpack.c.bf16 %v161, %v161
  %v163 = vld [vmem:[%s5] sm:$0xf]
  %v164 = vld [vmem:[%s5 + $0x4] sm:$0xf]
  %v165 = vld [vmem:[%s5 + $0x8] sm:$0xf]
  %v166 = vld [vmem:[%s5 + $0xc] sm:$0xf]
  %v167 = vld [vmem:[%s5 + $0x10] sm:$0xf]
  %v168 = vld [vmem:[%s5 + $0x14] sm:$0xf]
  %v169 = vld [vmem:[%s5 + $0x18] sm:$0xf]
  %v170 = vld [vmem:[%s5 + $0x1c] sm:$0xf]
  %v171 = vld [vmem:[%s5 + $0x20] sm:$0xf]
  %v172 = vld [vmem:[%s5 + $0x24] sm:$0xf]
  %v173 = vld [vmem:[%s5 + $0x28] sm:$0xf]
  %v174 = vld [vmem:[%s5 + $0x2c] sm:$0xf]
  %v175 = vld [vmem:[%s5 + $0x30] sm:$0xf]
  %v176 = vld [vmem:[%s5 + $0x34] sm:$0xf]
  %v177 = vld [vmem:[%s5 + $0x38] sm:$0xf]
  %v178 = vld [vmem:[%s5 + $0x3c] sm:$0xf]
  %v195 = vunpack.c.l.b16 %v163
  %v196 = vunpack.c.l.b16 %v164
  %v197 = vunpack.c.l.b16 %v165
  %v198 = vunpack.c.l.b16 %v166
  %v199 = vunpack.c.l.b16 %v167
  %v200 = vunpack.c.l.b16 %v168
  %v201 = vunpack.c.l.b16 %v169
  %v202 = vunpack.c.l.b16 %v170
  %v203 = vunpack.c.l.b16 %v171
  %v204 = vunpack.c.l.b16 %v172
  %v205 = vunpack.c.l.b16 %v173
  %v206 = vunpack.c.l.b16 %v174
  %v207 = vunpack.c.l.b16 %v175
  %v208 = vunpack.c.l.b16 %v176
  %v209 = vunpack.c.l.b16 %v177
  %v210 = vunpack.c.l.b16 %v178
  %v211 = vpack.c.b16 %v196, %v195
  %v212 = vpack.c.b16 %v198, %v197
  %v213 = vpack.c.b16 %v200, %v199
  %v214 = vpack.c.b16 %v202, %v201
  %v215 = vpack.c.b16 %v204, %v203
  %v216 = vpack.c.b16 %v206, %v205
  %v217 = vpack.c.b16 %v208, %v207
  %v218 = vpack.c.b16 %v210, %v209
  %227 = vmatprep.subr.bf16.mxu0 0
  %228 = vmatpush1.bf16.msra.mxu0 %v211
  %229 = vmatprep.subr.bf16.mxu0 0
  %230 = vmatpush1.bf16.msra.mxu0 %v212
  %231 = vmatprep.subr.bf16.mxu0 0
  %232 = vmatpush1.bf16.msra.mxu0 %v213
  %233 = vmatprep.subr.bf16.mxu0 0
  %234 = vmatpush1.bf16.msra.mxu0 %v214
  %235 = vmatprep.subr.bf16.mxu0 0
  %236 = vmatpush1.bf16.msra.mxu0 %v215
  %237 = vmatprep.subr.bf16.mxu0 0
  %238 = vmatpush1.bf16.msra.mxu0 %v216
  %239 = vmatprep.subr.bf16.mxu0 0
  %240 = vmatpush1.bf16.msra.mxu0 %v217
  %241 = vmatprep.subr.bf16.mxu0 0
  %242 = vmatpush1.bf16.msra.mxu0 %v218
  %243 = vmatprep.subr.bf16.mxu0 0
  %244 = vmatpush1.bf16.msra.mxu0 0
  %245 = vmatprep.subr.bf16.mxu0 0
  %246 = vmatpush1.bf16.msra.mxu0 0
  %247 = vmatprep.subr.bf16.mxu0 0
  %248 = vmatpush1.bf16.msra.mxu0 0
  %249 = vmatprep.subr.bf16.mxu0 0
  %250 = vmatpush1.bf16.msra.mxu0 0
  %251 = vmatprep.subr.bf16.mxu0 0
  %252 = vmatpush1.bf16.msra.mxu0 0
  %253 = vmatprep.subr.bf16.mxu0 0
  %254 = vmatpush1.bf16.msra.mxu0 0
  %255 = vmatprep.subr.bf16.mxu0 0
  %256 = vmatpush1.bf16.msra.mxu0 0
  %257 = vmatprep.subr.bf16.mxu0 0
  %258 = vmatpush1.bf16.msra.mxu0 0
  %259 = vmatprep.mubr.bf16.mxu0 0
  %260 = vmatmul.mubr.bf16.gmra.mrb[0].mxu0 %v162
  %v261 = vpop.f32.mrb[0].mxu0
  %v262 = vadd.f32 0.0, %v261
  %v263 = vpop.f32.mrb[0].mxu0
  %v264 = vpop.f32.mrb[0].mxu0
  %v265 = vpop.f32.mrb[0].mxu0
  %266 = vdwg.mxu0
  %267 = vst [vmem:[%s6] sm:$0xff] %v262
  // Predicated region
  $region26: #{_lambda_.23} parent=0 // pred_check
    _
  $region27: #{_lambda_.23} parent=0 // pred_check_branch
    %269 = sbr.rel (0) target = $region29
  $region28: #{_lambda_.23} parent=0 // pred_region
    _
  $region29: #{_lambda_.23} parent=0 // pred_fallthru
    _
  // Predicated region
  $region30: #{_lambda_.23} parent=0 // pred_check
    _
  $region31: #{_lambda_.23} parent=0 // pred_check_branch
    %271 = sbr.rel (0) target = $region33
  $region32: #{_lambda_.23} parent=0 // pred_region
    _
  $region33: #{_lambda_.23} parent=0 // pred_fallthru
    _

// kernel: _lambda_.24
$region0: #{_lambda_.24}
  #allocation0 [shape = 'u32[]', space=smem, size = 0x4, offset = 0x4, fixed_abs, tag = 'smem constant byte address 0x4 - core index']
  #allocation1 [shape = 'u32[144,128]{1,0:T(1,128)}', space=vmem, size = 0x12000, scoped, tag = 'internal scratch']
  %s0 = inlined_call_operand.vmem [shape: bf16[32,16], index: 0, kind: input, shape index: {}]
  %s1 = inlined_call_operand.vmem [shape: bf16[16,128], index: 1, kind: input, shape index: {}]
  %s2 = inlined_call_operand.vmem [shape: f32[1,128], index: 2, kind: input, shape index: {}]
  %s3 = inlined_call_operand.vmem [shape: bf16[16,128], index: 3, kind: input, shape index: {}]
  %s4 = inlined_call_operand.vmem [shape: f32[1,128], index: 4, kind: input, shape index: {}]
  %s5 = inlined_call_operand.vmem [shape: bf16[128,128], index: 5, kind: input, shape index: {}]
  %s6 = inlined_call_operand.vmem [shape: f32[32,128], index: 6, kind: output, shape index: {}]
  %s7 = sld [smem:[#allocation0]]
  $region34: #{_lambda_.24} parent=0
    _
  %s9 = ssub.s32 1, %s7
  %s10 = scalar_select 0, %s9, %s7
  // Predicated region
  $region2: #{_lambda_.24} parent=0 // pred_check
    _
  $region3: #{_lambda_.24} parent=0 // pred_check_branch
    %12 = sbr.rel (0) target = $region5
  $region4: #{_lambda_.24} parent=0 // pred_region
    _
  $region5: #{_lambda_.24} parent=0 // pred_fallthru
    _
  // Predicated region
  $region6: #{_lambda_.24} parent=0 // pred_check
    _
  $region7: #{_lambda_.24} parent=0 // pred_check_branch
    %14 = sbr.rel (0) target = $region9
  $region8: #{_lambda_.24} parent=0 // pred_region
    _
  $region9: #{_lambda_.24} parent=0 // pred_fallthru
    _
  // Predicated region
  $region10: #{_lambda_.24} parent=0 // pred_check
    _
  $region11: #{_lambda_.24} parent=0 // pred_check_branch
    %16 = sbr.rel (0) target = $region13
  $region12: #{_lambda_.24} parent=0 // pred_region
    _
  $region13: #{_lambda_.24} parent=0 // pred_fallthru
    _
  // Predicated region
  $region14: #{_lambda_.24} parent=0 // pred_check
    _
  $region15: #{_lambda_.24} parent=0 // pred_check_branch
    %18 = sbr.rel (0) target = $region17
  $region16: #{_lambda_.24} parent=0 // pred_region
    _
  $region17: #{_lambda_.24} parent=0 // pred_fallthru
    _
  // Predicated region
  $region18: #{_lambda_.24} parent=0 // pred_check
    _
  $region19: #{_lambda_.24} parent=0 // pred_check_branch
    %20 = sbr.rel (0) target = $region21
  $region20: #{_lambda_.24} parent=0 // pred_region
    _
  $region21: #{_lambda_.24} parent=0 // pred_fallthru
    _
  // Predicated region
  $region22: #{_lambda_.24} parent=0 // pred_check
    _
  $region23: #{_lambda_.24} parent=0 // pred_check_branch
    %22 = sbr.rel (0) target = $region25
  $region24: #{_lambda_.24} parent=0 // pred_region
    _
  $region25: #{_lambda_.24} parent=0 // pred_fallthru
    _
  %v24 = vld [vmem:[%s0] sm:$0xf]
  %v25 = vld [vmem:[%s0 + $0x4] sm:$0xf]
  %v26 = vld [vmem:[%s0 + $0x8] sm:$0xf]
  %v27 = vld [vmem:[%s0 + $0xc] sm:$0xf]
  %v28 = vld [vmem:[%s1] sm:$0xf]
  %v29 = vld [vmem:[%s1 + $0x4] sm:$0xf]
  %v30 = vld [vmem:[%s2] sm:$0x1]
  %v32 = vlaneseq
  %v33 = vshrl.u32 %v32, 7
  %v34 = vsub.s32 0, %v33
  %v35 = vrot.slane %v30, %v34
  %v41 = vunpack.c.l.b16 %v24
  %v42 = vunpack.c.l.b16 %v25
  %v43 = vunpack.c.l.b16 %v26
  %v44 = vunpack.c.l.b16 %v27
  %v45 = vpack.c.b16 %v42, %v41
  %v46 = vpack.c.b16 %v44, %v43
  %v49 = vunpack.c.l.b16 %v28
  %v50 = vunpack.c.l.b16 %v29
  %v51 = vpack.c.b16 %v50, %v49
  %vm53 = vcmask 130048
  %v55 = vsel %vm53, %v45, 0
  %v58 = vsel %vm53, %v46, 0
  %60 = vmatprep.subr.bf16.mxu0 0
  %61 = vmatpush1.bf16.msra.mxu0 %v51
  %62 = vmatprep.subr.bf16.mxu0 0
  %63 = vmatpush1.bf16.msra.mxu0 0
  %64 = vmatprep.subr.bf16.mxu0 0
  %65 = vmatpush1.bf16.msra.mxu0 0
  %66 = vmatprep.subr.bf16.mxu0 0
  %67 = vmatpush1.bf16.msra.mxu0 0
  %68 = vmatprep.subr.bf16.mxu0 0
  %69 = vmatpush1.bf16.msra.mxu0 0
  %70 = vmatprep.subr.bf16.mxu0 0
  %71 = vmatpush1.bf16.msra.mxu0 0
  %72 = vmatprep.subr.bf16.mxu0 0
  %73 = vmatpush1.bf16.msra.mxu0 0
  %74 = vmatprep.subr.bf16.mxu0 0
  %75 = vmatpush1.bf16.msra.mxu0 0
  %76 = vmatprep.subr.bf16.mxu0 0
  %77 = vmatpush1.bf16.msra.mxu0 0
  %78 = vmatprep.subr.bf16.mxu0 0
  %79 = vmatpush1.bf16.msra.mxu0 0
  %80 = vmatprep.subr.bf16.mxu0 0
  %81 = vmatpush1.bf16.msra.mxu0 0
  %82 = vmatprep.subr.bf16.mxu0 0
  %83 = vmatpush1.bf16.msra.mxu0 0
  %84 = vmatprep.subr.bf16.mxu0 0
  %85 = vmatpush1.bf16.msra.mxu0 0
  %86 = vmatprep.subr.bf16.mxu0 0
  %87 = vmatpush1.bf16.msra.mxu0 0
  %88 = vmatprep.subr.bf16.mxu0 0
  %89 = vmatpush1.bf16.msra.mxu0 0
  %90 = vmatprep.subr.bf16.mxu0 0
  %91 = vmatpush1.bf16.msra.mxu0 0
  %92 = vmatprep.mubr.bf16.mxu0 0
  %93 = vmatmul.mubr.bf16.gmra.mrb[0].mxu0 %v55
  %v94 = vpop.f32.mrb[0].mxu0
  %v95 = vadd.f32 %v35, %v94
  %v96 = vpop.f32.mrb[0].mxu0
  %v97 = vpop.f32.mrb[0].mxu0
  %v98 = vadd.f32 %v35, %v97
  %v99 = vpop.f32.mrb[0].mxu0
  %100 = vmatprep.mubr.bf16.mxu0 0
  %101 = vmatmul.mubr.bf16.gmra.mrb[0].mxu0 %v58
  %v102 = vpop.f32.mrb[0].mxu0
  %v103 = vadd.f32 %v35, %v102
  %v104 = vpop.f32.mrb[0].mxu0
  %v105 = vpop.f32.mrb[0].mxu0
  %v106 = vadd.f32 %v35, %v105
  %v107 = vpop.f32.mrb[0].mxu0
  %108 = vdwg.mxu0
  %v109 = vld [vmem:[%s3] sm:$0xf]
  %v110 = vld [vmem:[%s3 + $0x4] sm:$0xf]
  %v111 = vld [vmem:[%s4] sm:$0x1]
  %v113 = vlaneseq
  %v114 = vshrl.u32 %v113, 7
  %v115 = vsub.s32 0, %v114
  %v116 = vrot.slane %v111, %v115
  %v120 = vunpack.c.l.b16 %v109
  %v121 = vunpack.c.l.b16 %v110
  %v122 = vpack.c.b16 %v121, %v120
  %124 = vmatprep.subr.bf16.mxu0 0
  %125 = vmatpush1.bf16.msra.mxu0 %v122
  %126 = vmatprep.subr.bf16.mxu0 0
  %127 = vmatpush1.bf16.msra.mxu0 0
  %128 = vmatprep.subr.bf16.mxu0 0
  %129 = vmatpush1.bf16.msra.mxu0 0
  %130 = vmatprep.subr.bf16.mxu0 0
  %131 = vmatpush1.bf16.msra.mxu0 0
  %132 = vmatprep.subr.bf16.mxu0 0
  %133 = vmatpush1.bf16.msra.mxu0 0
  %134 = vmatprep.subr.bf16.mxu0 0
  %135 = vmatpush1.bf16.msra.mxu0 0
  %136 = vmatprep.subr.bf16.mxu0 0
  %137 = vmatpush1.bf16.msra.mxu0 0
  %138 = vmatprep.subr.bf16.mxu0 0
  %139 = vmatpush1.bf16.msra.mxu0 0
  %140 = vmatprep.subr.bf16.mxu0 0
  %141 = vmatpush1.bf16.msra.mxu0 0
  %142 = vmatprep.subr.bf16.mxu0 0
  %143 = vmatpush1.bf16.msra.mxu0 0
  %144 = vmatprep.subr.bf16.mxu0 0
  %145 = vmatpush1.bf16.msra.mxu0 0
  %146 = vmatprep.subr.bf16.mxu0 0
  %147 = vmatpush1.bf16.msra.mxu0 0
  %148 = vmatprep.subr.bf16.mxu0 0
  %149 = vmatpush1.bf16.msra.mxu0 0
  %150 = vmatprep.subr.bf16.mxu0 0
  %151 = vmatpush1.bf16.msra.mxu0 0
  %152 = vmatprep.subr.bf16.mxu0 0
  %153 = vmatpush1.bf16.msra.mxu0 0
  %154 = vmatprep.subr.bf16.mxu0 0
  %155 = vmatpush1.bf16.msra.mxu0 0
  %156 = vmatprep.mubr.bf16.mxu0 0
  %157 = vmatmul.mubr.bf16.gmra.mrb[0].mxu0 %v55
  %v158 = vpop.f32.mrb[0].mxu0
  %v159 = vadd.f32 %v116, %v158
  %v160 = vpop.f32.mrb[0].mxu0
  %v161 = vpop.f32.mrb[0].mxu0
  %v162 = vadd.f32 %v116, %v161
  %v163 = vpop.f32.mrb[0].mxu0
  %164 = vmatprep.mubr.bf16.mxu0 0
  %165 = vmatmul.mubr.bf16.gmra.mrb[0].mxu0 %v58
  %v166 = vpop.f32.mrb[0].mxu0
  %v167 = vadd.f32 %v116, %v166
  %v168 = vpop.f32.mrb[0].mxu0
  %v169 = vpop.f32.mrb[0].mxu0
  %v170 = vadd.f32 %v116, %v169
  %v171 = vpop.f32.mrb[0].mxu0
  %172 = vdwg.mxu0
  %v173 = vxor.u32 %v159, 2147483648
  %v174 = vxor.u32 %v162, 2147483648
  %v175 = vxor.u32 %v167, 2147483648
  %v176 = vxor.u32 %v170, 2147483648
  %v177 = vmul.f32 %v173, 1.442695
  %v178 = vpow.pop %v177
  %v179 = vmul.f32 %v174, 1.442695
  %v180 = vpow.pop %v179
  %v181 = vmul.f32 %v175, 1.442695
  %v182 = vpow.pop %v181
  %v183 = vmul.f32 %v176, 1.442695
  %v184 = vpow.pop %v183
  %v185 = vadd.f32 %v178, 1.0
  %v186 = vadd.f32 %v180, 1.0
  %v187 = vadd.f32 %v182, 1.0
  %v188 = vadd.f32 %v184, 1.0
  %v189 = vrcp.pop %v185
  %v190 = vmul.f32 1.0, %v189
  %v191 = vrcp.pop %v186
  %v192 = vmul.f32 1.0, %v191
  %v193 = vrcp.pop %v187
  %v194 = vmul.f32 1.0, %v193
  %v195 = vrcp.pop %v188
  %v196 = vmul.f32 1.0, %v195
  %v197 = vmul.f32 %v95, %v190
  %v198 = vmul.f32 %v98, %v192
  %v199 = vmul.f32 %v103, %v194
  %v200 = vmul.f32 %v106, %v196
  %v201 = vpack.c.bf16 %v198, %v197
  %v202 = vpack.c.bf16 %v200, %v199
  %v203 = vld [vmem:[%s5] sm:$0xf]
  %v204 = vld [vmem:[%s5 + $0x4] sm:$0xf]
  %v205 = vld [vmem:[%s5 + $0x8] sm:$0xf]
  %v206 = vld [vmem:[%s5 + $0xc] sm:$0xf]
  %v207 = vld [vmem:[%s5 + $0x10] sm:$0xf]
  %v208 = vld [vmem:[%s5 + $0x14] sm:$0xf]
  %v209 = vld [vmem:[%s5 + $0x18] sm:$0xf]
  %v210 = vld [vmem:[%s5 + $0x1c] sm:$0xf]
  %v211 = vld [vmem:[%s5 + $0x20] sm:$0xf]
  %v212 = vld [vmem:[%s5 + $0x24] sm:$0xf]
  %v213 = vld [vmem:[%s5 + $0x28] sm:$0xf]
  %v214 = vld [vmem:[%s5 + $0x2c] sm:$0xf]
  %v215 = vld [vmem:[%s5 + $0x30] sm:$0xf]
  %v216 = vld [vmem:[%s5 + $0x34] sm:$0xf]
  %v217 = vld [vmem:[%s5 + $0x38] sm:$0xf]
  %v218 = vld [vmem:[%s5 + $0x3c] sm:$0xf]
  %v235 = vunpack.c.l.b16 %v203
  %v236 = vunpack.c.l.b16 %v204
  %v237 = vunpack.c.l.b16 %v205
  %v238 = vunpack.c.l.b16 %v206
  %v239 = vunpack.c.l.b16 %v207
  %v240 = vunpack.c.l.b16 %v208
  %v241 = vunpack.c.l.b16 %v209
  %v242 = vunpack.c.l.b16 %v210
  %v243 = vunpack.c.l.b16 %v211
  %v244 = vunpack.c.l.b16 %v212
  %v245 = vunpack.c.l.b16 %v213
  %v246 = vunpack.c.l.b16 %v214
  %v247 = vunpack.c.l.b16 %v215
  %v248 = vunpack.c.l.b16 %v216
  %v249 = vunpack.c.l.b16 %v217
  %v250 = vunpack.c.l.b16 %v218
  %v251 = vpack.c.b16 %v236, %v235
  %v252 = vpack.c.b16 %v238, %v237
  %v253 = vpack.c.b16 %v240, %v239
  %v254 = vpack.c.b16 %v242, %v241
  %v255 = vpack.c.b16 %v244, %v243
  %v256 = vpack.c.b16 %v246, %v245
  %v257 = vpack.c.b16 %v248, %v247
  %v258 = vpack.c.b16 %v250, %v249
  %267 = vmatprep.subr.bf16.mxu0 0
  %268 = vmatpush1.bf16.msra.mxu0 %v251
  %269 = vmatprep.subr.bf16.mxu0 0
  %270 = vmatpush1.bf16.msra.mxu0 %v252
  %271 = vmatprep.subr.bf16.mxu0 0
  %272 = vmatpush1.bf16.msra.mxu0 %v253
  %273 = vmatprep.subr.bf16.mxu0 0
  %274 = vmatpush1.bf16.msra.mxu0 %v254
  %275 = vmatprep.subr.bf16.mxu0 0
  %276 = vmatpush1.bf16.msra.mxu0 %v255
  %277 = vmatprep.subr.bf16.mxu0 0
  %278 = vmatpush1.bf16.msra.mxu0 %v256
  %279 = vmatprep.subr.bf16.mxu0 0
  %280 = vmatpush1.bf16.msra.mxu0 %v257
  %281 = vmatprep.subr.bf16.mxu0 0
  %282 = vmatpush1.bf16.msra.mxu0 %v258
  %283 = vmatprep.subr.bf16.mxu0 0
  %284 = vmatpush1.bf16.msra.mxu0 0
  %285 = vmatprep.subr.bf16.mxu0 0
  %286 = vmatpush1.bf16.msra.mxu0 0
  %287 = vmatprep.subr.bf16.mxu0 0
  %288 = vmatpush1.bf16.msra.mxu0 0
  %289 = vmatprep.subr.bf16.mxu0 0
  %290 = vmatpush1.bf16.msra.mxu0 0
  %291 = vmatprep.subr.bf16.mxu0 0
  %292 = vmatpush1.bf16.msra.mxu0 0
  %293 = vmatprep.subr.bf16.mxu0 0
  %294 = vmatpush1.bf16.msra.mxu0 0
  %295 = vmatprep.subr.bf16.mxu0 0
  %296 = vmatpush1.bf16.msra.mxu0 0
  %297 = vmatprep.subr.bf16.mxu0 0
  %298 = vmatpush1.bf16.msra.mxu0 0
  %299 = vmatprep.mubr.bf16.mxu0 0
  %300 = vmatmul.mubr.bf16.gmra.mrb[0].mxu0 %v201
  %v301 = vpop.f32.mrb[0].mxu0
  %v302 = vadd.f32 0.0, %v301
  %v303 = vpop.f32.mrb[0].mxu0
  %v304 = vpop.f32.mrb[0].mxu0
  %v305 = vadd.f32 0.0, %v304
  %v306 = vpop.f32.mrb[0].mxu0
  %307 = vmatprep.mubr.bf16.mxu0 0
  %308 = vmatmul.mubr.bf16.gmra.mrb[0].mxu0 %v202
  %v309 = vpop.f32.mrb[0].mxu0
  %v310 = vadd.f32 0.0, %v309
  %v311 = vpop.f32.mrb[0].mxu0
  %v312 = vpop.f32.mrb[0].mxu0
  %v313 = vadd.f32 0.0, %v312
  %v314 = vpop.f32.mrb[0].mxu0
  %315 = vdwg.mxu0
  %316 = vst [vmem:[%s6] sm:$0xff] %v302
  %317 = vst [vmem:[%s6 + $0x8] sm:$0xff] %v305
  %318 = vst [vmem:[%s6 + $0x10] sm:$0xff] %v310
  %319 = vst [vmem:[%s6 + $0x18] sm:$0xff] %v313
  // Predicated region
  $region26: #{_lambda_.24} parent=0 // pred_check
    _
  $region27: #{_lambda_.24} parent=0 // pred_check_branch
    %321 = sbr.rel (0) target = $region29
  $region28: #{_lambda_.24} parent=0 // pred_region
    _
  $region29: #{_lambda_.24} parent=0 // pred_fallthru
    _
  // Predicated region
  $region30: #{_lambda_.24} parent=0 // pred_check
    _
  $region31: #{_lambda_.24} parent=0 // pred_check_branch
    %323 = sbr.rel (0) target = $region33
  $region32: #{_lambda_.24} parent=0 // pred_region
    _
  $region33: #{_lambda_.24} parent=0 // pred_fallthru
    _

// kernel: _lambda_.25
$region0: #{_lambda_.25}
  #allocation0 [shape = 'u32[]', space=smem, size = 0x4, offset = 0x4, fixed_abs, tag = 'smem constant byte address 0x4 - core index']
  #allocation1 [shape = 'u32[144,128]{1,0:T(1,128)}', space=vmem, size = 0x12000, scoped, tag = 'internal scratch']
  %s0 = inlined_call_operand.vmem [shape: bf16[136,8], index: 0, kind: input, shape index: {}]
  %s1 = inlined_call_operand.vmem [shape: bf16[8,128], index: 1, kind: input, shape index: {}]
  %s2 = inlined_call_operand.vmem [shape: f32[1,128], index: 2, kind: input, shape index: {}]
  %s3 = inlined_call_operand.vmem [shape: bf16[8,128], index: 3, kind: input, shape index: {}]
  %s4 = inlined_call_operand.vmem [shape: f32[1,128], index: 4, kind: input, shape index: {}]
  %s5 = inlined_call_operand.vmem [shape: bf16[128,128], index: 5, kind: input, shape index: {}]
  %s6 = inlined_call_operand.vmem [shape: f32[136,128], index: 6, kind: output, shape index: {}]
  %s7 = sld [smem:[#allocation0]]
  $region34: #{_lambda_.25} parent=0
    _
  %s9 = ssub.s32 1, %s7
  %s10 = scalar_select 0, %s9, %s7
  // Predicated region
  $region2: #{_lambda_.25} parent=0 // pred_check
    _
  $region3: #{_lambda_.25} parent=0 // pred_check_branch
    %12 = sbr.rel (0) target = $region5
  $region4: #{_lambda_.25} parent=0 // pred_region
    _
  $region5: #{_lambda_.25} parent=0 // pred_fallthru
    _
  // Predicated region
  $region6: #{_lambda_.25} parent=0 // pred_check
    _
  $region7: #{_lambda_.25} parent=0 // pred_check_branch
    %14 = sbr.rel (0) target = $region9
  $region8: #{_lambda_.25} parent=0 // pred_region
    _
  $region9: #{_lambda_.25} parent=0 // pred_fallthru
    _
  // Predicated region
  $region10: #{_lambda_.25} parent=0 // pred_check
    _
  $region11: #{_lambda_.25} parent=0 // pred_check_branch
    %16 = sbr.rel (0) target = $region13
  $region12: #{_lambda_.25} parent=0 // pred_region
    _
  $region13: #{_lambda_.25} parent=0 // pred_fallthru
    _
  // Predicated region
  $region14: #{_lambda_.25} parent=0 // pred_check
    _
  $region15: #{_lambda_.25} parent=0 // pred_check_branch
    %18 = sbr.rel (0) target = $region17
  $region16: #{_lambda_.25} parent=0 // pred_region
    _
  $region17: #{_lambda_.25} parent=0 // pred_fallthru
    _
  // Predicated region
  $region18: #{_lambda_.25} parent=0 // pred_check
    _
  $region19: #{_lambda_.25} parent=0 // pred_check_branch
    %20 = sbr.rel (0) target = $region21
  $region20: #{_lambda_.25} parent=0 // pred_region
    _
  $region21: #{_lambda_.25} parent=0 // pred_fallthru
    _
  // Predicated region
  $region22: #{_lambda_.25} parent=0 // pred_check
    _
  $region23: #{_lambda_.25} parent=0 // pred_check_branch
    %22 = sbr.rel (0) target = $region25
  $region24: #{_lambda_.25} parent=0 // pred_region
    _
  $region25: #{_lambda_.25} parent=0 // pred_fallthru
    _
  %v24 = vld [vmem:[%s0] sm:$0xf]
  %v25 = vld [vmem:[%s0 + $0x4] sm:$0xf]
  %v26 = vld [vmem:[%s0 + $0x8] sm:$0xf]
  %v27 = vld [vmem:[%s0 + $0xc] sm:$0xf]
  %v28 = vld [vmem:[%s0 + $0x10] sm:$0xf]
  %v29 = vld [vmem:[%s0 + $0x14] sm:$0xf]
  %v30 = vld [vmem:[%s0 + $0x18] sm:$0xf]
  %v31 = vld [vmem:[%s0 + $0x1c] sm:$0xf]
  %v32 = vld [vmem:[%s0 + $0x20] sm:$0xf]
  %v33 = vld [vmem:[%s0 + $0x24] sm:$0xf]
  %v34 = vld [vmem:[%s0 + $0x28] sm:$0xf]
  %v35 = vld [vmem:[%s0 + $0x2c] sm:$0xf]
  %v36 = vld [vmem:[%s0 + $0x30] sm:$0xf]
  %v37 = vld [vmem:[%s0 + $0x34] sm:$0xf]
  %v38 = vld [vmem:[%s0 + $0x38] sm:$0xf]
  %v39 = vld [vmem:[%s0 + $0x3c] sm:$0xf]
  %v40 = vld [vmem:[%s0 + $0x40] sm:$0xf]
  %v41 = vld [vmem:[%s1] sm:$0xf]
  %v42 = vld [vmem:[%s2] sm:$0x1]
  %v44 = vlaneseq
  %v45 = vshrl.u32 %v44, 7
  %v46 = vsub.s32 0, %v45
  %v47 = vrot.slane %v42, %v46
  %v66 = vunpack.c.l.b16 %v24
  %v67 = vunpack.c.l.b16 %v25
  %v68 = vunpack.c.l.b16 %v26
  %v69 = vunpack.c.l.b16 %v27
  %v70 = vunpack.c.l.b16 %v28
  %v71 = vunpack.c.l.b16 %v29
  %v72 = vunpack.c.l.b16 %v30
  %v73 = vunpack.c.l.b16 %v31
  %v74 = vunpack.c.l.b16 %v32
  %v75 = vunpack.c.l.b16 %v33
  %v76 = vunpack.c.l.b16 %v34
  %v77 = vunpack.c.l.b16 %v35
  %v78 = vunpack.c.l.b16 %v36
  %v79 = vunpack.c.l.b16 %v37
  %v80 = vunpack.c.l.b16 %v38
  %v81 = vunpack.c.l.b16 %v39
  %v82 = vunpack.c.l.b16 %v40
  %v83 = vpack.c.b16 %v67, %v66
  %v84 = vpack.c.b16 %v69, %v68
  %v85 = vpack.c.b16 %v71, %v70
  %v86 = vpack.c.b16 %v73, %v72
  %v87 = vpack.c.b16 %v75, %v74
  %v88 = vpack.c.b16 %v77, %v76
  %v89 = vpack.c.b16 %v79, %v78
  %v90 = vpack.c.b16 %v81, %v80
  %v91 = vpack.c.b16 %v82, %v82
  %vm92 = vcmask 64512
  %v94 = vsel %vm92, %v83, 0
  %v97 = vsel %vm92, %v84, 0
  %v100 = vsel %vm92, %v85, 0
  %v103 = vsel %vm92, %v86, 0
  %v106 = vsel %vm92, %v87, 0
  %v109 = vsel %vm92, %v88, 0
  %v112 = vsel %vm92, %v89, 0
  %v115 = vsel %vm92, %v90, 0
  %v118 = vsel %vm92, %v91, 0
  %vm120 = vcmask 1043456
  %v122 = vsel %vm120, %v41, 0
  %124 = vmatprep.subr.bf16.mxu0 0
  %125 = vmatpush1.bf16.msra.mxu0 %v122
  %126 = vmatprep.subr.bf16.mxu0 0
  %127 = vmatpush1.bf16.msra.mxu0 0
  %128 = vmatprep.subr.bf16.mxu0 0
  %129 = vmatpush1.bf16.msra.mxu0 0
  %130 = vmatprep.subr.bf16.mxu0 0
  %131 = vmatpush1.bf16.msra.mxu0 0
  %132 = vmatprep.subr.bf16.mxu0 0
  %133 = vmatpush1.bf16.msra.mxu0 0
  %134 = vmatprep.subr.bf16.mxu0 0
  %135 = vmatpush1.bf16.msra.mxu0 0
  %136 = vmatprep.subr.bf16.mxu0 0
  %137 = vmatpush1.bf16.msra.mxu0 0
  %138 = vmatprep.subr.bf16.mxu0 0
  %139 = vmatpush1.bf16.msra.mxu0 0
  %140 = vmatprep.subr.bf16.mxu0 0
  %141 = vmatpush1.bf16.msra.mxu0 0
  %142 = vmatprep.subr.bf16.mxu0 0
  %143 = vmatpush1.bf16.msra.mxu0 0
  %144 = vmatprep.subr.bf16.mxu0 0
  %145 = vmatpush1.bf16.msra.mxu0 0
  %146 = vmatprep.subr.bf16.mxu0 0
  %147 = vmatpush1.bf16.msra.mxu0 0
  %148 = vmatprep.subr.bf16.mxu0 0
  %149 = vmatpush1.bf16.msra.mxu0 0
  %150 = vmatprep.subr.bf16.mxu0 0
  %151 = vmatpush1.bf16.msra.mxu0 0
  %152 = vmatprep.subr.bf16.mxu0 0
  %153 = vmatpush1.bf16.msra.mxu0 0
  %154 = vmatprep.subr.bf16.mxu0 0
  %155 = vmatpush1.bf16.msra.mxu0 0
  %156 = vmatprep.mubr.bf16.mxu0 0
  %157 = vmatmul.mubr.bf16.gmra.mrb[0].mxu0 %v94
  %v158 = vpop.f32.mrb[0].mxu0
  %v159 = vadd.f32 %v47, %v158
  %v160 = vpop.f32.mrb[0].mxu0
  %v161 = vpop.f32.mrb[0].mxu0
  %v162 = vadd.f32 %v47, %v161
  %v163 = vpop.f32.mrb[0].mxu0
  %164 = vmatprep.mubr.bf16.mxu0 0
  %165 = vmatmul.mubr.bf16.gmra.mrb[0].mxu0 %v97
  %v166 = vpop.f32.mrb[0].mxu0
  %v167 = vadd.f32 %v47, %v166
  %v168 = vpop.f32.mrb[0].mxu0
  %v169 = vpop.f32.mrb[0].mxu0
  %v170 = vadd.f32 %v47, %v169
  %v171 = vpop.f32.mrb[0].mxu0
  %172 = vmatprep.mubr.bf16.mxu0 0
  %173 = vmatmul.mubr.bf16.gmra.mrb[0].mxu0 %v100
  %v174 = vpop.f32.mrb[0].mxu0
  %v175 = vadd.f32 %v47, %v174
  %v176 = vpop.f32.mrb[0].mxu0
  %v177 = vpop.f32.mrb[0].mxu0
  %v178 = vadd.f32 %v47, %v177
  %v179 = vpop.f32.mrb[0].mxu0
  %180 = vmatprep.mubr.bf16.mxu0 0
  %181 = vmatmul.mubr.bf16.gmra.mrb[0].mxu0 %v103
  %v182 = vpop.f32.mrb[0].mxu0
  %v183 = vadd.f32 %v47, %v182
  %v184 = vpop.f32.mrb[0].mxu0
  %v185 = vpop.f32.mrb[0].mxu0
  %v186 = vadd.f32 %v47, %v185
  %v187 = vpop.f32.mrb[0].mxu0
  %188 = vmatprep.mubr.bf16.mxu0 0
  %189 = vmatmul.mubr.bf16.gmra.mrb[0].mxu0 %v106
  %v190 = vpop.f32.mrb[0].mxu0
  %v191 = vadd.f32 %v47, %v190
  %v192 = vpop.f32.mrb[0].mxu0
  %v193 = vpop.f32.mrb[0].mxu0
  %v194 = vadd.f32 %v47, %v193
  %v195 = vpop.f32.mrb[0].mxu0
  %196 = vmatprep.mubr.bf16.mxu0 0
  %197 = vmatmul.mubr.bf16.gmra.mrb[0].mxu0 %v109
  %v198 = vpop.f32.mrb[0].mxu0
  %v199 = vadd.f32 %v47, %v198
  %v200 = vpop.f32.mrb[0].mxu0
  %v201 = vpop.f32.mrb[0].mxu0
  %v202 = vadd.f32 %v47, %v201
  %v203 = vpop.f32.mrb[0].mxu0
  %204 = vmatprep.mubr.bf16.mxu0 0
  %205 = vmatmul.mubr.bf16.gmra.mrb[0].mxu0 %v112
  %v206 = vpop.f32.mrb[0].mxu0
  %v207 = vadd.f32 %v47, %v206
  %v208 = vpop.f32.mrb[0].mxu0
  %v209 = vpop.f32.mrb[0].mxu0
  %v210 = vadd.f32 %v47, %v209
  %v211 = vpop.f32.mrb[0].mxu0
  %212 = vmatprep.mubr.bf16.mxu0 0
  %213 = vmatmul.mubr.bf16.gmra.mrb[0].mxu0 %v115
  %v214 = vpop.f32.mrb[0].mxu0
  %v215 = vadd.f32 %v47, %v214
  %v216 = vpop.f32.mrb[0].mxu0
  %v217 = vpop.f32.mrb[0].mxu0
  %v218 = vadd.f32 %v47, %v217
  %v219 = vpop.f32.mrb[0].mxu0
  %220 = vmatprep.mubr.bf16.mxu0 0
  %221 = vmatmul.mubr.bf16.gmra.mrb[0].mxu0 %v118
  %v222 = vpop.f32.mrb[0].mxu0
  %v223 = vadd.f32 %v47, %v222
  %v224 = vpop.f32.mrb[0].mxu0
  %v225 = vpop.f32.mrb[0].mxu0
  %v226 = vpop.f32.mrb[0].mxu0
  %227 = vdwg.mxu0
  %v228 = vld [vmem:[%s3] sm:$0xf]
  %v229 = vld [vmem:[%s4] sm:$0x1]
  %v231 = vlaneseq
  %v232 = vshrl.u32 %v231, 7
  %v233 = vsub.s32 0, %v232
  %v234 = vrot.slane %v229, %v233
  %v237 = vsel %vm120, %v228, 0
  %239 = vmatprep.subr.bf16.mxu0 0
  %240 = vmatpush1.bf16.msra.mxu0 %v237
  %241 = vmatprep.subr.bf16.mxu0 0
  %242 = vmatpush1.bf16.msra.mxu0 0
  %243 = vmatprep.subr.bf16.mxu0 0
  %244 = vmatpush1.bf16.msra.mxu0 0
  %245 = vmatprep.subr.bf16.mxu0 0
  %246 = vmatpush1.bf16.msra.mxu0 0
  %247 = vmatprep.subr.bf16.mxu0 0
  %248 = vmatpush1.bf16.msra.mxu0 0
  %249 = vmatprep.subr.bf16.mxu0 0
  %250 = vmatpush1.bf16.msra.mxu0 0
  %251 = vmatprep.subr.bf16.mxu0 0
  %252 = vmatpush1.bf16.msra.mxu0 0
  %253 = vmatprep.subr.bf16.mxu0 0
  %254 = vmatpush1.bf16.msra.mxu0 0
  %255 = vmatprep.subr.bf16.mxu0 0
  %256 = vmatpush1.bf16.msra.mxu0 0
  %257 = vmatprep.subr.bf16.mxu0 0
  %258 = vmatpush1.bf16.msra.mxu0 0
  %259 = vmatprep.subr.bf16.mxu0 0
  %260 = vmatpush1.bf16.msra.mxu0 0
  %261 = vmatprep.subr.bf16.mxu0 0
  %262 = vmatpush1.bf16.msra.mxu0 0
  %263 = vmatprep.subr.bf16.mxu0 0
  %264 = vmatpush1.bf16.msra.mxu0 0
  %265 = vmatprep.subr.bf16.mxu0 0
  %266 = vmatpush1.bf16.msra.mxu0 0
  %267 = vmatprep.subr.bf16.mxu0 0
  %268 = vmatpush1.bf16.msra.mxu0 0
  %269 = vmatprep.subr.bf16.mxu0 0
  %270 = vmatpush1.bf16.msra.mxu0 0
  %271 = vmatprep.mubr.bf16.mxu0 0
  %272 = vmatmul.mubr.bf16.gmra.mrb[0].mxu0 %v94
  %v273 = vpop.f32.mrb[0].mxu0
  %v274 = vadd.f32 %v234, %v273
  %v275 = vpop.f32.mrb[0].mxu0
  %v276 = vpop.f32.mrb[0].mxu0
  %v277 = vadd.f32 %v234, %v276
  %v278 = vpop.f32.mrb[0].mxu0
  %279 = vmatprep.mubr.bf16.mxu0 0
  %280 = vmatmul.mubr.bf16.gmra.mrb[0].mxu0 %v97
  %v281 = vpop.f32.mrb[0].mxu0
  %v282 = vadd.f32 %v234, %v281
  %v283 = vpop.f32.mrb[0].mxu0
  %v284 = vpop.f32.mrb[0].mxu0
  %v285 = vadd.f32 %v234, %v284
  %v286 = vpop.f32.mrb[0].mxu0
  %287 = vmatprep.mubr.bf16.mxu0 0
  %288 = vmatmul.mubr.bf16.gmra.mrb[0].mxu0 %v100
  %v289 = vpop.f32.mrb[0].mxu0
  %v290 = vadd.f32 %v234, %v289
  %v291 = vpop.f32.mrb[0].mxu0
  %v292 = vpop.f32.mrb[0].mxu0
  %v293 = vadd.f32 %v234, %v292
  %v294 = vpop.f32.mrb[0].mxu0
  %295 = vmatprep.mubr.bf16.mxu0 0
  %296 = vmatmul.mubr.bf16.gmra.mrb[0].mxu0 %v103
  %v297 = vpop.f32.mrb[0].mxu0
  %v298 = vadd.f32 %v234, %v297
  %v299 = vpop.f32.mrb[0].mxu0
  %v300 = vpop.f32.mrb[0].mxu0
  %v301 = vadd.f32 %v234, %v300
  %v302 = vpop.f32.mrb[0].mxu0
  %303 = vmatprep.mubr.bf16.mxu0 0
  %304 = vmatmul.mubr.bf16.gmra.mrb[0].mxu0 %v106
  %v305 = vpop.f32.mrb[0].mxu0
  %v306 = vadd.f32 %v234, %v305
  %v307 = vpop.f32.mrb[0].mxu0
  %v308 = vpop.f32.mrb[0].mxu0
  %v309 = vadd.f32 %v234, %v308
  %v310 = vpop.f32.mrb[0].mxu0
  %311 = vmatprep.mubr.bf16.mxu0 0
  %312 = vmatmul.mubr.bf16.gmra.mrb[0].mxu0 %v109
  %v313 = vpop.f32.mrb[0].mxu0
  %v314 = vadd.f32 %v234, %v313
  %v315 = vpop.f32.mrb[0].mxu0
  %v316 = vpop.f32.mrb[0].mxu0
  %v317 = vadd.f32 %v234, %v316
  %v318 = vpop.f32.mrb[0].mxu0
  %319 = vmatprep.mubr.bf16.mxu0 0
  %320 = vmatmul.mubr.bf16.gmra.mrb[0].mxu0 %v112
  %v321 = vpop.f32.mrb[0].mxu0
  %v322 = vadd.f32 %v234, %v321
  %v323 = vpop.f32.mrb[0].mxu0
  %v324 = vpop.f32.mrb[0].mxu0
  %v325 = vadd.f32 %v234, %v324
  %v326 = vpop.f32.mrb[0].mxu0
  %327 = vmatprep.mubr.bf16.mxu0 0
  %328 = vmatmul.mubr.bf16.gmra.mrb[0].mxu0 %v115
  %v329 = vpop.f32.mrb[0].mxu0
  %v330 = vadd.f32 %v234, %v329
  %v331 = vpop.f32.mrb[0].mxu0
  %v332 = vpop.f32.mrb[0].mxu0
  %v333 = vadd.f32 %v234, %v332
  %v334 = vpop.f32.mrb[0].mxu0
  %335 = vmatprep.mubr.bf16.mxu0 0
  %336 = vmatmul.mubr.bf16.gmra.mrb[0].mxu0 %v118
  %v337 = vpop.f32.mrb[0].mxu0
  %v338 = vadd.f32 %v234, %v337
  %v339 = vpop.f32.mrb[0].mxu0
  %v340 = vpop.f32.mrb[0].mxu0
  %v341 = vpop.f32.mrb[0].mxu0
  %342 = vdwg.mxu0
  %v343 = vxor.u32 %v274, 2147483648
  %v344 = vxor.u32 %v277, 2147483648
  %v345 = vxor.u32 %v282, 2147483648
  %v346 = vxor.u32 %v285, 2147483648
  %v347 = vxor.u32 %v290, 2147483648
  %v348 = vxor.u32 %v293, 2147483648
  %v349 = vxor.u32 %v298, 2147483648
  %v350 = vxor.u32 %v301, 2147483648
  %v351 = vxor.u32 %v306, 2147483648
  %v352 = vxor.u32 %v309, 2147483648
  %v353 = vxor.u32 %v314, 2147483648
  %v354 = vxor.u32 %v317, 2147483648
  %v355 = vxor.u32 %v322, 2147483648
  %v356 = vxor.u32 %v325, 2147483648
  %v357 = vxor.u32 %v330, 2147483648
  %v358 = vxor.u32 %v333, 2147483648
  %v359 = vxor.u32 %v338, 2147483648
  %v360 = vmul.f32 %v343, 1.442695
  %v361 = vpow.pop %v360
  %v362 = vmul.f32 %v344, 1.442695
  %v363 = vpow.pop %v362
  %v364 = vmul.f32 %v345, 1.442695
  %v365 = vpow.pop %v364
  %v366 = vmul.f32 %v346, 1.442695
  %v367 = vpow.pop %v366
  %v368 = vmul.f32 %v347, 1.442695
  %v369 = vpow.pop %v368
  %v370 = vmul.f32 %v348, 1.442695
  %v371 = vpow.pop %v370
  %v372 = vmul.f32 %v349, 1.442695
  %v373 = vpow.pop %v372
  %v374 = vmul.f32 %v350, 1.442695
  %v375 = vpow.pop %v374
  %v376 = vmul.f32 %v351, 1.442695
  %v377 = vpow.pop %v376
  %v378 = vmul.f32 %v352, 1.442695
  %v379 = vpow.pop %v378
  %v380 = vmul.f32 %v353, 1.442695
  %v381 = vpow.pop %v380
  %v382 = vmul.f32 %v354, 1.442695
  %v383 = vpow.pop %v382
  %v384 = vmul.f32 %v355, 1.442695
  %v385 = vpow.pop %v384
  %v386 = vmul.f32 %v356, 1.442695
  %v387 = vpow.pop %v386
  %v388 = vmul.f32 %v357, 1.442695
  %v389 = vpow.pop %v388
  %v390 = vmul.f32 %v358, 1.442695
  %v391 = vpow.pop %v390
  %v392 = vmul.f32 %v359, 1.442695
  %v393 = vpow.pop %v392
  %v394 = vadd.f32 %v361, 1.0
  %v395 = vadd.f32 %v363, 1.0
  %v396 = vadd.f32 %v365, 1.0
  %v397 = vadd.f32 %v367, 1.0
  %v398 = vadd.f32 %v369, 1.0
  %v399 = vadd.f32 %v371, 1.0
  %v400 = vadd.f32 %v373, 1.0
  %v401 = vadd.f32 %v375, 1.0
  %v402 = vadd.f32 %v377, 1.0
  %v403 = vadd.f32 %v379, 1.0
  %v404 = vadd.f32 %v381, 1.0
  %v405 = vadd.f32 %v383, 1.0
  %v406 = vadd.f32 %v385, 1.0
  %v407 = vadd.f32 %v387, 1.0
  %v408 = vadd.f32 %v389, 1.0
  %v409 = vadd.f32 %v391, 1.0
  %v410 = vadd.f32 %v393, 1.0
  %v411 = vrcp.pop %v394
  %v412 = vmul.f32 1.0, %v411
  %v413 = vrcp.pop %v395
  %v414 = vmul.f32 1.0, %v413
  %v415 = vrcp.pop %v396
  %v416 = vmul.f32 1.0, %v415
  %v417 = vrcp.pop %v397
  %v418 = vmul.f32 1.0, %v417
  %v419 = vrcp.pop %v398
  %v420 = vmul.f32 1.0, %v419
  %v421 = vrcp.pop %v399
  %v422 = vmul.f32 1.0, %v421
  %v423 = vrcp.pop %v400
  %v424 = vmul.f32 1.0, %v423
  %v425 = vrcp.pop %v401
  %v426 = vmul.f32 1.0, %v425
  %v427 = vrcp.pop %v402
  %v428 = vmul.f32 1.0, %v427
  %v429 = vrcp.pop %v403
  %v430 = vmul.f32 1.0, %v429
  %v431 = vrcp.pop %v404
  %v432 = vmul.f32 1.0, %v431
  %v433 = vrcp.pop %v405
  %v434 = vmul.f32 1.0, %v433
  %v435 = vrcp.pop %v406
  %v436 = vmul.f32 1.0, %v435
  %v437 = vrcp.pop %v407
  %v438 = vmul.f32 1.0, %v437
  %v439 = vrcp.pop %v408
  %v440 = vmul.f32 1.0, %v439
  %v441 = vrcp.pop %v409
  %v442 = vmul.f32 1.0, %v441
  %v443 = vrcp.pop %v410
  %v444 = vmul.f32 1.0, %v443
  %v445 = vmul.f32 %v159, %v412
  %v446 = vmul.f32 %v162, %v414
  %v447 = vmul.f32 %v167, %v416
  %v448 = vmul.f32 %v170, %v418
  %v449 = vmul.f32 %v175, %v420
  %v450 = vmul.f32 %v178, %v422
  %v451 = vmul.f32 %v183, %v424
  %v452 = vmul.f32 %v186, %v426
  %v453 = vmul.f32 %v191, %v428
  %v454 = vmul.f32 %v194, %v430
  %v455 = vmul.f32 %v199, %v432
  %v456 = vmul.f32 %v202, %v434
  %v457 = vmul.f32 %v207, %v436
  %v458 = vmul.f32 %v210, %v438
  %v459 = vmul.f32 %v215, %v440
  %v460 = vmul.f32 %v218, %v442
  %v461 = vmul.f32 %v223, %v444
  %v462 = vpack.c.bf16 %v446, %v445
  %v463 = vpack.c.bf16 %v448, %v447
  %v464 = vpack.c.bf16 %v450, %v449
  %v465 = vpack.c.bf16 %v452, %v451
  %v466 = vpack.c.bf16 %v454, %v453
  %v467 = vpack.c.bf16 %v456, %v455
  %v468 = vpack.c.bf16 %v458, %v457
  %v469 = vpack.c.bf16 %v460, %v459
  %v470 = vpack.c.bf16 %v461, %v461
  %v471 = vld [vmem:[%s5] sm:$0xf]
  %v472 = vld [vmem:[%s5 + $0x4] sm:$0xf]
  %v473 = vld [vmem:[%s5 + $0x8] sm:$0xf]
  %v474 = vld [vmem:[%s5 + $0xc] sm:$0xf]
  %v475 = vld [vmem:[%s5 + $0x10] sm:$0xf]
  %v476 = vld [vmem:[%s5 + $0x14] sm:$0xf]
  %v477 = vld [vmem:[%s5 + $0x18] sm:$0xf]
  %v478 = vld [vmem:[%s5 + $0x1c] sm:$0xf]
  %v479 = vld [vmem:[%s5 + $0x20] sm:$0xf]
  %v480 = vld [vmem:[%s5 + $0x24] sm:$0xf]
  %v481 = vld [vmem:[%s5 + $0x28] sm:$0xf]
  %v482 = vld [vmem:[%s5 + $0x2c] sm:$0xf]
  %v483 = vld [vmem:[%s5 + $0x30] sm:$0xf]
  %v484 = vld [vmem:[%s5 + $0x34] sm:$0xf]
  %v485 = vld [vmem:[%s5 + $0x38] sm:$0xf]
  %v486 = vld [vmem:[%s5 + $0x3c] sm:$0xf]
  %v503 = vunpack.c.l.b16 %v471
  %v504 = vunpack.c.l.b16 %v472
  %v505 = vunpack.c.l.b16 %v473
  %v506 = vunpack.c.l.b16 %v474
  %v507 = vunpack.c.l.b16 %v475
  %v508 = vunpack.c.l.b16 %v476
  %v509 = vunpack.c.l.b16 %v477
  %v510 = vunpack.c.l.b16 %v478
  %v511 = vunpack.c.l.b16 %v479
  %v512 = vunpack.c.l.b16 %v480
  %v513 = vunpack.c.l.b16 %v481
  %v514 = vunpack.c.l.b16 %v482
  %v515 = vunpack.c.l.b16 %v483
  %v516 = vunpack.c.l.b16 %v484
  %v517 = vunpack.c.l.b16 %v485
  %v518 = vunpack.c.l.b16 %v486
  %v519 = vpack.c.b16 %v504, %v503
  %v520 = vpack.c.b16 %v506, %v505
  %v521 = vpack.c.b16 %v508, %v507
  %v522 = vpack.c.b16 %v510, %v509
  %v523 = vpack.c.b16 %v512, %v511
  %v524 = vpack.c.b16 %v514, %v513
  %v525 = vpack.c.b16 %v516, %v515
  %v526 = vpack.c.b16 %v518, %v517
  %535 = vmatprep.subr.bf16.mxu0 0
  %536 = vmatpush1.bf16.msra.mxu0 %v519
  %537 = vmatprep.subr.bf16.mxu0 0
  %538 = vmatpush1.bf16.msra.mxu0 %v520
  %539 = vmatprep.subr.bf16.mxu0 0
  %540 = vmatpush1.bf16.msra.mxu0 %v521
  %541 = vmatprep.subr.bf16.mxu0 0
  %542 = vmatpush1.bf16.msra.mxu0 %v522
  %543 = vmatprep.subr.bf16.mxu0 0
  %544 = vmatpush1.bf16.msra.mxu0 %v523
  %545 = vmatprep.subr.bf16.mxu0 0
  %546 = vmatpush1.bf16.msra.mxu0 %v524
  %547 = vmatprep.subr.bf16.mxu0 0
  %548 = vmatpush1.bf16.msra.mxu0 %v525
  %549 = vmatprep.subr.bf16.mxu0 0
  %550 = vmatpush1.bf16.msra.mxu0 %v526
  %551 = vmatprep.subr.bf16.mxu0 0
  %552 = vmatpush1.bf16.msra.mxu0 0
  %553 = vmatprep.subr.bf16.mxu0 0
  %554 = vmatpush1.bf16.msra.mxu0 0
  %555 = vmatprep.subr.bf16.mxu0 0
  %556 = vmatpush1.bf16.msra.mxu0 0
  %557 = vmatprep.subr.bf16.mxu0 0
  %558 = vmatpush1.bf16.msra.mxu0 0
  %559 = vmatprep.subr.bf16.mxu0 0
  %560 = vmatpush1.bf16.msra.mxu0 0
  %561 = vmatprep.subr.bf16.mxu0 0
  %562 = vmatpush1.bf16.msra.mxu0 0
  %563 = vmatprep.subr.bf16.mxu0 0
  %564 = vmatpush1.bf16.msra.mxu0 0
  %565 = vmatprep.subr.bf16.mxu0 0
  %566 = vmatpush1.bf16.msra.mxu0 0
  %567 = vmatprep.mubr.bf16.mxu0 0
  %568 = vmatmul.mubr.bf16.gmra.mrb[0].mxu0 %v462
  %v569 = vpop.f32.mrb[0].mxu0
  %v570 = vadd.f32 0.0, %v569
  %v571 = vpop.f32.mrb[0].mxu0
  %v572 = vpop.f32.mrb[0].mxu0
  %v573 = vadd.f32 0.0, %v572
  %v574 = vpop.f32.mrb[0].mxu0
  %575 = vmatprep.mubr.bf16.mxu0 0
  %576 = vmatmul.mubr.bf16.gmra.mrb[0].mxu0 %v463
  %v577 = vpop.f32.mrb[0].mxu0
  %v578 = vadd.f32 0.0, %v577
  %v579 = vpop.f32.mrb[0].mxu0
  %v580 = vpop.f32.mrb[0].mxu0
  %v581 = vadd.f32 0.0, %v580
  %v582 = vpop.f32.mrb[0].mxu0
  %583 = vmatprep.mubr.bf16.mxu0 0
  %584 = vmatmul.mubr.bf16.gmra.mrb[0].mxu0 %v464
  %v585 = vpop.f32.mrb[0].mxu0
  %v586 = vadd.f32 0.0, %v585
  %v587 = vpop.f32.mrb[0].mxu0
  %v588 = vpop.f32.mrb[0].mxu0
  %v589 = vadd.f32 0.0, %v588
  %v590 = vpop.f32.mrb[0].mxu0
  %591 = vmatprep.mubr.bf16.mxu0 0
  %592 = vmatmul.mubr.bf16.gmra.mrb[0].mxu0 %v465
  %v593 = vpop.f32.mrb[0].mxu0
  %v594 = vadd.f32 0.0, %v593
  %v595 = vpop.f32.mrb[0].mxu0
  %v596 = vpop.f32.mrb[0].mxu0
  %v597 = vadd.f32 0.0, %v596
  %v598 = vpop.f32.mrb[0].mxu0
  %599 = vmatprep.mubr.bf16.mxu0 0
  %600 = vmatmul.mubr.bf16.gmra.mrb[0].mxu0 %v466
  %v601 = vpop.f32.mrb[0].mxu0
  %v602 = vadd.f32 0.0, %v601
  %v603 = vpop.f32.mrb[0].mxu0
  %v604 = vpop.f32.mrb[0].mxu0
  %v605 = vadd.f32 0.0, %v604
  %v606 = vpop.f32.mrb[0].mxu0
  %607 = vmatprep.mubr.bf16.mxu0 0
  %608 = vmatmul.mubr.bf16.gmra.mrb[0].mxu0 %v467
  %v609 = vpop.f32.mrb[0].mxu0
  %v610 = vadd.f32 0.0, %v609
  %v611 = vpop.f32.mrb[0].mxu0
  %v612 = vpop.f32.mrb[0].mxu0
  %v613 = vadd.f32 0.0, %v612
  %v614 = vpop.f32.mrb[0].mxu0
  %615 = vmatprep.mubr.bf16.mxu0 0
  %616 = vmatmul.mubr.bf16.gmra.mrb[0].mxu0 %v468
  %v617 = vpop.f32.mrb[0].mxu0
  %v618 = vadd.f32 0.0, %v617
  %v619 = vpop.f32.mrb[0].mxu0
  %v620 = vpop.f32.mrb[0].mxu0
  %v621 = vadd.f32 0.0, %v620
  %v622 = vpop.f32.mrb[0].mxu0
  %623 = vmatprep.mubr.bf16.mxu0 0
  %624 = vmatmul.mubr.bf16.gmra.mrb[0].mxu0 %v469
  %v625 = vpop.f32.mrb[0].mxu0
  %v626 = vadd.f32 0.0, %v625
  %v627 = vpop.f32.mrb[0].mxu0
  %v628 = vpop.f32.mrb[0].mxu0
  %v629 = vadd.f32 0.0, %v628
  %v630 = vpop.f32.mrb[0].mxu0
  %631 = vmatprep.mubr.bf16.mxu0 0
  %632 = vmatmul.mubr.bf16.gmra.mrb[0].mxu0 %v470
  %v633 = vpop.f32.mrb[0].mxu0
  %v634 = vadd.f32 0.0, %v633
  %v635 = vpop.f32.mrb[0].mxu0
  %v636 = vpop.f32.mrb[0].mxu0
  %v637 = vpop.f32.mrb[0].mxu0
  %638 = vdwg.mxu0
  %639 = vst [vmem:[%s6] sm:$0xff] %v570
  %640 = vst [vmem:[%s6 + $0x8] sm:$0xff] %v573
  %641 = vst [vmem:[%s6 + $0x10] sm:$0xff] %v578
  %642 = vst [vmem:[%s6 + $0x18] sm:$0xff] %v581
  %643 = vst [vmem:[%s6 + $0x20] sm:$0xff] %v586
  %644 = vst [vmem:[%s6 + $0x28] sm:$0xff] %v589
  %645 = vst [vmem:[%s6 + $0x30] sm:$0xff] %v594
  %646 = vst [vmem:[%s6 + $0x38] sm:$0xff] %v597
  %647 = vst [vmem:[%s6 + $0x40] sm:$0xff] %v602
  %648 = vst [vmem:[%s6 + $0x48] sm:$0xff] %v605
  %649 = vst [vmem:[%s6 + $0x50] sm:$0xff] %v610
  %650 = vst [vmem:[%s6 + $0x58] sm:$0xff] %v613
  %651 = vst [vmem:[%s6 + $0x60] sm:$0xff] %v618
  %652 = vst [vmem:[%s6 + $0x68] sm:$0xff] %v621
  %653 = vst [vmem:[%s6 + $0x70] sm:$0xff] %v626
  %654 = vst [vmem:[%s6 + $0x78] sm:$0xff] %v629
  %655 = vst [vmem:[%s6 + $0x80] sm:$0xff] %v634
  // Predicated region
  $region26: #{_lambda_.25} parent=0 // pred_check
    _
  $region27: #{_lambda_.25} parent=0 // pred_check_branch
    %657 = sbr.rel (0) target = $region29
  $region28: #{_lambda_.25} parent=0 // pred_region
    _
  $region29: #{_lambda_.25} parent=0 // pred_fallthru
    _
  // Predicated region
  $region30: #{_lambda_.25} parent=0 // pred_check
    _
  $region31: #{_lambda_.25} parent=0 // pred_check_branch
    %659 = sbr.rel (0) target = $region33
  $region32: #{_lambda_.25} parent=0 // pred_region
    _
  $region33: #{_lambda_.25} parent=0 // pred_fallthru
    _

</llo_original>
